<compile_context>
chip_gen: v7x
topology: tpu7x:2x2x1
jax: 0.10.0
libtpu: 0.0.40
codegen_flags: <defaults>
</compile_context>

<pallas_src>
import jax
import jax.numpy as jnp
from jax.experimental import pallas as pl
from jax.experimental.pallas import tpu as pltpu

# ---------------- small ViT config (stand-in for vit-base) ----------------
IMG = 16
PATCH = 4
CHANNELS = 3
HIDDEN = 32
HEADS = 2
HEAD_DIM = HIDDEN // HEADS
INTERMEDIATE = 4 * HIDDEN
LAYERS = 2
LN_EPS = 1e-12            # HF ViT layer_norm_eps
META_FEATURES = 8
META_HIDDEN = 128         # hard-coded nn.Linear(num_metadata_features, 128)
NUM_CLASSES = 5
BATCH = 2
NUM_PATCHES = (IMG // PATCH) ** 2
SEQ = NUM_PATCHES + 1                       # + CLS token
SEQ_PAD = ((SEQ + 7) // 8) * 8              # pad per-batch block to sublane multiple (24)
CPP = CHANNELS * PATCH * PATCH              # pixels per patch (48)
TOKEN_DIM = CPP + 2 + SEQ_PAD               # [pixels | bias ind | cls ind | pos one-hot]


# ------------------------------- fused kernel ------------------------------
def _fused_forward_kernel(tokens_ref, embed_w_ref, w32_ref, fc2_w_ref, vec_ref,
                          cls_w_ref, meta_ref, labels_ref,
                          logits_ref, loss_ref):
    f32 = jnp.float32
    bf16 = jnp.bfloat16
    B = meta_ref.shape[0]
    D, Dh, H, I = HIDDEN, HEAD_DIM, HEADS, INTERMEDIATE
    L = w32_ref.shape[0]

    def ln(x, g, b):
        mu = jnp.mean(x, axis=-1, keepdims=True)
        var = jnp.mean((x - mu) ** 2, axis=-1, keepdims=True)
        return (x - mu) * jax.lax.rsqrt(var + LN_EPS) * g + b

    def gelu(x):
        # TODO(synk): HF ViT uses exact erf-GELU; tanh approximation kept for robust Mosaic lowering.
        return 0.5 * x * (1.0 + jnp.tanh(0.7978845608028654 * (x + 0.044715 * x * x * x)))

    # ONE embed matmul for the whole padded batch: patch embed + conv bias +
    # CLS token + positional embedding are all selected by token columns.
    x = jnp.dot(tokens_ref[...], embed_w_ref[...],
                preferred_element_type=f32)                        # (B*SP, D)

    # additive key mask for the padded rows inside each SP-row batch block
    key_pos = jax.lax.broadcasted_iota(jnp.int32, (1, SEQ_PAD), dimension=1)
    key_mask = jnp.where(key_pos >= SEQ, -1e30, 0.0).astype(f32)   # (1, SP)

    for li in range(L):                                  # static unroll (L = 2)
        w32 = w32_ref[li]                                # (D, 3D + D + I) bf16
        base_row = META_FEATURES + 8 * li
        lv = vec_ref[base_row:base_row + 8, :]           # (8, 128) f32
        ln1_g = lv[0:1, 0:D]
        ln1_b = lv[1:2, 0:D]
        ln2_g = lv[2:3, 0:D]
        ln2_b = lv[3:4, 0:D]
        o_b = lv[4:5, 0:D]
        fc2_b = lv[5:6, 0:D]
        fc1_b = lv[6:7, 0:I]
        qkv_b = lv[7:8, 0:3 * D]

        # ---------------- self-attention block (pre-LN) ----------------
        h = ln(x, ln1_g, ln1_b)                                        # (B*SP, D)
        qkv = jnp.dot(h.astype(bf16), w32[:, 0:3 * D],
                      preferred_element_type=f32) + qkv_b              # (B*SP, 3D)

        heads_all = []
        for b in range(B):                               # static unroll (B = 2)
            blk = qkv[b * SEQ_PAD:(b + 1) * SEQ_PAD, :]  # (SP, 3D), 8-aligned slice
            head_outs = []
            for hh in range(H):
                q = blk[:, hh * Dh:(hh + 1) * Dh]                    # 1/sqrt(Dh) pre-folded
                k = blk[:, D + hh * Dh:D + (hh + 1) * Dh]
                v = blk[:, 2 * D + hh * Dh:2 * D + (hh + 1) * Dh]
                s = jax.lax.dot_general(q.astype(bf16), k.astype(bf16),
                                        (((1,), (1,)), ((), ())),
                                        preferred_element_type=f32)   # (SP, SP)
                s = s + key_mask
                m = jnp.max(s, axis=-1, keepdims=True)
                p = jnp.exp(s - m)
                p = p * pl.reciprocal(jnp.sum(p, axis=-1, keepdims=True), approx=True)
                head_outs.append(jnp.dot(p.astype(bf16), v.astype(bf16),
                                         preferred_element_type=f32))  # (SP, Dh)
            heads_all.append(jnp.concatenate(head_outs, axis=-1))       # (SP, D)
        attn_cat = jnp.concatenate(heads_all, axis=0)                    # (B*SP, D)

        # single fused output projection over all rows and heads
        x = x + jnp.dot(attn_cat.astype(bf16), w32[:, 3 * D:4 * D],
                        preferred_element_type=f32) + o_b

        # ----------------------- MLP block (pre-LN) -----------------------
        h = ln(x, ln2_g, ln2_b)
        h = jnp.dot(h.astype(bf16), w32[:, 4 * D:4 * D + I],
                    preferred_element_type=f32) + fc1_b
        h = gelu(h)
        x = x + jnp.dot(h.astype(bf16), fc2_w_ref[li],
                        preferred_element_type=f32) + fc2_b

    # final LN on CLS rows only (LN is row-wise, so equivalent); CLS is row 0
    # of each SP-row batch block -> 8-aligned single-row slices.
    cls_rows = jnp.concatenate(
        [x[b * SEQ_PAD:b * SEQ_PAD + 1, :] for b in range(B)], axis=0)   # (B, D)
    head_row = META_FEATURES + 8 * L
    lnf_g = vec_ref[head_row:head_row + 1, 0:D]
    lnf_b = vec_ref[head_row + 1:head_row + 2, 0:D]
    cls_feat = ln(cls_rows, lnf_g, lnf_b)                                # (B, D)

    # ------------- metadata branch + classifier head + CE loss -------------
    meta_w = vec_ref[0:META_FEATURES, 0:META_HIDDEN]                     # (8, 128)
    meta_b = vec_ref[head_row + 2:head_row + 3, 0:META_HIDDEN]
    c_b = vec_ref[head_row + 3:head_row + 4, 0:NUM_CLASSES]
    meta = jnp.maximum(
        jnp.dot(meta_ref[...], meta_w, preferred_element_type=f32) + meta_b, 0.0)
    # split classifier weight avoids an in-kernel concat of [vit_cls | meta]
    logits = (jnp.dot(cls_feat, cls_w_ref[0:D, :], preferred_element_type=f32)
              + jnp.dot(meta, cls_w_ref[D:D + META_HIDDEN, :],
                        preferred_element_type=f32)
              + c_b)                                                     # (B, NC)
    logits_ref[...] = logits.astype(logits_ref.dtype)

    # cross-entropy (mean over batch); one-hot built in-kernel via iota compare
    m = jnp.max(logits, axis=-1, keepdims=True)
    lse = jnp.log(jnp.sum(jnp.exp(logits - m), axis=-1, keepdims=True)) + m
    logp = logits - lse
    cols = jax.lax.broadcasted_iota(jnp.int32, logits.shape, dimension=1)
    onehot = (cols == labels_ref[...]).astype(f32)
    loss = -jnp.sum(onehot * logp) / B
    loss_ref[...] = jnp.broadcast_to(loss, (1, 1)).astype(loss_ref.dtype)


# ------------------------------- wrappers ----------------------------------
def _full_spec(shape):
    # single-block spec: block == full array (satisfies TPU tiling rules)
    n = len(shape)
    return pl.BlockSpec(shape, lambda i, _n=n: (0,) * _n)


def _build_tokens(pixel_values):
    """im2col + augmentation into (B*SP, TOKEN_DIM) rows.

    Per-batch block layout (SP rows): row 0 = CLS, rows 1..NP = patches,
    rows NP+1..SP-1 = zero padding (masked in attention).
    Columns: [pixels(CPP) | patch-bias indicator | cls indicator | pos one-hot(SP)].
    """
    B, C, H, W = pixel_values.shape
    P = PATCH
    nh, nw = H // P, W // P
    npatch = nh * nw
    dt = pixel_values.dtype
    patches = pixel_values.reshape(B, C, nh, P, nw, P)
    patches = patches.transpose(0, 2, 4, 1, 3, 5).reshape(B, npatch, CPP)

    pix = jnp.concatenate(
        [jnp.zeros((B, 1, CPP), dt),                       # CLS row: no pixels
         patches,
         jnp.zeros((B, SEQ_PAD - 1 - npatch, CPP), dt)],   # pad rows
        axis=1)
    bias_ind = jnp.concatenate(
        [jnp.zeros((B, 1, 1), dt),
         jnp.ones((B, npatch, 1), dt),
         jnp.zeros((B, SEQ_PAD - 1 - npatch, 1), dt)], axis=1)
    cls_ind = jnp.concatenate(
        [jnp.ones((B, 1, 1), dt),
         jnp.zeros((B, SEQ_PAD - 1, 1), dt)], axis=1)
    pos_onehot = jnp.broadcast_to(jnp.eye(SEQ_PAD, dtype=dt), (B, SEQ_PAD, SEQ_PAD))

    tokens = jnp.concatenate([pix, bias_ind, cls_ind, pos_onehot], axis=-1)
    return tokens.reshape(B * SEQ_PAD, TOKEN_DIM)


@jax.jit
def _fused_forward(packed, pixel_values, metadata, labels):
    B = pixel_values.shape[0]
    tokens = _build_tokens(pixel_values).astype(jnp.bfloat16)
    labels2d = labels.reshape(B, 1).astype(jnp.int32)

    args = (tokens, packed["embed_w"], packed["w32"], packed["fc2_w"],
            packed["vec"], packed["cls_w"], metadata.astype(jnp.float32), labels2d)

    logits, loss = pl.pallas_call(
        _fused_forward_kernel,
        out_shape=(jax.ShapeDtypeStruct((B, NUM_CLASSES), jnp.float32),
                   jax.ShapeDtypeStruct((1, 1), jnp.float32)),
        grid=(1,),
        in_specs=[_full_spec(a.shape) for a in args],
        out_specs=(_full_spec((B, NUM_CLASSES)), _full_spec((1, 1))),
        compiler_params=pltpu.CompilerParams(
            dimension_semantics=("arbitrary",)),
    )(*args)
    return logits, loss[0, 0]


def multimodal_classifier_forward(packed_params, pixel_values, metadata, labels=None):
    if labels is None:
        # TODO(synk): CE against dummy labels is still computed (discarded); negligible cost.
        dummy = jnp.zeros((pixel_values.shape[0],), jnp.int32)
        logits, _ = _fused_forward(packed_params, pixel_values, metadata, dummy)
        return logits
    logits, loss = _fused_forward(packed_params, pixel_values, metadata, labels)
    return {"loss": loss, "logits": logits}


# ------------------------------ param init ---------------------------------
def init_params(key):
    def dense(k, fan_in, fan_out):
        kw, kb = jax.random.split(k)
        w = jax.random.normal(kw, (fan_in, fan_out), jnp.float32) * 0.02
        b = jax.random.normal(kb, (fan_out,), jnp.float32) * 0.02
        return w, b

    keys = jax.random.split(key, 5 + LAYERS)
    params = {}
    params["patch_w"], params["patch_b"] = dense(keys[0], CPP, HIDDEN)
    params["cls"] = jax.random.normal(keys[1], (1, 1, HIDDEN), jnp.float32) * 0.02
    params["pos"] = jax.random.normal(keys[2], (1, SEQ, HIDDEN), jnp.float32) * 0.02
    params["ln_g"] = jnp.ones((HIDDEN,), jnp.float32)
    params["ln_b"] = jnp.zeros((HIDDEN,), jnp.float32)
    params["meta_w"], params["meta_b"] = dense(keys[3], META_FEATURES, META_HIDDEN)
    params["cls_w"], params["cls_b"] = dense(keys[4], HIDDEN + META_HIDDEN, NUM_CLASSES)

    layers = []
    for li in range(LAYERS):
        lkeys = jax.random.split(keys[5 + li], 6)
        layer = {
            "ln1_g": jnp.ones((HIDDEN,), jnp.float32),
            "ln1_b": jnp.zeros((HIDDEN,), jnp.float32),
            "ln2_g": jnp.ones((HIDDEN,), jnp.float32),
            "ln2_b": jnp.zeros((HIDDEN,), jnp.float32),
        }
        layer["q_w"], layer["q_b"] = dense(lkeys[0], HIDDEN, HIDDEN)
        layer["k_w"], layer["k_b"] = dense(lkeys[1], HIDDEN, HIDDEN)
        layer["v_w"], layer["v_b"] = dense(lkeys[2], HIDDEN, HIDDEN)
        layer["o_w"], layer["o_b"] = dense(lkeys[3], HIDDEN, HIDDEN)
        layer["fc1_w"], layer["fc1_b"] = dense(lkeys[4], HIDDEN, INTERMEDIATE)
        layer["fc2_w"], layer["fc2_b"] = dense(lkeys[5], INTERMEDIATE, HIDDEN)
        layers.append(layer)
    params["layers"] = layers
    return params


def pack_params(p):
    """Repack logical params into the coalesced kernel layout (few big blobs)."""
    L, D, I = LAYERS, HIDDEN, INTERMEDIATE
    scale = 1.0 / (HEAD_DIM ** 0.5)

    # ---- embed blob: rows = [patch_w ; patch_b ; cls ; pos (padded to SP rows)] ----
    pos = p["pos"].reshape(SEQ, D)
    pos_pad = jnp.concatenate([pos, jnp.zeros((SEQ_PAD - SEQ, D), jnp.float32)], axis=0)
    embed_w = jnp.concatenate(
        [p["patch_w"], p["patch_b"].reshape(1, D), p["cls"].reshape(1, D), pos_pad],
        axis=0).astype(jnp.bfloat16)                               # (TOKEN_DIM, D)

    # ---- per-layer 32-row weight blob: [q*scale | k | v | o | fc1] along lanes ----
    w32 = jnp.stack(
        [jnp.concatenate([lyr["q_w"] * scale, lyr["k_w"], lyr["v_w"],
                          lyr["o_w"], lyr["fc1_w"]], axis=1)
         for lyr in p["layers"]], axis=0).astype(jnp.bfloat16)      # (L, D, 3D+D+I)

    fc2_w = jnp.stack([lyr["fc2_w"] for lyr in p["layers"]],
                      axis=0).astype(jnp.bfloat16)                  # (L, I, D)

    # ---- f32 vector blob (rows padded to 128 lanes) ----
    def padrow(v, width=128):
        v = v.reshape(1, -1)
        return jnp.pad(v, ((0, 0), (0, width - v.shape[1])))

    rows = [p["meta_w"]]                                            # rows 0..META_FEATURES-1
    for lyr in p["layers"]:
        qkv_b = jnp.concatenate([lyr["q_b"] * scale, lyr["k_b"], lyr["v_b"]], axis=0)
        rows += [padrow(lyr["ln1_g"]), padrow(lyr["ln1_b"]),
                 padrow(lyr["ln2_g"]), padrow(lyr["ln2_b"]),
                 padrow(lyr["o_b"]), padrow(lyr["fc2_b"]),
                 padrow(lyr["fc1_b"]), padrow(qkv_b)]
    rows += [padrow(p["ln_g"]), padrow(p["ln_b"]),
             padrow(p["meta_b"]), padrow(p["cls_b"])]
    vec = jnp.concatenate(rows, axis=0).astype(jnp.float32)         # (8 + 8L + 4, 128)

    return {
        "embed_w": embed_w,
        "w32": w32,
        "fc2_w": fc2_w,
        "vec": vec,
        "cls_w": p["cls_w"].astype(jnp.float32),                    # (D + 128, NC)
    }


# --------------------------------- main -------------------------------------
if __name__ == "__main__":
    key = jax.random.PRNGKey(0)
    pkey, xkey, mkey, lkey = jax.random.split(key, 4)

    params = init_params(pkey)
    packed = pack_params(params)

    pixel_values = jax.random.normal(xkey, (BATCH, CHANNELS, IMG, IMG), jnp.float32)
    metadata = jax.random.normal(mkey, (BATCH, META_FEATURES), jnp.float32)
    labels = jax.random.randint(lkey, (BATCH,), 0, NUM_CLASSES)

    logits = multimodal_classifier_forward(packed, pixel_values, metadata)
    with_loss = multimodal_classifier_forward(packed, pixel_values, metadata, labels)

    jax.block_until_ready(logits)
    jax.block_until_ready(with_loss["loss"])
    jax.block_until_ready(with_loss["logits"])

    assert logits.shape == (BATCH, NUM_CLASSES)
    assert with_loss["logits"].shape == (BATCH, NUM_CLASSES)
    assert with_loss["loss"].shape == ()
    print("KERNEL_OK")
</pallas_src>

<mosaic_0001>
module attributes {stable_mosaic.version = 11 : i64} {
  func.func @_fused_forward_kernel(%arg0: i32, %arg1: memref<48x74xbf16, #tpu.memory_space<vmem>>, %arg2: memref<74x32xbf16, #tpu.memory_space<vmem>>, %arg3: memref<2x32x256xbf16, #tpu.memory_space<vmem>>, %arg4: memref<2x128x32xbf16, #tpu.memory_space<vmem>>, %arg5: memref<28x128xf32, #tpu.memory_space<vmem>>, %arg6: memref<160x5xf32, #tpu.memory_space<vmem>>, %arg7: memref<2x8xf32, #tpu.memory_space<vmem>>, %arg8: memref<2x1xi32, #tpu.memory_space<vmem>>, %arg9: memref<2x5xf32, #tpu.memory_space<vmem>>, %arg10: memref<1x1xf32, #tpu.memory_space<vmem>>) attributes {dimension_semantics = [#tpu.dimension_semantics<arbitrary>], iteration_bounds = array<i64: 1>, scalar_prefetch = 0 : i64, scratch_operands = 0 : i64, tpu.core_type = #tpu.core_type<tc>, window_params = [{pipeline_mode = #tpu.pipeline_mode<synchronous>, transform_indices = @transform_0, window_bounds = array<i64: 48, 74>}, {pipeline_mode = #tpu.pipeline_mode<synchronous>, transform_indices = @transform_1, window_bounds = array<i64: 74, 32>}, {pipeline_mode = #tpu.pipeline_mode<synchronous>, transform_indices = @transform_2, window_bounds = array<i64: 2, 32, 256>}, {pipeline_mode = #tpu.pipeline_mode<synchronous>, transform_indices = @transform_3, window_bounds = array<i64: 2, 128, 32>}, {pipeline_mode = #tpu.pipeline_mode<synchronous>, transform_indices = @transform_4, window_bounds = array<i64: 28, 128>}, {pipeline_mode = #tpu.pipeline_mode<synchronous>, transform_indices = @transform_5, window_bounds = array<i64: 160, 5>}, {pipeline_mode = #tpu.pipeline_mode<synchronous>, transform_indices = @transform_6, window_bounds = array<i64: 2, 8>}, {pipeline_mode = #tpu.pipeline_mode<synchronous>, transform_indices = @transform_7, window_bounds = array<i64: 2, 1>}, {pipeline_mode = #tpu.pipeline_mode<synchronous>, transform_indices = @transform_8, window_bounds = array<i64: 2, 5>}, {pipeline_mode = #tpu.pipeline_mode<synchronous>, transform_indices = @transform_9, window_bounds = array<i64: 1, 1>}]} {
    %c0 = arith.constant 0 : index
    %c0_0 = arith.constant 0 : index
    %0 = vector.load %arg1[%c0, %c0_0] : memref<48x74xbf16, #tpu.memory_space<vmem>>, vector<48x74xbf16>
    %c0_1 = arith.constant 0 : index
    %c0_2 = arith.constant 0 : index
    %1 = vector.load %arg2[%c0_1, %c0_2] : memref<74x32xbf16, #tpu.memory_space<vmem>>, vector<74x32xbf16>
    %cst = arith.constant dense<0.000000e+00> : vector<48x32xf32>
    %2 = tpu.matmul %0, %1, %cst {dimension_numbers = #tpu.dot_dimension_numbers<[1], [0], [0], [1], [0, 0, 1, 1], [], []>} : vector<48x74xbf16>, vector<74x32xbf16>, vector<48x32xf32> -> vector<48x32xf32>
    %3 = tpu.iota {dimensions = array<i32: 1>} : vector<1x24xi32>
    %c17_i32 = arith.constant 17 : i32
    %4 = vector.broadcast %c17_i32 : i32 to vector<1x24xi32>
    %5 = arith.cmpi sge, %3, %4 : vector<1x24xi32>
    %cst_3 = arith.constant -1.000000e+30 : f32
    %cst_4 = arith.constant 0.000000e+00 : f32
    %6 = vector.broadcast %cst_3 : f32 to vector<1x24xf32>
    %7 = vector.broadcast %cst_4 : f32 to vector<1x24xf32>
    %8 = arith.select %5, %6, %7 : vector<1x24xi1>, vector<1x24xf32>
    %c0_5 = arith.constant 0 : index
    %c0_6 = arith.constant 0 : index
    %c0_7 = arith.constant 0 : index
    %9 = vector.load %arg3[%c0_5, %c0_6, %c0_7] : memref<2x32x256xbf16, #tpu.memory_space<vmem>>, vector<1x32x256xbf16>
    %10 = vector.shape_cast %9 : vector<1x32x256xbf16> to vector<32x256xbf16>
    %c8 = arith.constant 8 : index
    %c0_8 = arith.constant 0 : index
    %11 = vector.load %arg5[%c8, %c0_8] : memref<28x128xf32, #tpu.memory_space<vmem>>, vector<8x128xf32>
    %12 = vector.extract_strided_slice %11 {offsets = [0, 0], sizes = [1, 32], strides = [1, 1]} : vector<8x128xf32> to vector<1x32xf32>
    %13 = vector.extract_strided_slice %11 {offsets = [1, 0], sizes = [1, 32], strides = [1, 1]} : vector<8x128xf32> to vector<1x32xf32>
    %14 = vector.extract_strided_slice %11 {offsets = [2, 0], sizes = [1, 32], strides = [1, 1]} : vector<8x128xf32> to vector<1x32xf32>
    %15 = vector.extract_strided_slice %11 {offsets = [3, 0], sizes = [1, 32], strides = [1, 1]} : vector<8x128xf32> to vector<1x32xf32>
    %16 = vector.extract_strided_slice %11 {offsets = [4, 0], sizes = [1, 32], strides = [1, 1]} : vector<8x128xf32> to vector<1x32xf32>
    %17 = vector.extract_strided_slice %11 {offsets = [5, 0], sizes = [1, 32], strides = [1, 1]} : vector<8x128xf32> to vector<1x32xf32>
    %18 = vector.extract_strided_slice %11 {offsets = [6, 0], sizes = [1, 128], strides = [1, 1]} : vector<8x128xf32> to vector<1x128xf32>
    %19 = vector.extract_strided_slice %11 {offsets = [7, 0], sizes = [1, 96], strides = [1, 1]} : vector<8x128xf32> to vector<1x96xf32>
    %cst_9 = arith.constant dense<0.000000e+00> : vector<48xf32>
    %20 = vector.multi_reduction <add>, %2, %cst_9 [1] : vector<48x32xf32> to vector<48xf32>
    %21 = vector.shape_cast %20 : vector<48xf32> to vector<48x1xf32>
    %cst_10 = arith.constant 3.200000e+01 : f32
    %22 = vector.broadcast %cst_10 : f32 to vector<48x1xf32>
    %23 = arith.divf %21, %22 : vector<48x1xf32>
    %24 = vector.broadcast %23 : vector<48x1xf32> to vector<48x32xf32>
    %25 = arith.subf %2, %24 : vector<48x32xf32>
    %26 = arith.mulf %25, %25 : vector<48x32xf32>
    %cst_11 = arith.constant dense<0.000000e+00> : vector<48xf32>
    %27 = vector.multi_reduction <add>, %26, %cst_11 [1] : vector<48x32xf32> to vector<48xf32>
    %28 = vector.shape_cast %27 : vector<48xf32> to vector<48x1xf32>
    %cst_12 = arith.constant 3.200000e+01 : f32
    %29 = vector.broadcast %cst_12 : f32 to vector<48x1xf32>
    %30 = arith.divf %28, %29 : vector<48x1xf32>
    %31 = vector.broadcast %23 : vector<48x1xf32> to vector<48x32xf32>
    %32 = arith.subf %2, %31 : vector<48x32xf32>
    %cst_13 = arith.constant 9.99999996E-13 : f32
    %33 = vector.broadcast %cst_13 : f32 to vector<48x1xf32>
    %34 = arith.addf %30, %33 : vector<48x1xf32>
    %35 = math.rsqrt %34 : vector<48x1xf32>
    %36 = vector.broadcast %35 : vector<48x1xf32> to vector<48x32xf32>
    %37 = arith.mulf %32, %36 : vector<48x32xf32>
    %38 = vector.broadcast %12 : vector<1x32xf32> to vector<48x32xf32>
    %39 = arith.mulf %37, %38 : vector<48x32xf32>
    %40 = vector.broadcast %13 : vector<1x32xf32> to vector<48x32xf32>
    %41 = arith.addf %39, %40 : vector<48x32xf32>
    %42 = arith.truncf %41 : vector<48x32xf32> to vector<48x32xbf16>
    %43 = vector.extract_strided_slice %10 {offsets = [0, 0], sizes = [32, 96], strides = [1, 1]} : vector<32x256xbf16> to vector<32x96xbf16>
    %cst_14 = arith.constant dense<0.000000e+00> : vector<48x96xf32>
    %44 = tpu.matmul %42, %43, %cst_14 {dimension_numbers = #tpu.dot_dimension_numbers<[1], [0], [0], [1], [0, 0, 1, 1], [], []>} : vector<48x32xbf16>, vector<32x96xbf16>, vector<48x96xf32> -> vector<48x96xf32>
    %45 = vector.broadcast %19 : vector<1x96xf32> to vector<48x96xf32>
    %46 = arith.addf %44, %45 : vector<48x96xf32>
    %47 = vector.extract_strided_slice %46 {offsets = [0, 0], sizes = [24, 96], strides = [1, 1]} : vector<48x96xf32> to vector<24x96xf32>
    %48 = vector.extract_strided_slice %47 {offsets = [0, 0], sizes = [24, 16], strides = [1, 1]} : vector<24x96xf32> to vector<24x16xf32>
    %49 = vector.extract_strided_slice %47 {offsets = [0, 32], sizes = [24, 16], strides = [1, 1]} : vector<24x96xf32> to vector<24x16xf32>
    %50 = vector.extract_strided_slice %47 {offsets = [0, 64], sizes = [24, 16], strides = [1, 1]} : vector<24x96xf32> to vector<24x16xf32>
    %51 = arith.truncf %48 : vector<24x16xf32> to vector<24x16xbf16>
    %52 = arith.truncf %49 : vector<24x16xf32> to vector<24x16xbf16>
    %cst_15 = arith.constant dense<0.000000e+00> : vector<24x24xf32>
    %53 = tpu.matmul %51, %52, %cst_15 {dimension_numbers = #tpu.dot_dimension_numbers<[1], [1], [0], [0], [0, 0, 1, 0], [], []>} : vector<24x16xbf16>, vector<24x16xbf16>, vector<24x24xf32> -> vector<24x24xf32>
    %54 = vector.broadcast %8 : vector<1x24xf32> to vector<24x24xf32>
    %55 = arith.addf %53, %54 : vector<24x24xf32>
    %cst_16 = arith.constant dense<0xFF800000> : vector<24xf32>
    %56 = vector.multi_reduction <maximumf>, %55, %cst_16 [1] : vector<24x24xf32> to vector<24xf32>
    %57 = vector.shape_cast %56 : vector<24xf32> to vector<24x1xf32>
    %58 = vector.broadcast %57 : vector<24x1xf32> to vector<24x24xf32>
    %59 = arith.subf %55, %58 : vector<24x24xf32>
    %60 = math.exp %59 : vector<24x24xf32>
    %cst_17 = arith.constant dense<0.000000e+00> : vector<24xf32>
    %61 = vector.multi_reduction <add>, %60, %cst_17 [1] : vector<24x24xf32> to vector<24xf32>
    %62 = vector.shape_cast %61 : vector<24xf32> to vector<24x1xf32>
    %63 = tpu.reciprocal %62 {approx = true} : vector<24x1xf32> -> vector<24x1xf32>
    %64 = vector.broadcast %63 : vector<24x1xf32> to vector<24x24xf32>
    %65 = arith.mulf %60, %64 : vector<24x24xf32>
    %66 = arith.truncf %65 : vector<24x24xf32> to vector<24x24xbf16>
    %67 = arith.truncf %50 : vector<24x16xf32> to vector<24x16xbf16>
    %cst_18 = arith.constant dense<0.000000e+00> : vector<24x16xf32>
    %68 = tpu.matmul %66, %67, %cst_18 {dimension_numbers = #tpu.dot_dimension_numbers<[1], [0], [0], [1], [0, 0, 1, 1], [], []>} : vector<24x24xbf16>, vector<24x16xbf16>, vector<24x16xf32> -> vector<24x16xf32>
    %69 = vector.extract_strided_slice %47 {offsets = [0, 16], sizes = [24, 16], strides = [1, 1]} : vector<24x96xf32> to vector<24x16xf32>
    %70 = vector.extract_strided_slice %47 {offsets = [0, 48], sizes = [24, 16], strides = [1, 1]} : vector<24x96xf32> to vector<24x16xf32>
    %71 = vector.extract_strided_slice %47 {offsets = [0, 80], sizes = [24, 16], strides = [1, 1]} : vector<24x96xf32> to vector<24x16xf32>
    %72 = arith.truncf %69 : vector<24x16xf32> to vector<24x16xbf16>
    %73 = arith.truncf %70 : vector<24x16xf32> to vector<24x16xbf16>
    %cst_19 = arith.constant dense<0.000000e+00> : vector<24x24xf32>
    %74 = tpu.matmul %72, %73, %cst_19 {dimension_numbers = #tpu.dot_dimension_numbers<[1], [1], [0], [0], [0, 0, 1, 0], [], []>} : vector<24x16xbf16>, vector<24x16xbf16>, vector<24x24xf32> -> vector<24x24xf32>
    %75 = vector.broadcast %8 : vector<1x24xf32> to vector<24x24xf32>
    %76 = arith.addf %74, %75 : vector<24x24xf32>
    %cst_20 = arith.constant dense<0xFF800000> : vector<24xf32>
    %77 = vector.multi_reduction <maximumf>, %76, %cst_20 [1] : vector<24x24xf32> to vector<24xf32>
    %78 = vector.shape_cast %77 : vector<24xf32> to vector<24x1xf32>
    %79 = vector.broadcast %78 : vector<24x1xf32> to vector<24x24xf32>
    %80 = arith.subf %76, %79 : vector<24x24xf32>
    %81 = math.exp %80 : vector<24x24xf32>
    %cst_21 = arith.constant dense<0.000000e+00> : vector<24xf32>
    %82 = vector.multi_reduction <add>, %81, %cst_21 [1] : vector<24x24xf32> to vector<24xf32>
    %83 = vector.shape_cast %82 : vector<24xf32> to vector<24x1xf32>
    %84 = tpu.reciprocal %83 {approx = true} : vector<24x1xf32> -> vector<24x1xf32>
    %85 = vector.broadcast %84 : vector<24x1xf32> to vector<24x24xf32>
    %86 = arith.mulf %81, %85 : vector<24x24xf32>
    %87 = arith.truncf %86 : vector<24x24xf32> to vector<24x24xbf16>
    %88 = arith.truncf %71 : vector<24x16xf32> to vector<24x16xbf16>
    %cst_22 = arith.constant dense<0.000000e+00> : vector<24x16xf32>
    %89 = tpu.matmul %87, %88, %cst_22 {dimension_numbers = #tpu.dot_dimension_numbers<[1], [0], [0], [1], [0, 0, 1, 1], [], []>} : vector<24x24xbf16>, vector<24x16xbf16>, vector<24x16xf32> -> vector<24x16xf32>
    %90 = tpu.concatenate %68, %89 in 1 : vector<24x16xf32>, vector<24x16xf32> -> vector<24x32xf32>
    %91 = vector.extract_strided_slice %46 {offsets = [24, 0], sizes = [24, 96], strides = [1, 1]} : vector<48x96xf32> to vector<24x96xf32>
    %92 = vector.extract_strided_slice %91 {offsets = [0, 0], sizes = [24, 16], strides = [1, 1]} : vector<24x96xf32> to vector<24x16xf32>
    %93 = vector.extract_strided_slice %91 {offsets = [0, 32], sizes = [24, 16], strides = [1, 1]} : vector<24x96xf32> to vector<24x16xf32>
    %94 = vector.extract_strided_slice %91 {offsets = [0, 64], sizes = [24, 16], strides = [1, 1]} : vector<24x96xf32> to vector<24x16xf32>
    %95 = arith.truncf %92 : vector<24x16xf32> to vector<24x16xbf16>
    %96 = arith.truncf %93 : vector<24x16xf32> to vector<24x16xbf16>
    %cst_23 = arith.constant dense<0.000000e+00> : vector<24x24xf32>
    %97 = tpu.matmul %95, %96, %cst_23 {dimension_numbers = #tpu.dot_dimension_numbers<[1], [1], [0], [0], [0, 0, 1, 0], [], []>} : vector<24x16xbf16>, vector<24x16xbf16>, vector<24x24xf32> -> vector<24x24xf32>
    %98 = vector.broadcast %8 : vector<1x24xf32> to vector<24x24xf32>
    %99 = arith.addf %97, %98 : vector<24x24xf32>
    %cst_24 = arith.constant dense<0xFF800000> : vector<24xf32>
    %100 = vector.multi_reduction <maximumf>, %99, %cst_24 [1] : vector<24x24xf32> to vector<24xf32>
    %101 = vector.shape_cast %100 : vector<24xf32> to vector<24x1xf32>
    %102 = vector.broadcast %101 : vector<24x1xf32> to vector<24x24xf32>
    %103 = arith.subf %99, %102 : vector<24x24xf32>
    %104 = math.exp %103 : vector<24x24xf32>
    %cst_25 = arith.constant dense<0.000000e+00> : vector<24xf32>
    %105 = vector.multi_reduction <add>, %104, %cst_25 [1] : vector<24x24xf32> to vector<24xf32>
    %106 = vector.shape_cast %105 : vector<24xf32> to vector<24x1xf32>
    %107 = tpu.reciprocal %106 {approx = true} : vector<24x1xf32> -> vector<24x1xf32>
    %108 = vector.broadcast %107 : vector<24x1xf32> to vector<24x24xf32>
    %109 = arith.mulf %104, %108 : vector<24x24xf32>
    %110 = arith.truncf %109 : vector<24x24xf32> to vector<24x24xbf16>
    %111 = arith.truncf %94 : vector<24x16xf32> to vector<24x16xbf16>
    %cst_26 = arith.constant dense<0.000000e+00> : vector<24x16xf32>
    %112 = tpu.matmul %110, %111, %cst_26 {dimension_numbers = #tpu.dot_dimension_numbers<[1], [0], [0], [1], [0, 0, 1, 1], [], []>} : vector<24x24xbf16>, vector<24x16xbf16>, vector<24x16xf32> -> vector<24x16xf32>
    %113 = vector.extract_strided_slice %91 {offsets = [0, 16], sizes = [24, 16], strides = [1, 1]} : vector<24x96xf32> to vector<24x16xf32>
    %114 = vector.extract_strided_slice %91 {offsets = [0, 48], sizes = [24, 16], strides = [1, 1]} : vector<24x96xf32> to vector<24x16xf32>
    %115 = vector.extract_strided_slice %91 {offsets = [0, 80], sizes = [24, 16], strides = [1, 1]} : vector<24x96xf32> to vector<24x16xf32>
    %116 = arith.truncf %113 : vector<24x16xf32> to vector<24x16xbf16>
    %117 = arith.truncf %114 : vector<24x16xf32> to vector<24x16xbf16>
    %cst_27 = arith.constant dense<0.000000e+00> : vector<24x24xf32>
    %118 = tpu.matmul %116, %117, %cst_27 {dimension_numbers = #tpu.dot_dimension_numbers<[1], [1], [0], [0], [0, 0, 1, 0], [], []>} : vector<24x16xbf16>, vector<24x16xbf16>, vector<24x24xf32> -> vector<24x24xf32>
    %119 = vector.broadcast %8 : vector<1x24xf32> to vector<24x24xf32>
    %120 = arith.addf %118, %119 : vector<24x24xf32>
    %cst_28 = arith.constant dense<0xFF800000> : vector<24xf32>
    %121 = vector.multi_reduction <maximumf>, %120, %cst_28 [1] : vector<24x24xf32> to vector<24xf32>
    %122 = vector.shape_cast %121 : vector<24xf32> to vector<24x1xf32>
    %123 = vector.broadcast %122 : vector<24x1xf32> to vector<24x24xf32>
    %124 = arith.subf %120, %123 : vector<24x24xf32>
    %125 = math.exp %124 : vector<24x24xf32>
    %cst_29 = arith.constant dense<0.000000e+00> : vector<24xf32>
    %126 = vector.multi_reduction <add>, %125, %cst_29 [1] : vector<24x24xf32> to vector<24xf32>
    %127 = vector.shape_cast %126 : vector<24xf32> to vector<24x1xf32>
    %128 = tpu.reciprocal %127 {approx = true} : vector<24x1xf32> -> vector<24x1xf32>
    %129 = vector.broadcast %128 : vector<24x1xf32> to vector<24x24xf32>
    %130 = arith.mulf %125, %129 : vector<24x24xf32>
    %131 = arith.truncf %130 : vector<24x24xf32> to vector<24x24xbf16>
    %132 = arith.truncf %115 : vector<24x16xf32> to vector<24x16xbf16>
    %cst_30 = arith.constant dense<0.000000e+00> : vector<24x16xf32>
    %133 = tpu.matmul %131, %132, %cst_30 {dimension_numbers = #tpu.dot_dimension_numbers<[1], [0], [0], [1], [0, 0, 1, 1], [], []>} : vector<24x24xbf16>, vector<24x16xbf16>, vector<24x16xf32> -> vector<24x16xf32>
    %134 = tpu.concatenate %112, %133 in 1 : vector<24x16xf32>, vector<24x16xf32> -> vector<24x32xf32>
    %135 = tpu.concatenate %90, %134 in 0 : vector<24x32xf32>, vector<24x32xf32> -> vector<48x32xf32>
    %136 = arith.truncf %135 : vector<48x32xf32> to vector<48x32xbf16>
    %137 = vector.extract_strided_slice %10 {offsets = [0, 96], sizes = [32, 32], strides = [1, 1]} : vector<32x256xbf16> to vector<32x32xbf16>
    %cst_31 = arith.constant dense<0.000000e+00> : vector<48x32xf32>
    %138 = tpu.matmul %136, %137, %cst_31 {dimension_numbers = #tpu.dot_dimension_numbers<[1], [0], [0], [1], [0, 0, 1, 1], [], []>} : vector<48x32xbf16>, vector<32x32xbf16>, vector<48x32xf32> -> vector<48x32xf32>
    %139 = arith.addf %2, %138 : vector<48x32xf32>
    %140 = vector.broadcast %16 : vector<1x32xf32> to vector<48x32xf32>
    %141 = arith.addf %139, %140 : vector<48x32xf32>
    %cst_32 = arith.constant dense<0.000000e+00> : vector<48xf32>
    %142 = vector.multi_reduction <add>, %141, %cst_32 [1] : vector<48x32xf32> to vector<48xf32>
    %143 = vector.shape_cast %142 : vector<48xf32> to vector<48x1xf32>
    %cst_33 = arith.constant 3.200000e+01 : f32
    %144 = vector.broadcast %cst_33 : f32 to vector<48x1xf32>
    %145 = arith.divf %143, %144 : vector<48x1xf32>
    %146 = vector.broadcast %145 : vector<48x1xf32> to vector<48x32xf32>
    %147 = arith.subf %141, %146 : vector<48x32xf32>
    %148 = arith.mulf %147, %147 : vector<48x32xf32>
    %cst_34 = arith.constant dense<0.000000e+00> : vector<48xf32>
    %149 = vector.multi_reduction <add>, %148, %cst_34 [1] : vector<48x32xf32> to vector<48xf32>
    %150 = vector.shape_cast %149 : vector<48xf32> to vector<48x1xf32>
    %cst_35 = arith.constant 3.200000e+01 : f32
    %151 = vector.broadcast %cst_35 : f32 to vector<48x1xf32>
    %152 = arith.divf %150, %151 : vector<48x1xf32>
    %153 = vector.broadcast %145 : vector<48x1xf32> to vector<48x32xf32>
    %154 = arith.subf %141, %153 : vector<48x32xf32>
    %cst_36 = arith.constant 9.99999996E-13 : f32
    %155 = vector.broadcast %cst_36 : f32 to vector<48x1xf32>
    %156 = arith.addf %152, %155 : vector<48x1xf32>
    %157 = math.rsqrt %156 : vector<48x1xf32>
    %158 = vector.broadcast %157 : vector<48x1xf32> to vector<48x32xf32>
    %159 = arith.mulf %154, %158 : vector<48x32xf32>
    %160 = vector.broadcast %14 : vector<1x32xf32> to vector<48x32xf32>
    %161 = arith.mulf %159, %160 : vector<48x32xf32>
    %162 = vector.broadcast %15 : vector<1x32xf32> to vector<48x32xf32>
    %163 = arith.addf %161, %162 : vector<48x32xf32>
    %164 = arith.truncf %163 : vector<48x32xf32> to vector<48x32xbf16>
    %165 = vector.extract_strided_slice %10 {offsets = [0, 128], sizes = [32, 128], strides = [1, 1]} : vector<32x256xbf16> to vector<32x128xbf16>
    %cst_37 = arith.constant dense<0.000000e+00> : vector<48x128xf32>
    %166 = tpu.matmul %164, %165, %cst_37 {dimension_numbers = #tpu.dot_dimension_numbers<[1], [0], [0], [1], [0, 0, 1, 1], [], []>} : vector<48x32xbf16>, vector<32x128xbf16>, vector<48x128xf32> -> vector<48x128xf32>
    %167 = vector.broadcast %18 : vector<1x128xf32> to vector<48x128xf32>
    %168 = arith.addf %166, %167 : vector<48x128xf32>
    %cst_38 = arith.constant 5.000000e-01 : f32
    %169 = vector.broadcast %cst_38 : f32 to vector<48x128xf32>
    %170 = arith.mulf %169, %168 : vector<48x128xf32>
    %cst_39 = arith.constant 4.471500e-02 : f32
    %171 = vector.broadcast %cst_39 : f32 to vector<48x128xf32>
    %172 = arith.mulf %171, %168 : vector<48x128xf32>
    %173 = arith.mulf %172, %168 : vector<48x128xf32>
    %174 = arith.mulf %173, %168 : vector<48x128xf32>
    %175 = arith.addf %168, %174 : vector<48x128xf32>
    %cst_40 = arith.constant 0.797884583 : f32
    %176 = vector.broadcast %cst_40 : f32 to vector<48x128xf32>
    %177 = arith.mulf %176, %175 : vector<48x128xf32>
    %178 = math.tanh %177 : vector<48x128xf32>
    %cst_41 = arith.constant 1.000000e+00 : f32
    %179 = vector.broadcast %cst_41 : f32 to vector<48x128xf32>
    %180 = arith.addf %179, %178 : vector<48x128xf32>
    %181 = arith.mulf %170, %180 : vector<48x128xf32>
    %182 = arith.truncf %181 : vector<48x128xf32> to vector<48x128xbf16>
    %c0_42 = arith.constant 0 : index
    %c0_43 = arith.constant 0 : index
    %c0_44 = arith.constant 0 : index
    %183 = vector.load %arg4[%c0_42, %c0_43, %c0_44] : memref<2x128x32xbf16, #tpu.memory_space<vmem>>, vector<1x128x32xbf16>
    %184 = vector.shape_cast %183 : vector<1x128x32xbf16> to vector<128x32xbf16>
    %cst_45 = arith.constant dense<0.000000e+00> : vector<48x32xf32>
    %185 = tpu.matmul %182, %184, %cst_45 {dimension_numbers = #tpu.dot_dimension_numbers<[1], [0], [0], [1], [0, 0, 1, 1], [], []>} : vector<48x128xbf16>, vector<128x32xbf16>, vector<48x32xf32> -> vector<48x32xf32>
    %186 = arith.addf %141, %185 : vector<48x32xf32>
    %187 = vector.broadcast %17 : vector<1x32xf32> to vector<48x32xf32>
    %188 = arith.addf %186, %187 : vector<48x32xf32>
    %c1 = arith.constant 1 : index
    %c0_46 = arith.constant 0 : index
    %c0_47 = arith.constant 0 : index
    %189 = vector.load %arg3[%c1, %c0_46, %c0_47] : memref<2x32x256xbf16, #tpu.memory_space<vmem>>, vector<1x32x256xbf16>
    %190 = vector.shape_cast %189 : vector<1x32x256xbf16> to vector<32x256xbf16>
    %c16 = arith.constant 16 : index
    %c0_48 = arith.constant 0 : index
    %191 = vector.load %arg5[%c16, %c0_48] : memref<28x128xf32, #tpu.memory_space<vmem>>, vector<8x128xf32>
    %192 = vector.extract_strided_slice %191 {offsets = [0, 0], sizes = [1, 32], strides = [1, 1]} : vector<8x128xf32> to vector<1x32xf32>
    %193 = vector.extract_strided_slice %191 {offsets = [1, 0], sizes = [1, 32], strides = [1, 1]} : vector<8x128xf32> to vector<1x32xf32>
    %194 = vector.extract_strided_slice %191 {offsets = [2, 0], sizes = [1, 32], strides = [1, 1]} : vector<8x128xf32> to vector<1x32xf32>
    %195 = vector.extract_strided_slice %191 {offsets = [3, 0], sizes = [1, 32], strides = [1, 1]} : vector<8x128xf32> to vector<1x32xf32>
    %196 = vector.extract_strided_slice %191 {offsets = [4, 0], sizes = [1, 32], strides = [1, 1]} : vector<8x128xf32> to vector<1x32xf32>
    %197 = vector.extract_strided_slice %191 {offsets = [5, 0], sizes = [1, 32], strides = [1, 1]} : vector<8x128xf32> to vector<1x32xf32>
    %198 = vector.extract_strided_slice %191 {offsets = [6, 0], sizes = [1, 128], strides = [1, 1]} : vector<8x128xf32> to vector<1x128xf32>
    %199 = vector.extract_strided_slice %191 {offsets = [7, 0], sizes = [1, 96], strides = [1, 1]} : vector<8x128xf32> to vector<1x96xf32>
    %cst_49 = arith.constant dense<0.000000e+00> : vector<48xf32>
    %200 = vector.multi_reduction <add>, %188, %cst_49 [1] : vector<48x32xf32> to vector<48xf32>
    %201 = vector.shape_cast %200 : vector<48xf32> to vector<48x1xf32>
    %cst_50 = arith.constant 3.200000e+01 : f32
    %202 = vector.broadcast %cst_50 : f32 to vector<48x1xf32>
    %203 = arith.divf %201, %202 : vector<48x1xf32>
    %204 = vector.broadcast %203 : vector<48x1xf32> to vector<48x32xf32>
    %205 = arith.subf %188, %204 : vector<48x32xf32>
    %206 = arith.mulf %205, %205 : vector<48x32xf32>
    %cst_51 = arith.constant dense<0.000000e+00> : vector<48xf32>
    %207 = vector.multi_reduction <add>, %206, %cst_51 [1] : vector<48x32xf32> to vector<48xf32>
    %208 = vector.shape_cast %207 : vector<48xf32> to vector<48x1xf32>
    %cst_52 = arith.constant 3.200000e+01 : f32
    %209 = vector.broadcast %cst_52 : f32 to vector<48x1xf32>
    %210 = arith.divf %208, %209 : vector<48x1xf32>
    %211 = vector.broadcast %203 : vector<48x1xf32> to vector<48x32xf32>
    %212 = arith.subf %188, %211 : vector<48x32xf32>
    %cst_53 = arith.constant 9.99999996E-13 : f32
    %213 = vector.broadcast %cst_53 : f32 to vector<48x1xf32>
    %214 = arith.addf %210, %213 : vector<48x1xf32>
    %215 = math.rsqrt %214 : vector<48x1xf32>
    %216 = vector.broadcast %215 : vector<48x1xf32> to vector<48x32xf32>
    %217 = arith.mulf %212, %216 : vector<48x32xf32>
    %218 = vector.broadcast %192 : vector<1x32xf32> to vector<48x32xf32>
    %219 = arith.mulf %217, %218 : vector<48x32xf32>
    %220 = vector.broadcast %193 : vector<1x32xf32> to vector<48x32xf32>
    %221 = arith.addf %219, %220 : vector<48x32xf32>
    %222 = arith.truncf %221 : vector<48x32xf32> to vector<48x32xbf16>
    %223 = vector.extract_strided_slice %190 {offsets = [0, 0], sizes = [32, 96], strides = [1, 1]} : vector<32x256xbf16> to vector<32x96xbf16>
    %cst_54 = arith.constant dense<0.000000e+00> : vector<48x96xf32>
    %224 = tpu.matmul %222, %223, %cst_54 {dimension_numbers = #tpu.dot_dimension_numbers<[1], [0], [0], [1], [0, 0, 1, 1], [], []>} : vector<48x32xbf16>, vector<32x96xbf16>, vector<48x96xf32> -> vector<48x96xf32>
    %225 = vector.broadcast %199 : vector<1x96xf32> to vector<48x96xf32>
    %226 = arith.addf %224, %225 : vector<48x96xf32>
    %227 = vector.extract_strided_slice %226 {offsets = [0, 0], sizes = [24, 96], strides = [1, 1]} : vector<48x96xf32> to vector<24x96xf32>
    %228 = vector.extract_strided_slice %227 {offsets = [0, 0], sizes = [24, 16], strides = [1, 1]} : vector<24x96xf32> to vector<24x16xf32>
    %229 = vector.extract_strided_slice %227 {offsets = [0, 32], sizes = [24, 16], strides = [1, 1]} : vector<24x96xf32> to vector<24x16xf32>
    %230 = vector.extract_strided_slice %227 {offsets = [0, 64], sizes = [24, 16], strides = [1, 1]} : vector<24x96xf32> to vector<24x16xf32>
    %231 = arith.truncf %228 : vector<24x16xf32> to vector<24x16xbf16>
    %232 = arith.truncf %229 : vector<24x16xf32> to vector<24x16xbf16>
    %cst_55 = arith.constant dense<0.000000e+00> : vector<24x24xf32>
    %233 = tpu.matmul %231, %232, %cst_55 {dimension_numbers = #tpu.dot_dimension_numbers<[1], [1], [0], [0], [0, 0, 1, 0], [], []>} : vector<24x16xbf16>, vector<24x16xbf16>, vector<24x24xf32> -> vector<24x24xf32>
    %234 = vector.broadcast %8 : vector<1x24xf32> to vector<24x24xf32>
    %235 = arith.addf %233, %234 : vector<24x24xf32>
    %cst_56 = arith.constant dense<0xFF800000> : vector<24xf32>
    %236 = vector.multi_reduction <maximumf>, %235, %cst_56 [1] : vector<24x24xf32> to vector<24xf32>
    %237 = vector.shape_cast %236 : vector<24xf32> to vector<24x1xf32>
    %238 = vector.broadcast %237 : vector<24x1xf32> to vector<24x24xf32>
    %239 = arith.subf %235, %238 : vector<24x24xf32>
    %240 = math.exp %239 : vector<24x24xf32>
    %cst_57 = arith.constant dense<0.000000e+00> : vector<24xf32>
    %241 = vector.multi_reduction <add>, %240, %cst_57 [1] : vector<24x24xf32> to vector<24xf32>
    %242 = vector.shape_cast %241 : vector<24xf32> to vector<24x1xf32>
    %243 = tpu.reciprocal %242 {approx = true} : vector<24x1xf32> -> vector<24x1xf32>
    %244 = vector.broadcast %243 : vector<24x1xf32> to vector<24x24xf32>
    %245 = arith.mulf %240, %244 : vector<24x24xf32>
    %246 = arith.truncf %245 : vector<24x24xf32> to vector<24x24xbf16>
    %247 = arith.truncf %230 : vector<24x16xf32> to vector<24x16xbf16>
    %cst_58 = arith.constant dense<0.000000e+00> : vector<24x16xf32>
    %248 = tpu.matmul %246, %247, %cst_58 {dimension_numbers = #tpu.dot_dimension_numbers<[1], [0], [0], [1], [0, 0, 1, 1], [], []>} : vector<24x24xbf16>, vector<24x16xbf16>, vector<24x16xf32> -> vector<24x16xf32>
    %249 = vector.extract_strided_slice %227 {offsets = [0, 16], sizes = [24, 16], strides = [1, 1]} : vector<24x96xf32> to vector<24x16xf32>
    %250 = vector.extract_strided_slice %227 {offsets = [0, 48], sizes = [24, 16], strides = [1, 1]} : vector<24x96xf32> to vector<24x16xf32>
    %251 = vector.extract_strided_slice %227 {offsets = [0, 80], sizes = [24, 16], strides = [1, 1]} : vector<24x96xf32> to vector<24x16xf32>
    %252 = arith.truncf %249 : vector<24x16xf32> to vector<24x16xbf16>
    %253 = arith.truncf %250 : vector<24x16xf32> to vector<24x16xbf16>
    %cst_59 = arith.constant dense<0.000000e+00> : vector<24x24xf32>
    %254 = tpu.matmul %252, %253, %cst_59 {dimension_numbers = #tpu.dot_dimension_numbers<[1], [1], [0], [0], [0, 0, 1, 0], [], []>} : vector<24x16xbf16>, vector<24x16xbf16>, vector<24x24xf32> -> vector<24x24xf32>
    %255 = vector.broadcast %8 : vector<1x24xf32> to vector<24x24xf32>
    %256 = arith.addf %254, %255 : vector<24x24xf32>
    %cst_60 = arith.constant dense<0xFF800000> : vector<24xf32>
    %257 = vector.multi_reduction <maximumf>, %256, %cst_60 [1] : vector<24x24xf32> to vector<24xf32>
    %258 = vector.shape_cast %257 : vector<24xf32> to vector<24x1xf32>
    %259 = vector.broadcast %258 : vector<24x1xf32> to vector<24x24xf32>
    %260 = arith.subf %256, %259 : vector<24x24xf32>
    %261 = math.exp %260 : vector<24x24xf32>
    %cst_61 = arith.constant dense<0.000000e+00> : vector<24xf32>
    %262 = vector.multi_reduction <add>, %261, %cst_61 [1] : vector<24x24xf32> to vector<24xf32>
    %263 = vector.shape_cast %262 : vector<24xf32> to vector<24x1xf32>
    %264 = tpu.reciprocal %263 {approx = true} : vector<24x1xf32> -> vector<24x1xf32>
    %265 = vector.broadcast %264 : vector<24x1xf32> to vector<24x24xf32>
    %266 = arith.mulf %261, %265 : vector<24x24xf32>
    %267 = arith.truncf %266 : vector<24x24xf32> to vector<24x24xbf16>
    %268 = arith.truncf %251 : vector<24x16xf32> to vector<24x16xbf16>
    %cst_62 = arith.constant dense<0.000000e+00> : vector<24x16xf32>
    %269 = tpu.matmul %267, %268, %cst_62 {dimension_numbers = #tpu.dot_dimension_numbers<[1], [0], [0], [1], [0, 0, 1, 1], [], []>} : vector<24x24xbf16>, vector<24x16xbf16>, vector<24x16xf32> -> vector<24x16xf32>
    %270 = tpu.concatenate %248, %269 in 1 : vector<24x16xf32>, vector<24x16xf32> -> vector<24x32xf32>
    %271 = vector.extract_strided_slice %226 {offsets = [24, 0], sizes = [24, 96], strides = [1, 1]} : vector<48x96xf32> to vector<24x96xf32>
    %272 = vector.extract_strided_slice %271 {offsets = [0, 0], sizes = [24, 16], strides = [1, 1]} : vector<24x96xf32> to vector<24x16xf32>
    %273 = vector.extract_strided_slice %271 {offsets = [0, 32], sizes = [24, 16], strides = [1, 1]} : vector<24x96xf32> to vector<24x16xf32>
    %274 = vector.extract_strided_slice %271 {offsets = [0, 64], sizes = [24, 16], strides = [1, 1]} : vector<24x96xf32> to vector<24x16xf32>
    %275 = arith.truncf %272 : vector<24x16xf32> to vector<24x16xbf16>
    %276 = arith.truncf %273 : vector<24x16xf32> to vector<24x16xbf16>
    %cst_63 = arith.constant dense<0.000000e+00> : vector<24x24xf32>
    %277 = tpu.matmul %275, %276, %cst_63 {dimension_numbers = #tpu.dot_dimension_numbers<[1], [1], [0], [0], [0, 0, 1, 0], [], []>} : vector<24x16xbf16>, vector<24x16xbf16>, vector<24x24xf32> -> vector<24x24xf32>
    %278 = vector.broadcast %8 : vector<1x24xf32> to vector<24x24xf32>
    %279 = arith.addf %277, %278 : vector<24x24xf32>
    %cst_64 = arith.constant dense<0xFF800000> : vector<24xf32>
    %280 = vector.multi_reduction <maximumf>, %279, %cst_64 [1] : vector<24x24xf32> to vector<24xf32>
    %281 = vector.shape_cast %280 : vector<24xf32> to vector<24x1xf32>
    %282 = vector.broadcast %281 : vector<24x1xf32> to vector<24x24xf32>
    %283 = arith.subf %279, %282 : vector<24x24xf32>
    %284 = math.exp %283 : vector<24x24xf32>
    %cst_65 = arith.constant dense<0.000000e+00> : vector<24xf32>
    %285 = vector.multi_reduction <add>, %284, %cst_65 [1] : vector<24x24xf32> to vector<24xf32>
    %286 = vector.shape_cast %285 : vector<24xf32> to vector<24x1xf32>
    %287 = tpu.reciprocal %286 {approx = true} : vector<24x1xf32> -> vector<24x1xf32>
    %288 = vector.broadcast %287 : vector<24x1xf32> to vector<24x24xf32>
    %289 = arith.mulf %284, %288 : vector<24x24xf32>
    %290 = arith.truncf %289 : vector<24x24xf32> to vector<24x24xbf16>
    %291 = arith.truncf %274 : vector<24x16xf32> to vector<24x16xbf16>
    %cst_66 = arith.constant dense<0.000000e+00> : vector<24x16xf32>
    %292 = tpu.matmul %290, %291, %cst_66 {dimension_numbers = #tpu.dot_dimension_numbers<[1], [0], [0], [1], [0, 0, 1, 1], [], []>} : vector<24x24xbf16>, vector<24x16xbf16>, vector<24x16xf32> -> vector<24x16xf32>
    %293 = vector.extract_strided_slice %271 {offsets = [0, 16], sizes = [24, 16], strides = [1, 1]} : vector<24x96xf32> to vector<24x16xf32>
    %294 = vector.extract_strided_slice %271 {offsets = [0, 48], sizes = [24, 16], strides = [1, 1]} : vector<24x96xf32> to vector<24x16xf32>
    %295 = vector.extract_strided_slice %271 {offsets = [0, 80], sizes = [24, 16], strides = [1, 1]} : vector<24x96xf32> to vector<24x16xf32>
    %296 = arith.truncf %293 : vector<24x16xf32> to vector<24x16xbf16>
    %297 = arith.truncf %294 : vector<24x16xf32> to vector<24x16xbf16>
    %cst_67 = arith.constant dense<0.000000e+00> : vector<24x24xf32>
    %298 = tpu.matmul %296, %297, %cst_67 {dimension_numbers = #tpu.dot_dimension_numbers<[1], [1], [0], [0], [0, 0, 1, 0], [], []>} : vector<24x16xbf16>, vector<24x16xbf16>, vector<24x24xf32> -> vector<24x24xf32>
    %299 = vector.broadcast %8 : vector<1x24xf32> to vector<24x24xf32>
    %300 = arith.addf %298, %299 : vector<24x24xf32>
    %cst_68 = arith.constant dense<0xFF800000> : vector<24xf32>
    %301 = vector.multi_reduction <maximumf>, %300, %cst_68 [1] : vector<24x24xf32> to vector<24xf32>
    %302 = vector.shape_cast %301 : vector<24xf32> to vector<24x1xf32>
    %303 = vector.broadcast %302 : vector<24x1xf32> to vector<24x24xf32>
    %304 = arith.subf %300, %303 : vector<24x24xf32>
    %305 = math.exp %304 : vector<24x24xf32>
    %cst_69 = arith.constant dense<0.000000e+00> : vector<24xf32>
    %306 = vector.multi_reduction <add>, %305, %cst_69 [1] : vector<24x24xf32> to vector<24xf32>
    %307 = vector.shape_cast %306 : vector<24xf32> to vector<24x1xf32>
    %308 = tpu.reciprocal %307 {approx = true} : vector<24x1xf32> -> vector<24x1xf32>
    %309 = vector.broadcast %308 : vector<24x1xf32> to vector<24x24xf32>
    %310 = arith.mulf %305, %309 : vector<24x24xf32>
    %311 = arith.truncf %310 : vector<24x24xf32> to vector<24x24xbf16>
    %312 = arith.truncf %295 : vector<24x16xf32> to vector<24x16xbf16>
    %cst_70 = arith.constant dense<0.000000e+00> : vector<24x16xf32>
    %313 = tpu.matmul %311, %312, %cst_70 {dimension_numbers = #tpu.dot_dimension_numbers<[1], [0], [0], [1], [0, 0, 1, 1], [], []>} : vector<24x24xbf16>, vector<24x16xbf16>, vector<24x16xf32> -> vector<24x16xf32>
    %314 = tpu.concatenate %292, %313 in 1 : vector<24x16xf32>, vector<24x16xf32> -> vector<24x32xf32>
    %315 = tpu.concatenate %270, %314 in 0 : vector<24x32xf32>, vector<24x32xf32> -> vector<48x32xf32>
    %316 = arith.truncf %315 : vector<48x32xf32> to vector<48x32xbf16>
    %317 = vector.extract_strided_slice %190 {offsets = [0, 96], sizes = [32, 32], strides = [1, 1]} : vector<32x256xbf16> to vector<32x32xbf16>
    %cst_71 = arith.constant dense<0.000000e+00> : vector<48x32xf32>
    %318 = tpu.matmul %316, %317, %cst_71 {dimension_numbers = #tpu.dot_dimension_numbers<[1], [0], [0], [1], [0, 0, 1, 1], [], []>} : vector<48x32xbf16>, vector<32x32xbf16>, vector<48x32xf32> -> vector<48x32xf32>
    %319 = arith.addf %188, %318 : vector<48x32xf32>
    %320 = vector.broadcast %196 : vector<1x32xf32> to vector<48x32xf32>
    %321 = arith.addf %319, %320 : vector<48x32xf32>
    %cst_72 = arith.constant dense<0.000000e+00> : vector<48xf32>
    %322 = vector.multi_reduction <add>, %321, %cst_72 [1] : vector<48x32xf32> to vector<48xf32>
    %323 = vector.shape_cast %322 : vector<48xf32> to vector<48x1xf32>
    %cst_73 = arith.constant 3.200000e+01 : f32
    %324 = vector.broadcast %cst_73 : f32 to vector<48x1xf32>
    %325 = arith.divf %323, %324 : vector<48x1xf32>
    %326 = vector.broadcast %325 : vector<48x1xf32> to vector<48x32xf32>
    %327 = arith.subf %321, %326 : vector<48x32xf32>
    %328 = arith.mulf %327, %327 : vector<48x32xf32>
    %cst_74 = arith.constant dense<0.000000e+00> : vector<48xf32>
    %329 = vector.multi_reduction <add>, %328, %cst_74 [1] : vector<48x32xf32> to vector<48xf32>
    %330 = vector.shape_cast %329 : vector<48xf32> to vector<48x1xf32>
    %cst_75 = arith.constant 3.200000e+01 : f32
    %331 = vector.broadcast %cst_75 : f32 to vector<48x1xf32>
    %332 = arith.divf %330, %331 : vector<48x1xf32>
    %333 = vector.broadcast %325 : vector<48x1xf32> to vector<48x32xf32>
    %334 = arith.subf %321, %333 : vector<48x32xf32>
    %cst_76 = arith.constant 9.99999996E-13 : f32
    %335 = vector.broadcast %cst_76 : f32 to vector<48x1xf32>
    %336 = arith.addf %332, %335 : vector<48x1xf32>
    %337 = math.rsqrt %336 : vector<48x1xf32>
    %338 = vector.broadcast %337 : vector<48x1xf32> to vector<48x32xf32>
    %339 = arith.mulf %334, %338 : vector<48x32xf32>
    %340 = vector.broadcast %194 : vector<1x32xf32> to vector<48x32xf32>
    %341 = arith.mulf %339, %340 : vector<48x32xf32>
    %342 = vector.broadcast %195 : vector<1x32xf32> to vector<48x32xf32>
    %343 = arith.addf %341, %342 : vector<48x32xf32>
    %344 = arith.truncf %343 : vector<48x32xf32> to vector<48x32xbf16>
    %345 = vector.extract_strided_slice %190 {offsets = [0, 128], sizes = [32, 128], strides = [1, 1]} : vector<32x256xbf16> to vector<32x128xbf16>
    %cst_77 = arith.constant dense<0.000000e+00> : vector<48x128xf32>
    %346 = tpu.matmul %344, %345, %cst_77 {dimension_numbers = #tpu.dot_dimension_numbers<[1], [0], [0], [1], [0, 0, 1, 1], [], []>} : vector<48x32xbf16>, vector<32x128xbf16>, vector<48x128xf32> -> vector<48x128xf32>
    %347 = vector.broadcast %198 : vector<1x128xf32> to vector<48x128xf32>
    %348 = arith.addf %346, %347 : vector<48x128xf32>
    %cst_78 = arith.constant 5.000000e-01 : f32
    %349 = vector.broadcast %cst_78 : f32 to vector<48x128xf32>
    %350 = arith.mulf %349, %348 : vector<48x128xf32>
    %cst_79 = arith.constant 4.471500e-02 : f32
    %351 = vector.broadcast %cst_79 : f32 to vector<48x128xf32>
    %352 = arith.mulf %351, %348 : vector<48x128xf32>
    %353 = arith.mulf %352, %348 : vector<48x128xf32>
    %354 = arith.mulf %353, %348 : vector<48x128xf32>
    %355 = arith.addf %348, %354 : vector<48x128xf32>
    %cst_80 = arith.constant 0.797884583 : f32
    %356 = vector.broadcast %cst_80 : f32 to vector<48x128xf32>
    %357 = arith.mulf %356, %355 : vector<48x128xf32>
    %358 = math.tanh %357 : vector<48x128xf32>
    %cst_81 = arith.constant 1.000000e+00 : f32
    %359 = vector.broadcast %cst_81 : f32 to vector<48x128xf32>
    %360 = arith.addf %359, %358 : vector<48x128xf32>
    %361 = arith.mulf %350, %360 : vector<48x128xf32>
    %362 = arith.truncf %361 : vector<48x128xf32> to vector<48x128xbf16>
    %c1_82 = arith.constant 1 : index
    %c0_83 = arith.constant 0 : index
    %c0_84 = arith.constant 0 : index
    %363 = vector.load %arg4[%c1_82, %c0_83, %c0_84] : memref<2x128x32xbf16, #tpu.memory_space<vmem>>, vector<1x128x32xbf16>
    %364 = vector.shape_cast %363 : vector<1x128x32xbf16> to vector<128x32xbf16>
    %cst_85 = arith.constant dense<0.000000e+00> : vector<48x32xf32>
    %365 = tpu.matmul %362, %364, %cst_85 {dimension_numbers = #tpu.dot_dimension_numbers<[1], [0], [0], [1], [0, 0, 1, 1], [], []>} : vector<48x128xbf16>, vector<128x32xbf16>, vector<48x32xf32> -> vector<48x32xf32>
    %366 = arith.addf %321, %365 : vector<48x32xf32>
    %367 = vector.broadcast %197 : vector<1x32xf32> to vector<48x32xf32>
    %368 = arith.addf %366, %367 : vector<48x32xf32>
    %369 = vector.extract_strided_slice %368 {offsets = [0, 0], sizes = [1, 32], strides = [1, 1]} : vector<48x32xf32> to vector<1x32xf32>
    %370 = vector.extract_strided_slice %368 {offsets = [24, 0], sizes = [1, 32], strides = [1, 1]} : vector<48x32xf32> to vector<1x32xf32>
    %371 = tpu.concatenate %369, %370 in 0 : vector<1x32xf32>, vector<1x32xf32> -> vector<2x32xf32>
    %c24 = arith.constant 24 : index
    %c0_86 = arith.constant 0 : index
    %372 = vector.load %arg5[%c24, %c0_86] : memref<28x128xf32, #tpu.memory_space<vmem>>, vector<1x32xf32>
    %c25 = arith.constant 25 : index
    %c0_87 = arith.constant 0 : index
    %373 = vector.load %arg5[%c25, %c0_87] : memref<28x128xf32, #tpu.memory_space<vmem>>, vector<1x32xf32>
    %cst_88 = arith.constant dense<0.000000e+00> : vector<2xf32>
    %374 = vector.multi_reduction <add>, %371, %cst_88 [1] : vector<2x32xf32> to vector<2xf32>
    %375 = vector.shape_cast %374 : vector<2xf32> to vector<2x1xf32>
    %cst_89 = arith.constant 3.200000e+01 : f32
    %376 = vector.broadcast %cst_89 : f32 to vector<2x1xf32>
    %377 = arith.divf %375, %376 : vector<2x1xf32>
    %378 = vector.broadcast %377 : vector<2x1xf32> to vector<2x32xf32>
    %379 = arith.subf %371, %378 : vector<2x32xf32>
    %380 = arith.mulf %379, %379 : vector<2x32xf32>
    %cst_90 = arith.constant dense<0.000000e+00> : vector<2xf32>
    %381 = vector.multi_reduction <add>, %380, %cst_90 [1] : vector<2x32xf32> to vector<2xf32>
    %382 = vector.shape_cast %381 : vector<2xf32> to vector<2x1xf32>
    %cst_91 = arith.constant 3.200000e+01 : f32
    %383 = vector.broadcast %cst_91 : f32 to vector<2x1xf32>
    %384 = arith.divf %382, %383 : vector<2x1xf32>
    %385 = vector.broadcast %377 : vector<2x1xf32> to vector<2x32xf32>
    %386 = arith.subf %371, %385 : vector<2x32xf32>
    %cst_92 = arith.constant 9.99999996E-13 : f32
    %387 = vector.broadcast %cst_92 : f32 to vector<2x1xf32>
    %388 = arith.addf %384, %387 : vector<2x1xf32>
    %389 = math.rsqrt %388 : vector<2x1xf32>
    %390 = vector.broadcast %389 : vector<2x1xf32> to vector<2x32xf32>
    %391 = arith.mulf %386, %390 : vector<2x32xf32>
    %392 = vector.broadcast %372 : vector<1x32xf32> to vector<2x32xf32>
    %393 = arith.mulf %391, %392 : vector<2x32xf32>
    %394 = vector.broadcast %373 : vector<1x32xf32> to vector<2x32xf32>
    %395 = arith.addf %393, %394 : vector<2x32xf32>
    %c0_93 = arith.constant 0 : index
    %c0_94 = arith.constant 0 : index
    %396 = vector.load %arg5[%c0_93, %c0_94] : memref<28x128xf32, #tpu.memory_space<vmem>>, vector<8x128xf32>
    %c26 = arith.constant 26 : index
    %c0_95 = arith.constant 0 : index
    %397 = vector.load %arg5[%c26, %c0_95] : memref<28x128xf32, #tpu.memory_space<vmem>>, vector<1x128xf32>
    %c27 = arith.constant 27 : index
    %c0_96 = arith.constant 0 : index
    %398 = vector.load %arg5[%c27, %c0_96] : memref<28x128xf32, #tpu.memory_space<vmem>>, vector<1x5xf32>
    %c0_97 = arith.constant 0 : index
    %c0_98 = arith.constant 0 : index
    %399 = vector.load %arg7[%c0_97, %c0_98] : memref<2x8xf32, #tpu.memory_space<vmem>>, vector<2x8xf32>
    %cst_99 = arith.constant dense<0.000000e+00> : vector<2x128xf32>
    %400 = tpu.matmul %399, %396, %cst_99 {dimension_numbers = #tpu.dot_dimension_numbers<[1], [0], [0], [1], [0, 0, 1, 1], [], []>} : vector<2x8xf32>, vector<8x128xf32>, vector<2x128xf32> -> vector<2x128xf32>
    %401 = vector.broadcast %397 : vector<1x128xf32> to vector<2x128xf32>
    %402 = arith.addf %400, %401 : vector<2x128xf32>
    %cst_100 = arith.constant 0.000000e+00 : f32
    %403 = vector.broadcast %cst_100 : f32 to vector<2x128xf32>
    %404 = arith.maximumf %402, %403 : vector<2x128xf32>
    %c0_101 = arith.constant 0 : index
    %c0_102 = arith.constant 0 : index
    %405 = vector.load %arg6[%c0_101, %c0_102] : memref<160x5xf32, #tpu.memory_space<vmem>>, vector<32x5xf32>
    %cst_103 = arith.constant dense<0.000000e+00> : vector<2x5xf32>
    %406 = tpu.matmul %395, %405, %cst_103 {dimension_numbers = #tpu.dot_dimension_numbers<[1], [0], [0], [1], [0, 0, 1, 1], [], []>} : vector<2x32xf32>, vector<32x5xf32>, vector<2x5xf32> -> vector<2x5xf32>
    %c32 = arith.constant 32 : index
    %c0_104 = arith.constant 0 : index
    %407 = vector.load %arg6[%c32, %c0_104] : memref<160x5xf32, #tpu.memory_space<vmem>>, vector<128x5xf32>
    %cst_105 = arith.constant dense<0.000000e+00> : vector<2x5xf32>
    %408 = tpu.matmul %404, %407, %cst_105 {dimension_numbers = #tpu.dot_dimension_numbers<[1], [0], [0], [1], [0, 0, 1, 1], [], []>} : vector<2x128xf32>, vector<128x5xf32>, vector<2x5xf32> -> vector<2x5xf32>
    %409 = arith.addf %406, %408 : vector<2x5xf32>
    %410 = vector.broadcast %398 : vector<1x5xf32> to vector<2x5xf32>
    %411 = arith.addf %409, %410 : vector<2x5xf32>
    %c0_106 = arith.constant 0 : index
    %c0_107 = arith.constant 0 : index
    %412 = vector.load %arg9[%c0_106, %c0_107] : memref<2x5xf32, #tpu.memory_space<vmem>>, vector<2x5xf32>
    tpu.vector_store %arg9[%c0_106, %c0_107], %411 {strides = array<i32>} : memref<2x5xf32, #tpu.memory_space<vmem>>, vector<2x5xf32>,
    %cst_108 = arith.constant dense<0xFF800000> : vector<2xf32>
    %413 = vector.multi_reduction <maximumf>, %411, %cst_108 [1] : vector<2x5xf32> to vector<2xf32>
    %414 = vector.shape_cast %413 : vector<2xf32> to vector<2x1xf32>
    %415 = vector.broadcast %414 : vector<2x1xf32> to vector<2x5xf32>
    %416 = arith.subf %411, %415 : vector<2x5xf32>
    %417 = math.exp %416 : vector<2x5xf32>
    %cst_109 = arith.constant dense<0.000000e+00> : vector<2xf32>
    %418 = vector.multi_reduction <add>, %417, %cst_109 [1] : vector<2x5xf32> to vector<2xf32>
    %419 = vector.shape_cast %418 : vector<2xf32> to vector<2x1xf32>
    %420 = math.log %419 : vector<2x1xf32>
    %421 = arith.addf %420, %414 : vector<2x1xf32>
    %422 = vector.broadcast %421 : vector<2x1xf32> to vector<2x5xf32>
    %423 = arith.subf %411, %422 : vector<2x5xf32>
    %424 = tpu.iota {dimensions = array<i32: 1>} : vector<2x5xi32>
    %c0_110 = arith.constant 0 : index
    %c0_111 = arith.constant 0 : index
    %425 = vector.load %arg8[%c0_110, %c0_111] : memref<2x1xi32, #tpu.memory_space<vmem>>, vector<2x1xi32>
    %426 = vector.broadcast %425 : vector<2x1xi32> to vector<2x5xi32>
    %427 = arith.cmpi eq, %424, %426 : vector<2x5xi32>
    %428 = arith.extui %427 : vector<2x5xi1> to vector<2x5xi32>
    %429 = arith.sitofp %428 : vector<2x5xi32> to vector<2x5xf32>
    %430 = arith.mulf %429, %423 : vector<2x5xf32>
    %431 = vector.shape_cast %430 : vector<2x5xf32> to vector<1x2x5xf32>
    %cst_112 = arith.constant dense<0.000000e+00> : vector<1xf32>
    %432 = vector.multi_reduction <add>, %431, %cst_112 [1, 2] : vector<1x2x5xf32> to vector<1xf32>
    %433 = vector.shape_cast %432 : vector<1xf32> to vector<1x1x1xf32>
    %434 = vector.extract %433[0, 0, 0] : f32 from vector<1x1x1xf32>
    %cst_113 = arith.constant 0.000000e+00 : f32
    %435 = arith.subf %cst_113, %434 : f32
    %cst_114 = arith.constant 2.000000e+00 : f32
    %436 = arith.divf %435, %cst_114 : f32
    %437 = vector.broadcast %436 : f32 to vector<1x1xf32>
    %c0_115 = arith.constant 0 : index
    %c0_116 = arith.constant 0 : index
    %438 = vector.load %arg10[%c0_115, %c0_116] : memref<1x1xf32, #tpu.memory_space<vmem>>, vector<1x1xf32>
    tpu.vector_store %arg10[%c0_115, %c0_116], %437 {strides = array<i32>} : memref<1x1xf32, #tpu.memory_space<vmem>>, vector<1x1xf32>,
    return
  }
  func.func @transform_0(%arg0: i32) -> (i32, i32) {
    %c0_i32 = arith.constant 0 : i32
    %c0_i32_0 = arith.constant 0 : i32
    %c0_i32_1 = arith.constant 0 : i32
    return %c0_i32, %c0_i32_0 : i32, i32
  }
  func.func @transform_1(%arg0: i32) -> (i32, i32) {
    %c0_i32 = arith.constant 0 : i32
    %c0_i32_0 = arith.constant 0 : i32
    %c0_i32_1 = arith.constant 0 : i32
    return %c0_i32, %c0_i32_0 : i32, i32
  }
  func.func @transform_2(%arg0: i32) -> (i32, i32, i32) {
    %c0_i32 = arith.constant 0 : i32
    %c0_i32_0 = arith.constant 0 : i32
    %c0_i32_1 = arith.constant 0 : i32
    %c0_i32_2 = arith.constant 0 : i32
    return %c0_i32, %c0_i32_0, %c0_i32_1 : i32, i32, i32
  }
  func.func @transform_3(%arg0: i32) -> (i32, i32, i32) {
    %c0_i32 = arith.constant 0 : i32
    %c0_i32_0 = arith.constant 0 : i32
    %c0_i32_1 = arith.constant 0 : i32
    %c0_i32_2 = arith.constant 0 : i32
    return %c0_i32, %c0_i32_0, %c0_i32_1 : i32, i32, i32
  }
  func.func @transform_4(%arg0: i32) -> (i32, i32) {
    %c0_i32 = arith.constant 0 : i32
    %c0_i32_0 = arith.constant 0 : i32
    %c0_i32_1 = arith.constant 0 : i32
    return %c0_i32, %c0_i32_0 : i32, i32
  }
  func.func @transform_5(%arg0: i32) -> (i32, i32) {
    %c0_i32 = arith.constant 0 : i32
    %c0_i32_0 = arith.constant 0 : i32
    %c0_i32_1 = arith.constant 0 : i32
    return %c0_i32, %c0_i32_0 : i32, i32
  }
  func.func @transform_6(%arg0: i32) -> (i32, i32) {
    %c0_i32 = arith.constant 0 : i32
    %c0_i32_0 = arith.constant 0 : i32
    %c0_i32_1 = arith.constant 0 : i32
    return %c0_i32, %c0_i32_0 : i32, i32
  }
  func.func @transform_7(%arg0: i32) -> (i32, i32) {
    %c0_i32 = arith.constant 0 : i32
    %c0_i32_0 = arith.constant 0 : i32
    %c0_i32_1 = arith.constant 0 : i32
    return %c0_i32, %c0_i32_0 : i32, i32
  }
  func.func @transform_8(%arg0: i32) -> (i32, i32) {
    %c0_i32 = arith.constant 0 : i32
    %c0_i32_0 = arith.constant 0 : i32
    %c0_i32_1 = arith.constant 0 : i32
    return %c0_i32, %c0_i32_0 : i32, i32
  }
  func.func @transform_9(%arg0: i32) -> (i32, i32) {
    %c0_i32 = arith.constant 0 : i32
    %c0_i32_0 = arith.constant 0 : i32
    %c0_i32_1 = arith.constant 0 : i32
    return %c0_i32, %c0_i32_0 : i32, i32
  }
}

</mosaic_0001>

<llo_original>
// kernel: _fused_forward.1
$region0: #{_fused_forward.1}
  #allocation0 [shape = 'u32[]', space=smem, size = 0x4, offset = 0x4, fixed_abs, tag = 'smem constant byte address 0x4 - core index']
  #allocation1 [shape = 'u32[144,128]{1,0:T(1,128)}', space=vmem, size = 0x12000, scoped, tag = 'internal scratch']
  %s0 = inlined_call_operand.vmem [shape: bf16[48,74], index: 0, kind: input, shape index: {}]
  %s1 = inlined_call_operand.vmem [shape: bf16[74,32], index: 1, kind: input, shape index: {}]
  %s2 = inlined_call_operand.vmem [shape: bf16[2,32,256], index: 2, kind: input, shape index: {}]
  %s3 = inlined_call_operand.vmem [shape: bf16[2,128,32], index: 3, kind: input, shape index: {}]
  %s4 = inlined_call_operand.vmem [shape: f32[28,128], index: 4, kind: input, shape index: {}]
  %s5 = inlined_call_operand.vmem [shape: f32[160,5], index: 5, kind: input, shape index: {}]
  %s6 = inlined_call_operand.vmem [shape: f32[2,8], index: 6, kind: input, shape index: {}]
  %s7 = inlined_call_operand.vmem [shape: s32[2,1], index: 7, kind: input, shape index: {}]
  %s8 = inlined_call_operand.hbm [shape: f32[2,5], index: 8, kind: output, shape index: {0}]
  %s9 = inlined_call_operand.hbm [shape: f32[1,1], index: 9, kind: output, shape index: {1}]
  %10 = xla_tuple %s8, %s9
  %s11 = sld [smem:[#allocation0]]
  $region50: #{_fused_forward.1} parent=0
    _
  %s13 = ssub.s32 1, %s11
  %s14 = scalar_select 0, %s13, %s11
  $region1: #{_fused_forward.1} parent=0
    #allocation2 [shape = 'u8[1024]{0}', space=vmem, size = 0x400, scoped, tag = 'output window, operand 0, single buffered']
    #allocation3 [shape = 's32[1]{0}', space=sflag, size = 0x4, scoped, tag = 'scoped memory for _fused_forward.1']
    #allocation4 [shape = 'u8[512]{0}', space=vmem, size = 0x400, scoped, tag = 'output window, operand 1, single buffered']
    #allocation5 [shape = 's32[1]{0}', space=sflag, size = 0x4, scoped, tag = 'scoped memory for _fused_forward.1']
    %15 = vsyncpa [#allocation3], 0
    %16 = vsyncpa [#allocation5], 0
    // Predicated region
    $region2: #{_fused_forward.1} parent=1 // pred_check
      _
    $region3: #{_fused_forward.1} parent=1 // pred_check_branch
      %18 = sbr.rel (0) target = $region5
    $region4: #{_fused_forward.1} parent=1 // pred_region
      _
    $region5: #{_fused_forward.1} parent=1 // pred_fallthru
      _
    // Predicated region
    $region6: #{_fused_forward.1} parent=1 // pred_check
      _
    $region7: #{_fused_forward.1} parent=1 // pred_check_branch
      %20 = sbr.rel (0) target = $region9
    $region8: #{_fused_forward.1} parent=1 // pred_region
      _
    $region9: #{_fused_forward.1} parent=1 // pred_fallthru
      _
    // Predicated region
    $region10: #{_fused_forward.1} parent=1 // pred_check
      _
    $region11: #{_fused_forward.1} parent=1 // pred_check_branch
      %22 = sbr.rel (0) target = $region13
    $region12: #{_fused_forward.1} parent=1 // pred_region
      _
    $region13: #{_fused_forward.1} parent=1 // pred_fallthru
      _
    // Predicated region
    $region14: #{_fused_forward.1} parent=1 // pred_check
      _
    $region15: #{_fused_forward.1} parent=1 // pred_check_branch
      %24 = sbr.rel (0) target = $region17
    $region16: #{_fused_forward.1} parent=1 // pred_region
      _
    $region17: #{_fused_forward.1} parent=1 // pred_fallthru
      _
    // Predicated region
    $region18: #{_fused_forward.1} parent=1 // pred_check
      _
    $region19: #{_fused_forward.1} parent=1 // pred_check_branch
      %26 = sbr.rel (0) target = $region21
    $region20: #{_fused_forward.1} parent=1 // pred_region
      _
    $region21: #{_fused_forward.1} parent=1 // pred_fallthru
      _
    // Predicated region
    $region22: #{_fused_forward.1} parent=1 // pred_check
      _
    $region23: #{_fused_forward.1} parent=1 // pred_check_branch
      %28 = sbr.rel (0) target = $region25
    $region24: #{_fused_forward.1} parent=1 // pred_region
      _
    $region25: #{_fused_forward.1} parent=1 // pred_fallthru
      _
    // Predicated region
    $region26: #{_fused_forward.1} parent=1 // pred_check
      _
    $region27: #{_fused_forward.1} parent=1 // pred_check_branch
      %30 = sbr.rel (0) target = $region29
    $region28: #{_fused_forward.1} parent=1 // pred_region
      _
    $region29: #{_fused_forward.1} parent=1 // pred_fallthru
      _
    // Predicated region
    $region30: #{_fused_forward.1} parent=1 // pred_check
      _
    $region31: #{_fused_forward.1} parent=1 // pred_check_branch
      %32 = sbr.rel (0) target = $region33
    $region32: #{_fused_forward.1} parent=1 // pred_region
      _
    $region33: #{_fused_forward.1} parent=1 // pred_fallthru
      _
    %v34 = vld [vmem:[%s0] sm:$0xf]
    %v35 = vld [vmem:[%s0 + $0x4] sm:$0xf]
    %v36 = vld [vmem:[%s0 + $0x8] sm:$0xf]
    %v37 = vld [vmem:[%s0 + $0xc] sm:$0xf]
    %v38 = vld [vmem:[%s0 + $0x10] sm:$0xf]
    %v39 = vld [vmem:[%s0 + $0x14] sm:$0xf]
    %v40 = vld [vmem:[%s1] sm:$0xf]
    %v41 = vld [vmem:[%s1 + $0x4] sm:$0xf]
    %v42 = vld [vmem:[%s1 + $0x8] sm:$0xf]
    %v43 = vld [vmem:[%s1 + $0xc] sm:$0xf]
    %v44 = vld [vmem:[%s1 + $0x10] sm:$0xf]
    %v45 = vld [vmem:[%s1 + $0x14] sm:$0xf]
    %v46 = vld [vmem:[%s1 + $0x18] sm:$0xf]
    %v47 = vld [vmem:[%s1 + $0x1c] sm:$0xf]
    %v48 = vld [vmem:[%s1 + $0x20] sm:$0xf]
    %v49 = vld [vmem:[%s1 + $0x24] sm:$0x1]
    %v56 = vunpack.c.l.b16 %v34
    %v57 = vunpack.c.l.b16 %v35
    %v58 = vunpack.c.l.b16 %v36
    %v59 = vunpack.c.l.b16 %v37
    %v60 = vunpack.c.l.b16 %v38
    %v61 = vunpack.c.l.b16 %v39
    %v62 = vpack.c.b16 %v57, %v56
    %v63 = vpack.c.b16 %v59, %v58
    %v64 = vpack.c.b16 %v61, %v60
    %v75 = vunpack.c.l.b16 %v40
    %v76 = vunpack.c.l.b16 %v41
    %v77 = vunpack.c.l.b16 %v42
    %v78 = vunpack.c.l.b16 %v43
    %v79 = vunpack.c.l.b16 %v44
    %v80 = vunpack.c.l.b16 %v45
    %v81 = vunpack.c.l.b16 %v46
    %v82 = vunpack.c.l.b16 %v47
    %v83 = vunpack.c.l.b16 %v48
    %v84 = vunpack.c.l.b16 %v49
    %v85 = vpack.c.b16 %v76, %v75
    %v86 = vpack.c.b16 %v78, %v77
    %v87 = vpack.c.b16 %v80, %v79
    %v88 = vpack.c.b16 %v82, %v81
    %v89 = vpack.c.b16 %v84, %v83
    %vm94 = vcmask 605184
    %v96 = vsel %vm94, %v62, 0
    %v99 = vsel %vm94, %v63, 0
    %v102 = vsel %vm94, %v64, 0
    %vm104 = vcmask 1044480
    %v106 = vsel %vm104, %v89, 0
    %108 = vmatprep.subr.bf16.mxu0 0
    %109 = vmatpush1.bf16.msra.mxu0 %v85
    %110 = vmatprep.subr.bf16.mxu0 0
    %111 = vmatpush1.bf16.msra.mxu0 %v86
    %112 = vmatprep.subr.bf16.mxu0 0
    %113 = vmatpush1.bf16.msra.mxu0 %v87
    %114 = vmatprep.subr.bf16.mxu0 0
    %115 = vmatpush1.bf16.msra.mxu0 %v88
    %116 = vmatprep.subr.bf16.mxu0 0
    %117 = vmatpush1.bf16.msra.mxu0 %v106
    %118 = vmatprep.subr.bf16.mxu0 0
    %119 = vmatpush1.bf16.msra.mxu0 0
    %120 = vmatprep.subr.bf16.mxu0 0
    %121 = vmatpush1.bf16.msra.mxu0 0
    %122 = vmatprep.subr.bf16.mxu0 0
    %123 = vmatpush1.bf16.msra.mxu0 0
    %124 = vmatprep.subr.bf16.mxu0 0
    %125 = vmatpush1.bf16.msra.mxu0 0
    %126 = vmatprep.subr.bf16.mxu0 0
    %127 = vmatpush1.bf16.msra.mxu0 0
    %128 = vmatprep.subr.bf16.mxu0 0
    %129 = vmatpush1.bf16.msra.mxu0 0
    %130 = vmatprep.subr.bf16.mxu0 0
    %131 = vmatpush1.bf16.msra.mxu0 0
    %132 = vmatprep.subr.bf16.mxu0 0
    %133 = vmatpush1.bf16.msra.mxu0 0
    %134 = vmatprep.subr.bf16.mxu0 0
    %135 = vmatpush1.bf16.msra.mxu0 0
    %136 = vmatprep.subr.bf16.mxu0 0
    %137 = vmatpush1.bf16.msra.mxu0 0
    %138 = vmatprep.subr.bf16.mxu0 0
    %139 = vmatpush1.bf16.msra.mxu0 0
    %140 = vmatprep.mubr.bf16.mxu0 0
    %141 = vmatmul.mubr.bf16.gmra.mrb[0].mxu0 %v96
    %v142 = vpop.f32.mrb[0].mxu0
    %v143 = vadd.f32 0.0, %v142
    %v144 = vpop.f32.mrb[0].mxu0
    %v145 = vpop.f32.mrb[0].mxu0
    %v146 = vadd.f32 0.0, %v145
    %v147 = vpop.f32.mrb[0].mxu0
    %148 = vmatprep.mubr.bf16.mxu0 0
    %149 = vmatmul.mubr.bf16.gmra.mrb[0].mxu0 %v99
    %v150 = vpop.f32.mrb[0].mxu0
    %v151 = vadd.f32 0.0, %v150
    %v152 = vpop.f32.mrb[0].mxu0
    %v153 = vpop.f32.mrb[0].mxu0
    %v154 = vadd.f32 0.0, %v153
    %v155 = vpop.f32.mrb[0].mxu0
    %156 = vmatprep.mubr.bf16.mxu0 0
    %157 = vmatmul.mubr.bf16.gmra.mrb[0].mxu0 %v102
    %v158 = vpop.f32.mrb[0].mxu0
    %v159 = vadd.f32 0.0, %v158
    %v160 = vpop.f32.mrb[0].mxu0
    %v161 = vpop.f32.mrb[0].mxu0
    %v162 = vadd.f32 0.0, %v161
    %v163 = vpop.f32.mrb[0].mxu0
    %164 = vdwg.mxu0
    %v165 = vlaneseq
    %v166 = vand.u32 %v165, 127
    %vm167 = vcmp.ge.s32.totalorder %v166, 17
    %v168 = vsel %vm167, -1e+30, 0.0
    %v169 = vld [vmem:[%s2] sm:$0xff]
    %v170 = vld [vmem:[%s2 + $0x8] sm:$0xff]
    %v171 = vld [vmem:[%s2 + $0x10] sm:$0xff]
    %v172 = vld [vmem:[%s2 + $0x18] sm:$0xff]
    %v173 = vld [vmem:[%s4 + $0x8] sm:$0xff]
    %vm174 = vcmask 261120
    %v175 = vsel %vm174, %v143, 0.0
    %176 = vadd.xlane.f32.xlu0 %v175
    %v177 = vpop.xlane.xlu0 %176
    %v178 = vsel %vm174, %v146, 0.0
    %179 = vadd.xlane.f32.xlu0 %v178
    %v180 = vpop.xlane.xlu0 %179
    %v181 = vsel %vm174, %v151, 0.0
    %182 = vadd.xlane.f32.xlu0 %v181
    %v183 = vpop.xlane.xlu0 %182
    %v184 = vsel %vm174, %v154, 0.0
    %185 = vadd.xlane.f32.xlu0 %v184
    %v186 = vpop.xlane.xlu0 %185
    %v187 = vsel %vm174, %v159, 0.0
    %188 = vadd.xlane.f32.xlu0 %v187
    %v189 = vpop.xlane.xlu0 %188
    %v190 = vsel %vm174, %v162, 0.0
    %191 = vadd.xlane.f32.xlu0 %v190
    %v192 = vpop.xlane.xlu0 %191
    %v193 = vrcp.pop 32.0
    %v194 = vmul.f32 %v177, %v193
    %v195 = vmul.f32 %v180, %v193
    %v196 = vmul.f32 %v183, %v193
    %v197 = vmul.f32 %v186, %v193
    %v198 = vmul.f32 %v189, %v193
    %v199 = vmul.f32 %v192, %v193
    %v200 = vsub.f32 %v143, %v194
    %v201 = vsub.f32 %v146, %v195
    %v202 = vsub.f32 %v151, %v196
    %v203 = vsub.f32 %v154, %v197
    %v204 = vsub.f32 %v159, %v198
    %v205 = vsub.f32 %v162, %v199
    %v206 = vmul.f32 %v200, %v200
    %v207 = vmul.f32 %v201, %v201
    %v208 = vmul.f32 %v202, %v202
    %v209 = vmul.f32 %v203, %v203
    %v210 = vmul.f32 %v204, %v204
    %v211 = vmul.f32 %v205, %v205
    %v212 = vsel %vm174, %v206, 0.0
    %213 = vadd.xlane.f32.xlu0 %v212
    %v214 = vpop.xlane.xlu0 %213
    %v215 = vsel %vm174, %v207, 0.0
    %216 = vadd.xlane.f32.xlu0 %v215
    %v217 = vpop.xlane.xlu0 %216
    %v218 = vsel %vm174, %v208, 0.0
    %219 = vadd.xlane.f32.xlu0 %v218
    %v220 = vpop.xlane.xlu0 %219
    %v221 = vsel %vm174, %v209, 0.0
    %222 = vadd.xlane.f32.xlu0 %v221
    %v223 = vpop.xlane.xlu0 %222
    %v224 = vsel %vm174, %v210, 0.0
    %225 = vadd.xlane.f32.xlu0 %v224
    %v226 = vpop.xlane.xlu0 %225
    %v227 = vsel %vm174, %v211, 0.0
    %228 = vadd.xlane.f32.xlu0 %v227
    %v229 = vpop.xlane.xlu0 %228
    %v230 = vmul.f32 %v214, %v193
    %v231 = vmul.f32 %v217, %v193
    %v232 = vmul.f32 %v220, %v193
    %v233 = vmul.f32 %v223, %v193
    %v234 = vmul.f32 %v226, %v193
    %v235 = vmul.f32 %v229, %v193
    %v236 = vadd.f32 %v230, 1e-12
    %v237 = vadd.f32 %v231, 1e-12
    %v238 = vadd.f32 %v232, 1e-12
    %v239 = vadd.f32 %v233, 1e-12
    %v240 = vadd.f32 %v234, 1e-12
    %v241 = vadd.f32 %v235, 1e-12
    %v242 = vrsqrt.pop %v236
    %v243 = vrsqrt.pop %v237
    %v244 = vrsqrt.pop %v238
    %v245 = vrsqrt.pop %v239
    %v246 = vrsqrt.pop %v240
    %v247 = vrsqrt.pop %v241
    %v248 = vmul.f32 %v200, %v242
    %v249 = vmul.f32 %v201, %v243
    %v250 = vmul.f32 %v202, %v244
    %v251 = vmul.f32 %v203, %v245
    %v252 = vmul.f32 %v204, %v246
    %v253 = vmul.f32 %v205, %v247
    %v254 = vlaneseq
    %v255 = vshrl.u32 %v254, 7
    %v256 = vsub.s32 0, %v255
    %v257 = vrot.slane %v173, %v256
    %v258 = vmul.f32 %v248, %v257
    %v259 = vmul.f32 %v249, %v257
    %v260 = vmul.f32 %v250, %v257
    %v261 = vmul.f32 %v251, %v257
    %v262 = vmul.f32 %v252, %v257
    %v263 = vmul.f32 %v253, %v257
    %v264 = vlaneseq
    %v265 = vshrl.u32 %v264, 7
    %v266 = vsub.s32 1, %v265
    %v267 = vrot.slane %v173, %v266
    %v268 = vadd.f32 %v258, %v267
    %v269 = vadd.f32 %v259, %v267
    %v270 = vadd.f32 %v260, %v267
    %v271 = vadd.f32 %v261, %v267
    %v272 = vadd.f32 %v262, %v267
    %v273 = vadd.f32 %v263, %v267
    %v274 = vpack.c.bf16 %v269, %v268
    %v275 = vpack.c.bf16 %v271, %v270
    %v276 = vpack.c.bf16 %v273, %v272
    %v277 = vlaneseq
    %v278 = vshrl.u32 %v277, 7
    %v279 = vsub.s32 7, %v278
    %v280 = vrot.slane %v173, %v279
    %v285 = vunpack.c.l.b16 %v169
    %v286 = vunpack.c.l.b16 %v170
    %v287 = vunpack.c.l.b16 %v171
    %v288 = vunpack.c.l.b16 %v172
    %v289 = vpack.c.b16 %v286, %v285
    %v290 = vpack.c.b16 %v288, %v287
    %v294 = vsel %vm174, %v274, 0
    %v297 = vsel %vm174, %v275, 0
    %v300 = vsel %vm174, %v276, 0
    %302 = vmatprep.subr.bf16.mxu0 0
    %303 = vmatpush1.bf16.msra.mxu0 %v289
    %304 = vmatprep.subr.bf16.mxu0 0
    %305 = vmatpush1.bf16.msra.mxu0 %v290
    %306 = vmatprep.subr.bf16.mxu0 0
    %307 = vmatpush1.bf16.msra.mxu0 0
    %308 = vmatprep.subr.bf16.mxu0 0
    %309 = vmatpush1.bf16.msra.mxu0 0
    %310 = vmatprep.subr.bf16.mxu0 0
    %311 = vmatpush1.bf16.msra.mxu0 0
    %312 = vmatprep.subr.bf16.mxu0 0
    %313 = vmatpush1.bf16.msra.mxu0 0
    %314 = vmatprep.subr.bf16.mxu0 0
    %315 = vmatpush1.bf16.msra.mxu0 0
    %316 = vmatprep.subr.bf16.mxu0 0
    %317 = vmatpush1.bf16.msra.mxu0 0
    %318 = vmatprep.subr.bf16.mxu0 0
    %319 = vmatpush1.bf16.msra.mxu0 0
    %320 = vmatprep.subr.bf16.mxu0 0
    %321 = vmatpush1.bf16.msra.mxu0 0
    %322 = vmatprep.subr.bf16.mxu0 0
    %323 = vmatpush1.bf16.msra.mxu0 0
    %324 = vmatprep.subr.bf16.mxu0 0
    %325 = vmatpush1.bf16.msra.mxu0 0
    %326 = vmatprep.subr.bf16.mxu0 0
    %327 = vmatpush1.bf16.msra.mxu0 0
    %328 = vmatprep.subr.bf16.mxu0 0
    %329 = vmatpush1.bf16.msra.mxu0 0
    %330 = vmatprep.subr.bf16.mxu0 0
    %331 = vmatpush1.bf16.msra.mxu0 0
    %332 = vmatprep.subr.bf16.mxu0 0
    %333 = vmatpush1.bf16.msra.mxu0 0
    %334 = vmatprep.mubr.bf16.mxu0 0
    %335 = vmatmul.mubr.bf16.gmra.mrb[0].mxu0 %v294
    %v336 = vpop.f32.mrb[0].mxu0
    %v337 = vadd.f32 %v280, %v336
    %v338 = vpop.f32.mrb[0].mxu0
    %v339 = vpop.f32.mrb[0].mxu0
    %v340 = vadd.f32 %v280, %v339
    %v341 = vpop.f32.mrb[0].mxu0
    %342 = vmatprep.mubr.bf16.mxu0 0
    %343 = vmatmul.mubr.bf16.gmra.mrb[0].mxu0 %v297
    %v344 = vpop.f32.mrb[0].mxu0
    %v345 = vadd.f32 %v280, %v344
    %v346 = vpop.f32.mrb[0].mxu0
    %v347 = vpop.f32.mrb[0].mxu0
    %v348 = vadd.f32 %v280, %v347
    %v349 = vpop.f32.mrb[0].mxu0
    %350 = vmatprep.mubr.bf16.mxu0 0
    %351 = vmatmul.mubr.bf16.gmra.mrb[0].mxu0 %v300
    %v352 = vpop.f32.mrb[0].mxu0
    %v353 = vadd.f32 %v280, %v352
    %v354 = vpop.f32.mrb[0].mxu0
    %v355 = vpop.f32.mrb[0].mxu0
    %v356 = vadd.f32 %v280, %v355
    %v357 = vpop.f32.mrb[0].mxu0
    %358 = vdwg.mxu0
    %v359 = vpack.c.bf16 %v340, %v337
    %v360 = vpack.c.bf16 %v345, %v345
    %363 = vrot.lane.b32.xlu0 %v359, 96
    %v364 = vpop.permute.xlu0 %363
    %365 = vrot.lane.b32.xlu0 %v360, 96
    %v366 = vpop.permute.xlu0 %365
    %vm367 = vcmask 130048
    %v369 = vsel %vm367, %v359, 0
    %v372 = vsel %vm367, %v360, 0
    %v375 = vsel %vm367, %v364, 0
    %v378 = vsel %vm367, %v366, 0
    %380 = vmatprep.subr.bf16.mxu0 0
    %381 = vmatpush1.bf16.xpose.msra.mxu0 %v375
    %382 = vmatprep.subr.bf16.mxu0 0
    %383 = vmatpush1.bf16.xpose.msra.mxu0 %v378
    %384 = vmatprep.subr.bf16.mxu0 0
    %385 = vmatpush1.bf16.xpose.msra.mxu0 0
    %386 = vmatprep.subr.bf16.mxu0 0
    %387 = vmatpush1.bf16.xpose.msra.mxu0 0
    %388 = vmatprep.subr.bf16.mxu0 0
    %389 = vmatpush1.bf16.xpose.msra.mxu0 0
    %390 = vmatprep.subr.bf16.mxu0 0
    %391 = vmatpush1.bf16.xpose.msra.mxu0 0
    %392 = vmatprep.subr.bf16.mxu0 0
    %393 = vmatpush1.bf16.xpose.msra.mxu0 0
    %394 = vmatprep.subr.bf16.mxu0 0
    %395 = vmatpush1.bf16.xpose.msra.mxu0 0
    %396 = vmatprep.subr.bf16.mxu0 0
    %397 = vmatpush1.bf16.xpose.msra.mxu0 0
    %398 = vmatprep.subr.bf16.mxu0 0
    %399 = vmatpush1.bf16.xpose.msra.mxu0 0
    %400 = vmatprep.subr.bf16.mxu0 0
    %401 = vmatpush1.bf16.xpose.msra.mxu0 0
    %402 = vmatprep.subr.bf16.mxu0 0
    %403 = vmatpush1.bf16.xpose.msra.mxu0 0
    %404 = vmatprep.subr.bf16.mxu0 0
    %405 = vmatpush1.bf16.xpose.msra.mxu0 0
    %406 = vmatprep.subr.bf16.mxu0 0
    %407 = vmatpush1.bf16.xpose.msra.mxu0 0
    %408 = vmatprep.subr.bf16.mxu0 0
    %409 = vmatpush1.bf16.xpose.msra.mxu0 0
    %410 = vmatprep.subr.bf16.mxu0 0
    %411 = vmatpush1.bf16.xpose.msra.mxu0 0
    %412 = vmatprep.mubr.bf16.mxu0 0
    %413 = vmatmul.mubr.bf16.gmra.mrb[0].mxu0 %v369
    %v414 = vpop.f32.mrb[0].mxu0
    %v415 = vadd.f32 %v168, %v414
    %v416 = vpop.f32.mrb[0].mxu0
    %v417 = vpop.f32.mrb[0].mxu0
    %v418 = vadd.f32 %v168, %v417
    %v419 = vpop.f32.mrb[0].mxu0
    %420 = vmatprep.mubr.bf16.mxu0 0
    %421 = vmatmul.mubr.bf16.gmra.mrb[0].mxu0 %v372
    %v422 = vpop.f32.mrb[0].mxu0
    %v423 = vadd.f32 %v168, %v422
    %v424 = vpop.f32.mrb[0].mxu0
    %v425 = vpop.f32.mrb[0].mxu0
    %v426 = vpop.f32.mrb[0].mxu0
    %427 = vdwg.mxu0
    %vm428 = vcmask 195584
    %v429 = vsel %vm428, %v415, -inf
    %430 = vmax.xlane.f32.xlu0 %v429
    %v431 = vpop.xlane.xlu0 %430
    %v432 = vsel %vm428, %v418, -inf
    %433 = vmax.xlane.f32.xlu0 %v432
    %v434 = vpop.xlane.xlu0 %433
    %v435 = vsel %vm428, %v423, -inf
    %436 = vmax.xlane.f32.xlu0 %v435
    %v437 = vpop.xlane.xlu0 %436
    %v438 = vsub.f32 %v415, %v431
    %v439 = vsub.f32 %v418, %v434
    %v440 = vsub.f32 %v423, %v437
    %v441 = vmul.f32 %v438, 1.442695
    %v442 = vpow.pop %v441
    %v443 = vmul.f32 %v439, 1.442695
    %v444 = vpow.pop %v443
    %v445 = vmul.f32 %v440, 1.442695
    %v446 = vpow.pop %v445
    %v447 = vsel %vm428, %v442, 0.0
    %448 = vadd.xlane.f32.xlu0 %v447
    %v449 = vpop.xlane.xlu0 %448
    %v450 = vsel %vm428, %v444, 0.0
    %451 = vadd.xlane.f32.xlu0 %v450
    %v452 = vpop.xlane.xlu0 %451
    %v453 = vsel %vm428, %v446, 0.0
    %454 = vadd.xlane.f32.xlu0 %v453
    %v455 = vpop.xlane.xlu0 %454
    %v456 = vrcp.pop %v449
    %v457 = vrcp.pop %v452
    %v458 = vrcp.pop %v455
    %v459 = vmul.f32 %v442, %v456
    %v460 = vmul.f32 %v444, %v457
    %v461 = vmul.f32 %v446, %v458
    %v462 = vpack.c.bf16 %v460, %v459
    %v463 = vpack.c.bf16 %v461, %v461
    %464 = vrot.lane.b32.xlu0 %v359, 64
    %v465 = vpop.permute.xlu0 %464
    %466 = vrot.lane.b32.xlu0 %v360, 64
    %v467 = vpop.permute.xlu0 %466
    %v470 = vsel %vm428, %v462, 0
    %v473 = vsel %vm428, %v463, 0
    %vm475 = vcmask 1043456
    %v477 = vsel %vm475, %v467, 0
    %479 = vmatprep.subr.bf16.mxu0 0
    %480 = vmatpush1.bf16.msra.mxu0 %v465
    %481 = vmatprep.subr.bf16.mxu0 0
    %482 = vmatpush1.bf16.msra.mxu0 %v477
    %483 = vmatprep.subr.bf16.mxu0 0
    %484 = vmatpush1.bf16.msra.mxu0 0
    %485 = vmatprep.subr.bf16.mxu0 0
    %486 = vmatpush1.bf16.msra.mxu0 0
    %487 = vmatprep.subr.bf16.mxu0 0
    %488 = vmatpush1.bf16.msra.mxu0 0
    %489 = vmatprep.subr.bf16.mxu0 0
    %490 = vmatpush1.bf16.msra.mxu0 0
    %491 = vmatprep.subr.bf16.mxu0 0
    %492 = vmatpush1.bf16.msra.mxu0 0
    %493 = vmatprep.subr.bf16.mxu0 0
    %494 = vmatpush1.bf16.msra.mxu0 0
    %495 = vmatprep.subr.bf16.mxu0 0
    %496 = vmatpush1.bf16.msra.mxu0 0
    %497 = vmatprep.subr.bf16.mxu0 0
    %498 = vmatpush1.bf16.msra.mxu0 0
    %499 = vmatprep.subr.bf16.mxu0 0
    %500 = vmatpush1.bf16.msra.mxu0 0
    %501 = vmatprep.subr.bf16.mxu0 0
    %502 = vmatpush1.bf16.msra.mxu0 0
    %503 = vmatprep.subr.bf16.mxu0 0
    %504 = vmatpush1.bf16.msra.mxu0 0
    %505 = vmatprep.subr.bf16.mxu0 0
    %506 = vmatpush1.bf16.msra.mxu0 0
    %507 = vmatprep.subr.bf16.mxu0 0
    %508 = vmatpush1.bf16.msra.mxu0 0
    %509 = vmatprep.subr.bf16.mxu0 0
    %510 = vmatpush1.bf16.msra.mxu0 0
    %511 = vmatprep.mubr.bf16.mxu0 0
    %512 = vmatmul.mubr.bf16.gmra.mrb[0].mxu0 %v470
    %v513 = vpop.f32.mrb[0].mxu0
    %v514 = vadd.f32 0.0, %v513
    %v515 = vpop.f32.mrb[0].mxu0
    %v516 = vpop.f32.mrb[0].mxu0
    %v517 = vadd.f32 0.0, %v516
    %v518 = vpop.f32.mrb[0].mxu0
    %519 = vmatprep.mubr.bf16.mxu0 0
    %520 = vmatmul.mubr.bf16.gmra.mrb[0].mxu0 %v473
    %v521 = vpop.f32.mrb[0].mxu0
    %v522 = vadd.f32 0.0, %v521
    %v523 = vpop.f32.mrb[0].mxu0
    %v524 = vpop.f32.mrb[0].mxu0
    %v525 = vpop.f32.mrb[0].mxu0
    %526 = vdwg.mxu0
    %527 = vrot.lane.b32.xlu0 %v359, 112
    %v528 = vpop.permute.xlu0 %527
    %529 = vrot.lane.b32.xlu0 %v360, 112
    %v530 = vpop.permute.xlu0 %529
    %531 = vrot.lane.b32.xlu0 %v359, 80
    %v532 = vpop.permute.xlu0 %531
    %533 = vrot.lane.b32.xlu0 %v360, 80
    %v534 = vpop.permute.xlu0 %533
    %v536 = vsel %vm367, %v528, 0
    %v539 = vsel %vm367, %v530, 0
    %v542 = vsel %vm367, %v532, 0
    %v545 = vsel %vm367, %v534, 0
    %547 = vmatprep.subr.bf16.mxu0 0
    %548 = vmatpush1.bf16.xpose.msra.mxu0 %v542
    %549 = vmatprep.subr.bf16.mxu0 0
    %550 = vmatpush1.bf16.xpose.msra.mxu0 %v545
    %551 = vmatprep.subr.bf16.mxu0 0
    %552 = vmatpush1.bf16.xpose.msra.mxu0 0
    %553 = vmatprep.subr.bf16.mxu0 0
    %554 = vmatpush1.bf16.xpose.msra.mxu0 0
    %555 = vmatprep.subr.bf16.mxu0 0
    %556 = vmatpush1.bf16.xpose.msra.mxu0 0
    %557 = vmatprep.subr.bf16.mxu0 0
    %558 = vmatpush1.bf16.xpose.msra.mxu0 0
    %559 = vmatprep.subr.bf16.mxu0 0
    %560 = vmatpush1.bf16.xpose.msra.mxu0 0
    %561 = vmatprep.subr.bf16.mxu0 0
    %562 = vmatpush1.bf16.xpose.msra.mxu0 0
    %563 = vmatprep.subr.bf16.mxu0 0
    %564 = vmatpush1.bf16.xpose.msra.mxu0 0
    %565 = vmatprep.subr.bf16.mxu0 0
    %566 = vmatpush1.bf16.xpose.msra.mxu0 0
    %567 = vmatprep.subr.bf16.mxu0 0
    %568 = vmatpush1.bf16.xpose.msra.mxu0 0
    %569 = vmatprep.subr.bf16.mxu0 0
    %570 = vmatpush1.bf16.xpose.msra.mxu0 0
    %571 = vmatprep.subr.bf16.mxu0 0
    %572 = vmatpush1.bf16.xpose.msra.mxu0 0
    %573 = vmatprep.subr.bf16.mxu0 0
    %574 = vmatpush1.bf16.xpose.msra.mxu0 0
    %575 = vmatprep.subr.bf16.mxu0 0
    %576 = vmatpush1.bf16.xpose.msra.mxu0 0
    %577 = vmatprep.subr.bf16.mxu0 0
    %578 = vmatpush1.bf16.xpose.msra.mxu0 0
    %579 = vmatprep.mubr.bf16.mxu0 0
    %580 = vmatmul.mubr.bf16.gmra.mrb[0].mxu0 %v536
    %v581 = vpop.f32.mrb[0].mxu0
    %v582 = vadd.f32 %v168, %v581
    %v583 = vpop.f32.mrb[0].mxu0
    %v584 = vpop.f32.mrb[0].mxu0
    %v585 = vadd.f32 %v168, %v584
    %v586 = vpop.f32.mrb[0].mxu0
    %587 = vmatprep.mubr.bf16.mxu0 0
    %588 = vmatmul.mubr.bf16.gmra.mrb[0].mxu0 %v539
    %v589 = vpop.f32.mrb[0].mxu0
    %v590 = vadd.f32 %v168, %v589
    %v591 = vpop.f32.mrb[0].mxu0
    %v592 = vpop.f32.mrb[0].mxu0
    %v593 = vpop.f32.mrb[0].mxu0
    %594 = vdwg.mxu0
    %v595 = vsel %vm428, %v582, -inf
    %596 = vmax.xlane.f32.xlu0 %v595
    %v597 = vpop.xlane.xlu0 %596
    %v598 = vsel %vm428, %v585, -inf
    %599 = vmax.xlane.f32.xlu0 %v598
    %v600 = vpop.xlane.xlu0 %599
    %v601 = vsel %vm428, %v590, -inf
    %602 = vmax.xlane.f32.xlu0 %v601
    %v603 = vpop.xlane.xlu0 %602
    %v604 = vsub.f32 %v582, %v597
    %v605 = vsub.f32 %v585, %v600
    %v606 = vsub.f32 %v590, %v603
    %v607 = vmul.f32 %v604, 1.442695
    %v608 = vpow.pop %v607
    %v609 = vmul.f32 %v605, 1.442695
    %v610 = vpow.pop %v609
    %v611 = vmul.f32 %v606, 1.442695
    %v612 = vpow.pop %v611
    %v613 = vsel %vm428, %v608, 0.0
    %614 = vadd.xlane.f32.xlu0 %v613
    %v615 = vpop.xlane.xlu0 %614
    %v616 = vsel %vm428, %v610, 0.0
    %617 = vadd.xlane.f32.xlu0 %v616
    %v618 = vpop.xlane.xlu0 %617
    %v619 = vsel %vm428, %v612, 0.0
    %620 = vadd.xlane.f32.xlu0 %v619
    %v621 = vpop.xlane.xlu0 %620
    %v622 = vrcp.pop %v615
    %v623 = vrcp.pop %v618
    %v624 = vrcp.pop %v621
    %v625 = vmul.f32 %v608, %v622
    %v626 = vmul.f32 %v610, %v623
    %v627 = vmul.f32 %v612, %v624
    %v628 = vpack.c.bf16 %v626, %v625
    %v629 = vpack.c.bf16 %v627, %v627
    %630 = vrot.lane.b32.xlu0 %v359, 48
    %v631 = vpop.permute.xlu0 %630
    %632 = vrot.lane.b32.xlu0 %v360, 48
    %v633 = vpop.permute.xlu0 %632
    %v636 = vsel %vm428, %v628, 0
    %v639 = vsel %vm428, %v629, 0
    %v642 = vsel %vm475, %v633, 0
    %644 = vmatprep.subr.bf16.mxu0 0
    %645 = vmatpush1.bf16.msra.mxu0 %v631
    %646 = vmatprep.subr.bf16.mxu0 0
    %647 = vmatpush1.bf16.msra.mxu0 %v642
    %648 = vmatprep.subr.bf16.mxu0 0
    %649 = vmatpush1.bf16.msra.mxu0 0
    %650 = vmatprep.subr.bf16.mxu0 0
    %651 = vmatpush1.bf16.msra.mxu0 0
    %652 = vmatprep.subr.bf16.mxu0 0
    %653 = vmatpush1.bf16.msra.mxu0 0
    %654 = vmatprep.subr.bf16.mxu0 0
    %655 = vmatpush1.bf16.msra.mxu0 0
    %656 = vmatprep.subr.bf16.mxu0 0
    %657 = vmatpush1.bf16.msra.mxu0 0
    %658 = vmatprep.subr.bf16.mxu0 0
    %659 = vmatpush1.bf16.msra.mxu0 0
    %660 = vmatprep.subr.bf16.mxu0 0
    %661 = vmatpush1.bf16.msra.mxu0 0
    %662 = vmatprep.subr.bf16.mxu0 0
    %663 = vmatpush1.bf16.msra.mxu0 0
    %664 = vmatprep.subr.bf16.mxu0 0
    %665 = vmatpush1.bf16.msra.mxu0 0
    %666 = vmatprep.subr.bf16.mxu0 0
    %667 = vmatpush1.bf16.msra.mxu0 0
    %668 = vmatprep.subr.bf16.mxu0 0
    %669 = vmatpush1.bf16.msra.mxu0 0
    %670 = vmatprep.subr.bf16.mxu0 0
    %671 = vmatpush1.bf16.msra.mxu0 0
    %672 = vmatprep.subr.bf16.mxu0 0
    %673 = vmatpush1.bf16.msra.mxu0 0
    %674 = vmatprep.subr.bf16.mxu0 0
    %675 = vmatpush1.bf16.msra.mxu0 0
    %676 = vmatprep.mubr.bf16.mxu0 0
    %677 = vmatmul.mubr.bf16.gmra.mrb[0].mxu0 %v636
    %v678 = vpop.f32.mrb[0].mxu0
    %v679 = vadd.f32 0.0, %v678
    %v680 = vpop.f32.mrb[0].mxu0
    %v681 = vpop.f32.mrb[0].mxu0
    %v682 = vadd.f32 0.0, %v681
    %v683 = vpop.f32.mrb[0].mxu0
    %684 = vmatprep.mubr.bf16.mxu0 0
    %685 = vmatmul.mubr.bf16.gmra.mrb[0].mxu0 %v639
    %v686 = vpop.f32.mrb[0].mxu0
    %v687 = vadd.f32 0.0, %v686
    %v688 = vpop.f32.mrb[0].mxu0
    %v689 = vpop.f32.mrb[0].mxu0
    %v690 = vpop.f32.mrb[0].mxu0
    %691 = vdwg.mxu0
    %695 = vrot.lane.b32.xlu0 %v679, 16
    %v696 = vpop.permute.xlu0 %695
    %697 = vrot.lane.b32.xlu0 %v682, 16
    %v698 = vpop.permute.xlu0 %697
    %699 = vrot.lane.b32.xlu0 %v687, 16
    %v700 = vpop.permute.xlu0 %699
    %v704 = vsel %vm367, %v514, %v696
    %v705 = vsel %vm367, %v517, %v698
    %v706 = vsel %vm367, %v522, %v700
    %v707 = vpack.c.bf16 %v353, %v348
    %v708 = vpack.c.bf16 %v356, %v356
    %711 = vrot.lane.b32.xlu0 %v707, 96
    %v712 = vpop.permute.xlu0 %711
    %713 = vrot.lane.b32.xlu0 %v708, 96
    %v714 = vpop.permute.xlu0 %713
    %v716 = vsel %vm367, %v707, 0
    %v719 = vsel %vm367, %v708, 0
    %v722 = vsel %vm367, %v712, 0
    %v725 = vsel %vm367, %v714, 0
    %727 = vmatprep.subr.bf16.mxu0 0
    %728 = vmatpush1.bf16.xpose.msra.mxu0 %v722
    %729 = vmatprep.subr.bf16.mxu0 0
    %730 = vmatpush1.bf16.xpose.msra.mxu0 %v725
    %731 = vmatprep.subr.bf16.mxu0 0
    %732 = vmatpush1.bf16.xpose.msra.mxu0 0
    %733 = vmatprep.subr.bf16.mxu0 0
    %734 = vmatpush1.bf16.xpose.msra.mxu0 0
    %735 = vmatprep.subr.bf16.mxu0 0
    %736 = vmatpush1.bf16.xpose.msra.mxu0 0
    %737 = vmatprep.subr.bf16.mxu0 0
    %738 = vmatpush1.bf16.xpose.msra.mxu0 0
    %739 = vmatprep.subr.bf16.mxu0 0
    %740 = vmatpush1.bf16.xpose.msra.mxu0 0
    %741 = vmatprep.subr.bf16.mxu0 0
    %742 = vmatpush1.bf16.xpose.msra.mxu0 0
    %743 = vmatprep.subr.bf16.mxu0 0
    %744 = vmatpush1.bf16.xpose.msra.mxu0 0
    %745 = vmatprep.subr.bf16.mxu0 0
    %746 = vmatpush1.bf16.xpose.msra.mxu0 0
    %747 = vmatprep.subr.bf16.mxu0 0
    %748 = vmatpush1.bf16.xpose.msra.mxu0 0
    %749 = vmatprep.subr.bf16.mxu0 0
    %750 = vmatpush1.bf16.xpose.msra.mxu0 0
    %751 = vmatprep.subr.bf16.mxu0 0
    %752 = vmatpush1.bf16.xpose.msra.mxu0 0
    %753 = vmatprep.subr.bf16.mxu0 0
    %754 = vmatpush1.bf16.xpose.msra.mxu0 0
    %755 = vmatprep.subr.bf16.mxu0 0
    %756 = vmatpush1.bf16.xpose.msra.mxu0 0
    %757 = vmatprep.subr.bf16.mxu0 0
    %758 = vmatpush1.bf16.xpose.msra.mxu0 0
    %759 = vmatprep.mubr.bf16.mxu0 0
    %760 = vmatmul.mubr.bf16.gmra.mrb[0].mxu0 %v716
    %v761 = vpop.f32.mrb[0].mxu0
    %v762 = vadd.f32 %v168, %v761
    %v763 = vpop.f32.mrb[0].mxu0
    %v764 = vpop.f32.mrb[0].mxu0
    %v765 = vadd.f32 %v168, %v764
    %v766 = vpop.f32.mrb[0].mxu0
    %767 = vmatprep.mubr.bf16.mxu0 0
    %768 = vmatmul.mubr.bf16.gmra.mrb[0].mxu0 %v719
    %v769 = vpop.f32.mrb[0].mxu0
    %v770 = vadd.f32 %v168, %v769
    %v771 = vpop.f32.mrb[0].mxu0
    %v772 = vpop.f32.mrb[0].mxu0
    %v773 = vpop.f32.mrb[0].mxu0
    %774 = vdwg.mxu0
    %v775 = vsel %vm428, %v762, -inf
    %776 = vmax.xlane.f32.xlu0 %v775
    %v777 = vpop.xlane.xlu0 %776
    %v778 = vsel %vm428, %v765, -inf
    %779 = vmax.xlane.f32.xlu0 %v778
    %v780 = vpop.xlane.xlu0 %779
    %v781 = vsel %vm428, %v770, -inf
    %782 = vmax.xlane.f32.xlu0 %v781
    %v783 = vpop.xlane.xlu0 %782
    %v784 = vsub.f32 %v762, %v777
    %v785 = vsub.f32 %v765, %v780
    %v786 = vsub.f32 %v770, %v783
    %v787 = vmul.f32 %v784, 1.442695
    %v788 = vpow.pop %v787
    %v789 = vmul.f32 %v785, 1.442695
    %v790 = vpow.pop %v789
    %v791 = vmul.f32 %v786, 1.442695
    %v792 = vpow.pop %v791
    %v793 = vsel %vm428, %v788, 0.0
    %794 = vadd.xlane.f32.xlu0 %v793
    %v795 = vpop.xlane.xlu0 %794
    %v796 = vsel %vm428, %v790, 0.0
    %797 = vadd.xlane.f32.xlu0 %v796
    %v798 = vpop.xlane.xlu0 %797
    %v799 = vsel %vm428, %v792, 0.0
    %800 = vadd.xlane.f32.xlu0 %v799
    %v801 = vpop.xlane.xlu0 %800
    %v802 = vrcp.pop %v795
    %v803 = vrcp.pop %v798
    %v804 = vrcp.pop %v801
    %v805 = vmul.f32 %v788, %v802
    %v806 = vmul.f32 %v790, %v803
    %v807 = vmul.f32 %v792, %v804
    %v808 = vpack.c.bf16 %v806, %v805
    %v809 = vpack.c.bf16 %v807, %v807
    %810 = vrot.lane.b32.xlu0 %v707, 64
    %v811 = vpop.permute.xlu0 %810
    %812 = vrot.lane.b32.xlu0 %v708, 64
    %v813 = vpop.permute.xlu0 %812
    %v816 = vsel %vm428, %v808, 0
    %v819 = vsel %vm428, %v809, 0
    %v822 = vsel %vm475, %v813, 0
    %824 = vmatprep.subr.bf16.mxu0 0
    %825 = vmatpush1.bf16.msra.mxu0 %v811
    %826 = vmatprep.subr.bf16.mxu0 0
    %827 = vmatpush1.bf16.msra.mxu0 %v822
    %828 = vmatprep.subr.bf16.mxu0 0
    %829 = vmatpush1.bf16.msra.mxu0 0
    %830 = vmatprep.subr.bf16.mxu0 0
    %831 = vmatpush1.bf16.msra.mxu0 0
    %832 = vmatprep.subr.bf16.mxu0 0
    %833 = vmatpush1.bf16.msra.mxu0 0
    %834 = vmatprep.subr.bf16.mxu0 0
    %835 = vmatpush1.bf16.msra.mxu0 0
    %836 = vmatprep.subr.bf16.mxu0 0
    %837 = vmatpush1.bf16.msra.mxu0 0
    %838 = vmatprep.subr.bf16.mxu0 0
    %839 = vmatpush1.bf16.msra.mxu0 0
    %840 = vmatprep.subr.bf16.mxu0 0
    %841 = vmatpush1.bf16.msra.mxu0 0
    %842 = vmatprep.subr.bf16.mxu0 0
    %843 = vmatpush1.bf16.msra.mxu0 0
    %844 = vmatprep.subr.bf16.mxu0 0
    %845 = vmatpush1.bf16.msra.mxu0 0
    %846 = vmatprep.subr.bf16.mxu0 0
    %847 = vmatpush1.bf16.msra.mxu0 0
    %848 = vmatprep.subr.bf16.mxu0 0
    %849 = vmatpush1.bf16.msra.mxu0 0
    %850 = vmatprep.subr.bf16.mxu0 0
    %851 = vmatpush1.bf16.msra.mxu0 0
    %852 = vmatprep.subr.bf16.mxu0 0
    %853 = vmatpush1.bf16.msra.mxu0 0
    %854 = vmatprep.subr.bf16.mxu0 0
    %855 = vmatpush1.bf16.msra.mxu0 0
    %856 = vmatprep.mubr.bf16.mxu0 0
    %857 = vmatmul.mubr.bf16.gmra.mrb[0].mxu0 %v816
    %v858 = vpop.f32.mrb[0].mxu0
    %v859 = vadd.f32 0.0, %v858
    %v860 = vpop.f32.mrb[0].mxu0
    %v861 = vpop.f32.mrb[0].mxu0
    %v862 = vadd.f32 0.0, %v861
    %v863 = vpop.f32.mrb[0].mxu0
    %864 = vmatprep.mubr.bf16.mxu0 0
    %865 = vmatmul.mubr.bf16.gmra.mrb[0].mxu0 %v819
    %v866 = vpop.f32.mrb[0].mxu0
    %v867 = vadd.f32 0.0, %v866
    %v868 = vpop.f32.mrb[0].mxu0
    %v869 = vpop.f32.mrb[0].mxu0
    %v870 = vpop.f32.mrb[0].mxu0
    %871 = vdwg.mxu0
    %872 = vrot.lane.b32.xlu0 %v707, 112
    %v873 = vpop.permute.xlu0 %872
    %874 = vrot.lane.b32.xlu0 %v708, 112
    %v875 = vpop.permute.xlu0 %874
    %876 = vrot.lane.b32.xlu0 %v707, 80
    %v877 = vpop.permute.xlu0 %876
    %878 = vrot.lane.b32.xlu0 %v708, 80
    %v879 = vpop.permute.xlu0 %878
    %v881 = vsel %vm367, %v873, 0
    %v884 = vsel %vm367, %v875, 0
    %v887 = vsel %vm367, %v877, 0
    %v890 = vsel %vm367, %v879, 0
    %892 = vmatprep.subr.bf16.mxu0 0
    %893 = vmatpush1.bf16.xpose.msra.mxu0 %v887
    %894 = vmatprep.subr.bf16.mxu0 0
    %895 = vmatpush1.bf16.xpose.msra.mxu0 %v890
    %896 = vmatprep.subr.bf16.mxu0 0
    %897 = vmatpush1.bf16.xpose.msra.mxu0 0
    %898 = vmatprep.subr.bf16.mxu0 0
    %899 = vmatpush1.bf16.xpose.msra.mxu0 0
    %900 = vmatprep.subr.bf16.mxu0 0
    %901 = vmatpush1.bf16.xpose.msra.mxu0 0
    %902 = vmatprep.subr.bf16.mxu0 0
    %903 = vmatpush1.bf16.xpose.msra.mxu0 0
    %904 = vmatprep.subr.bf16.mxu0 0
    %905 = vmatpush1.bf16.xpose.msra.mxu0 0
    %906 = vmatprep.subr.bf16.mxu0 0
    %907 = vmatpush1.bf16.xpose.msra.mxu0 0
    %908 = vmatprep.subr.bf16.mxu0 0
    %909 = vmatpush1.bf16.xpose.msra.mxu0 0
    %910 = vmatprep.subr.bf16.mxu0 0
    %911 = vmatpush1.bf16.xpose.msra.mxu0 0
    %912 = vmatprep.subr.bf16.mxu0 0
    %913 = vmatpush1.bf16.xpose.msra.mxu0 0
    %914 = vmatprep.subr.bf16.mxu0 0
    %915 = vmatpush1.bf16.xpose.msra.mxu0 0
    %916 = vmatprep.subr.bf16.mxu0 0
    %917 = vmatpush1.bf16.xpose.msra.mxu0 0
    %918 = vmatprep.subr.bf16.mxu0 0
    %919 = vmatpush1.bf16.xpose.msra.mxu0 0
    %920 = vmatprep.subr.bf16.mxu0 0
    %921 = vmatpush1.bf16.xpose.msra.mxu0 0
    %922 = vmatprep.subr.bf16.mxu0 0
    %923 = vmatpush1.bf16.xpose.msra.mxu0 0
    %924 = vmatprep.mubr.bf16.mxu0 0
    %925 = vmatmul.mubr.bf16.gmra.mrb[0].mxu0 %v881
    %v926 = vpop.f32.mrb[0].mxu0
    %v927 = vadd.f32 %v168, %v926
    %v928 = vpop.f32.mrb[0].mxu0
    %v929 = vpop.f32.mrb[0].mxu0
    %v930 = vadd.f32 %v168, %v929
    %v931 = vpop.f32.mrb[0].mxu0
    %932 = vmatprep.mubr.bf16.mxu0 0
    %933 = vmatmul.mubr.bf16.gmra.mrb[0].mxu0 %v884
    %v934 = vpop.f32.mrb[0].mxu0
    %v935 = vadd.f32 %v168, %v934
    %v936 = vpop.f32.mrb[0].mxu0
    %v937 = vpop.f32.mrb[0].mxu0
    %v938 = vpop.f32.mrb[0].mxu0
    %939 = vdwg.mxu0
    %v940 = vsel %vm428, %v927, -inf
    %941 = vmax.xlane.f32.xlu0 %v940
    %v942 = vpop.xlane.xlu0 %941
    %v943 = vsel %vm428, %v930, -inf
    %944 = vmax.xlane.f32.xlu0 %v943
    %v945 = vpop.xlane.xlu0 %944
    %v946 = vsel %vm428, %v935, -inf
    %947 = vmax.xlane.f32.xlu0 %v946
    %v948 = vpop.xlane.xlu0 %947
    %v949 = vsub.f32 %v927, %v942
    %v950 = vsub.f32 %v930, %v945
    %v951 = vsub.f32 %v935, %v948
    %v952 = vmul.f32 %v949, 1.442695
    %v953 = vpow.pop %v952
    %v954 = vmul.f32 %v950, 1.442695
    %v955 = vpow.pop %v954
    %v956 = vmul.f32 %v951, 1.442695
    %v957 = vpow.pop %v956
    %v958 = vsel %vm428, %v953, 0.0
    %959 = vadd.xlane.f32.xlu0 %v958
    %v960 = vpop.xlane.xlu0 %959
    %v961 = vsel %vm428, %v955, 0.0
    %962 = vadd.xlane.f32.xlu0 %v961
    %v963 = vpop.xlane.xlu0 %962
    %v964 = vsel %vm428, %v957, 0.0
    %965 = vadd.xlane.f32.xlu0 %v964
    %v966 = vpop.xlane.xlu0 %965
    %v967 = vrcp.pop %v960
    %v968 = vrcp.pop %v963
    %v969 = vrcp.pop %v966
    %v970 = vmul.f32 %v953, %v967
    %v971 = vmul.f32 %v955, %v968
    %v972 = vmul.f32 %v957, %v969
    %v973 = vpack.c.bf16 %v971, %v970
    %v974 = vpack.c.bf16 %v972, %v972
    %975 = vrot.lane.b32.xlu0 %v707, 48
    %v976 = vpop.permute.xlu0 %975
    %977 = vrot.lane.b32.xlu0 %v708, 48
    %v978 = vpop.permute.xlu0 %977
    %v981 = vsel %vm428, %v973, 0
    %v984 = vsel %vm428, %v974, 0
    %v987 = vsel %vm475, %v978, 0
    %989 = vmatprep.subr.bf16.mxu0 0
    %990 = vmatpush1.bf16.msra.mxu0 %v976
    %991 = vmatprep.subr.bf16.mxu0 0
    %992 = vmatpush1.bf16.msra.mxu0 %v987
    %993 = vmatprep.subr.bf16.mxu0 0
    %994 = vmatpush1.bf16.msra.mxu0 0
    %995 = vmatprep.subr.bf16.mxu0 0
    %996 = vmatpush1.bf16.msra.mxu0 0
    %997 = vmatprep.subr.bf16.mxu0 0
    %998 = vmatpush1.bf16.msra.mxu0 0
    %999 = vmatprep.subr.bf16.mxu0 0
    %1000 = vmatpush1.bf16.msra.mxu0 0
    %1001 = vmatprep.subr.bf16.mxu0 0
    %1002 = vmatpush1.bf16.msra.mxu0 0
    %1003 = vmatprep.subr.bf16.mxu0 0
    %1004 = vmatpush1.bf16.msra.mxu0 0
    %1005 = vmatprep.subr.bf16.mxu0 0
    %1006 = vmatpush1.bf16.msra.mxu0 0
    %1007 = vmatprep.subr.bf16.mxu0 0
    %1008 = vmatpush1.bf16.msra.mxu0 0
    %1009 = vmatprep.subr.bf16.mxu0 0
    %1010 = vmatpush1.bf16.msra.mxu0 0
    %1011 = vmatprep.subr.bf16.mxu0 0
    %1012 = vmatpush1.bf16.msra.mxu0 0
    %1013 = vmatprep.subr.bf16.mxu0 0
    %1014 = vmatpush1.bf16.msra.mxu0 0
    %1015 = vmatprep.subr.bf16.mxu0 0
    %1016 = vmatpush1.bf16.msra.mxu0 0
    %1017 = vmatprep.subr.bf16.mxu0 0
    %1018 = vmatpush1.bf16.msra.mxu0 0
    %1019 = vmatprep.subr.bf16.mxu0 0
    %1020 = vmatpush1.bf16.msra.mxu0 0
    %1021 = vmatprep.mubr.bf16.mxu0 0
    %1022 = vmatmul.mubr.bf16.gmra.mrb[0].mxu0 %v981
    %v1023 = vpop.f32.mrb[0].mxu0
    %v1024 = vadd.f32 0.0, %v1023
    %v1025 = vpop.f32.mrb[0].mxu0
    %v1026 = vpop.f32.mrb[0].mxu0
    %v1027 = vadd.f32 0.0, %v1026
    %v1028 = vpop.f32.mrb[0].mxu0
    %1029 = vmatprep.mubr.bf16.mxu0 0
    %1030 = vmatmul.mubr.bf16.gmra.mrb[0].mxu0 %v984
    %v1031 = vpop.f32.mrb[0].mxu0
    %v1032 = vadd.f32 0.0, %v1031
    %v1033 = vpop.f32.mrb[0].mxu0
    %v1034 = vpop.f32.mrb[0].mxu0
    %v1035 = vpop.f32.mrb[0].mxu0
    %1036 = vdwg.mxu0
    %1040 = vrot.lane.b32.xlu0 %v1024, 16
    %v1041 = vpop.permute.xlu0 %1040
    %1042 = vrot.lane.b32.xlu0 %v1027, 16
    %v1043 = vpop.permute.xlu0 %1042
    %1044 = vrot.lane.b32.xlu0 %v1032, 16
    %v1045 = vpop.permute.xlu0 %1044
    %v1049 = vsel %vm367, %v859, %v1041
    %v1050 = vsel %vm367, %v862, %v1043
    %v1051 = vsel %vm367, %v867, %v1045
    %v1052 = vpack.c.bf16 %v705, %v704
    %v1053 = vpack.c.bf16 %v1049, %v706
    %v1054 = vpack.c.bf16 %v1051, %v1050
    %1055 = vrot.lane.b32.xlu0 %v289, 32
    %v1056 = vpop.permute.xlu0 %1055
    %1057 = vrot.lane.b32.xlu0 %v290, 32
    %v1058 = vpop.permute.xlu0 %1057
    %v1062 = vsel %vm174, %v1052, 0
    %v1065 = vsel %vm174, %v1053, 0
    %v1068 = vsel %vm174, %v1054, 0
    %1070 = vmatprep.subr.bf16.mxu0 0
    %1071 = vmatpush1.bf16.msra.mxu0 %v1056
    %1072 = vmatprep.subr.bf16.mxu0 0
    %1073 = vmatpush1.bf16.msra.mxu0 %v1058
    %1074 = vmatprep.subr.bf16.mxu0 0
    %1075 = vmatpush1.bf16.msra.mxu0 0
    %1076 = vmatprep.subr.bf16.mxu0 0
    %1077 = vmatpush1.bf16.msra.mxu0 0
    %1078 = vmatprep.subr.bf16.mxu0 0
    %1079 = vmatpush1.bf16.msra.mxu0 0
    %1080 = vmatprep.subr.bf16.mxu0 0
    %1081 = vmatpush1.bf16.msra.mxu0 0
    %1082 = vmatprep.subr.bf16.mxu0 0
    %1083 = vmatpush1.bf16.msra.mxu0 0
    %1084 = vmatprep.subr.bf16.mxu0 0
    %1085 = vmatpush1.bf16.msra.mxu0 0
    %1086 = vmatprep.subr.bf16.mxu0 0
    %1087 = vmatpush1.bf16.msra.mxu0 0
    %1088 = vmatprep.subr.bf16.mxu0 0
    %1089 = vmatpush1.bf16.msra.mxu0 0
    %1090 = vmatprep.subr.bf16.mxu0 0
    %1091 = vmatpush1.bf16.msra.mxu0 0
    %1092 = vmatprep.subr.bf16.mxu0 0
    %1093 = vmatpush1.bf16.msra.mxu0 0
    %1094 = vmatprep.subr.bf16.mxu0 0
    %1095 = vmatpush1.bf16.msra.mxu0 0
    %1096 = vmatprep.subr.bf16.mxu0 0
    %1097 = vmatpush1.bf16.msra.mxu0 0
    %1098 = vmatprep.subr.bf16.mxu0 0
    %1099 = vmatpush1.bf16.msra.mxu0 0
    %1100 = vmatprep.subr.bf16.mxu0 0
    %1101 = vmatpush1.bf16.msra.mxu0 0
    %1102 = vmatprep.mubr.bf16.mxu0 0
    %1103 = vmatmul.mubr.bf16.gmra.mrb[0].mxu0 %v1062
    %v1104 = vpop.f32.mrb[0].mxu0
    %v1105 = vadd.f32 0.0, %v1104
    %v1106 = vpop.f32.mrb[0].mxu0
    %v1107 = vpop.f32.mrb[0].mxu0
    %v1108 = vadd.f32 0.0, %v1107
    %v1109 = vpop.f32.mrb[0].mxu0
    %1110 = vmatprep.mubr.bf16.mxu0 0
    %1111 = vmatmul.mubr.bf16.gmra.mrb[0].mxu0 %v1065
    %v1112 = vpop.f32.mrb[0].mxu0
    %v1113 = vadd.f32 0.0, %v1112
    %v1114 = vpop.f32.mrb[0].mxu0
    %v1115 = vpop.f32.mrb[0].mxu0
    %v1116 = vadd.f32 0.0, %v1115
    %v1117 = vpop.f32.mrb[0].mxu0
    %1118 = vmatprep.mubr.bf16.mxu0 0
    %1119 = vmatmul.mubr.bf16.gmra.mrb[0].mxu0 %v1068
    %v1120 = vpop.f32.mrb[0].mxu0
    %v1121 = vadd.f32 0.0, %v1120
    %v1122 = vpop.f32.mrb[0].mxu0
    %v1123 = vpop.f32.mrb[0].mxu0
    %v1124 = vadd.f32 0.0, %v1123
    %v1125 = vpop.f32.mrb[0].mxu0
    %1126 = vdwg.mxu0
    %v1127 = vadd.f32 %v143, %v1105
    %v1128 = vadd.f32 %v146, %v1108
    %v1129 = vadd.f32 %v151, %v1113
    %v1130 = vadd.f32 %v154, %v1116
    %v1131 = vadd.f32 %v159, %v1121
    %v1132 = vadd.f32 %v162, %v1124
    %v1133 = vlaneseq
    %v1134 = vshrl.u32 %v1133, 7
    %v1135 = vsub.s32 4, %v1134
    %v1136 = vrot.slane %v173, %v1135
    %v1137 = vadd.f32 %v1127, %v1136
    %v1138 = vadd.f32 %v1128, %v1136
    %v1139 = vadd.f32 %v1129, %v1136
    %v1140 = vadd.f32 %v1130, %v1136
    %v1141 = vadd.f32 %v1131, %v1136
    %v1142 = vadd.f32 %v1132, %v1136
    %v1143 = vsel %vm174, %v1137, 0.0
    %1144 = vadd.xlane.f32.xlu0 %v1143
    %v1145 = vpop.xlane.xlu0 %1144
    %v1146 = vsel %vm174, %v1138, 0.0
    %1147 = vadd.xlane.f32.xlu0 %v1146
    %v1148 = vpop.xlane.xlu0 %1147
    %v1149 = vsel %vm174, %v1139, 0.0
    %1150 = vadd.xlane.f32.xlu0 %v1149
    %v1151 = vpop.xlane.xlu0 %1150
    %v1152 = vsel %vm174, %v1140, 0.0
    %1153 = vadd.xlane.f32.xlu0 %v1152
    %v1154 = vpop.xlane.xlu0 %1153
    %v1155 = vsel %vm174, %v1141, 0.0
    %1156 = vadd.xlane.f32.xlu0 %v1155
    %v1157 = vpop.xlane.xlu0 %1156
    %v1158 = vsel %vm174, %v1142, 0.0
    %1159 = vadd.xlane.f32.xlu0 %v1158
    %v1160 = vpop.xlane.xlu0 %1159
    %v1161 = vmul.f32 %v1145, %v193
    %v1162 = vmul.f32 %v1148, %v193
    %v1163 = vmul.f32 %v1151, %v193
    %v1164 = vmul.f32 %v1154, %v193
    %v1165 = vmul.f32 %v1157, %v193
    %v1166 = vmul.f32 %v1160, %v193
    %v1167 = vsub.f32 %v1137, %v1161
    %v1168 = vsub.f32 %v1138, %v1162
    %v1169 = vsub.f32 %v1139, %v1163
    %v1170 = vsub.f32 %v1140, %v1164
    %v1171 = vsub.f32 %v1141, %v1165
    %v1172 = vsub.f32 %v1142, %v1166
    %v1173 = vmul.f32 %v1167, %v1167
    %v1174 = vmul.f32 %v1168, %v1168
    %v1175 = vmul.f32 %v1169, %v1169
    %v1176 = vmul.f32 %v1170, %v1170
    %v1177 = vmul.f32 %v1171, %v1171
    %v1178 = vmul.f32 %v1172, %v1172
    %v1179 = vsel %vm174, %v1173, 0.0
    %1180 = vadd.xlane.f32.xlu0 %v1179
    %v1181 = vpop.xlane.xlu0 %1180
    %v1182 = vsel %vm174, %v1174, 0.0
    %1183 = vadd.xlane.f32.xlu0 %v1182
    %v1184 = vpop.xlane.xlu0 %1183
    %v1185 = vsel %vm174, %v1175, 0.0
    %1186 = vadd.xlane.f32.xlu0 %v1185
    %v1187 = vpop.xlane.xlu0 %1186
    %v1188 = vsel %vm174, %v1176, 0.0
    %1189 = vadd.xlane.f32.xlu0 %v1188
    %v1190 = vpop.xlane.xlu0 %1189
    %v1191 = vsel %vm174, %v1177, 0.0
    %1192 = vadd.xlane.f32.xlu0 %v1191
    %v1193 = vpop.xlane.xlu0 %1192
    %v1194 = vsel %vm174, %v1178, 0.0
    %1195 = vadd.xlane.f32.xlu0 %v1194
    %v1196 = vpop.xlane.xlu0 %1195
    %v1197 = vmul.f32 %v1181, %v193
    %v1198 = vmul.f32 %v1184, %v193
    %v1199 = vmul.f32 %v1187, %v193
    %v1200 = vmul.f32 %v1190, %v193
    %v1201 = vmul.f32 %v1193, %v193
    %v1202 = vmul.f32 %v1196, %v193
    %v1203 = vadd.f32 %v1197, 1e-12
    %v1204 = vadd.f32 %v1198, 1e-12
    %v1205 = vadd.f32 %v1199, 1e-12
    %v1206 = vadd.f32 %v1200, 1e-12
    %v1207 = vadd.f32 %v1201, 1e-12
    %v1208 = vadd.f32 %v1202, 1e-12
    %v1209 = vrsqrt.pop %v1203
    %v1210 = vrsqrt.pop %v1204
    %v1211 = vrsqrt.pop %v1205
    %v1212 = vrsqrt.pop %v1206
    %v1213 = vrsqrt.pop %v1207
    %v1214 = vrsqrt.pop %v1208
    %v1215 = vmul.f32 %v1167, %v1209
    %v1216 = vmul.f32 %v1168, %v1210
    %v1217 = vmul.f32 %v1169, %v1211
    %v1218 = vmul.f32 %v1170, %v1212
    %v1219 = vmul.f32 %v1171, %v1213
    %v1220 = vmul.f32 %v1172, %v1214
    %v1221 = vlaneseq
    %v1222 = vshrl.u32 %v1221, 7
    %v1223 = vsub.s32 2, %v1222
    %v1224 = vrot.slane %v173, %v1223
    %v1225 = vmul.f32 %v1215, %v1224
    %v1226 = vmul.f32 %v1216, %v1224
    %v1227 = vmul.f32 %v1217, %v1224
    %v1228 = vmul.f32 %v1218, %v1224
    %v1229 = vmul.f32 %v1219, %v1224
    %v1230 = vmul.f32 %v1220, %v1224
    %v1231 = vlaneseq
    %v1232 = vshrl.u32 %v1231, 7
    %v1233 = vsub.s32 3, %v1232
    %v1234 = vrot.slane %v173, %v1233
    %v1235 = vadd.f32 %v1225, %v1234
    %v1236 = vadd.f32 %v1226, %v1234
    %v1237 = vadd.f32 %v1227, %v1234
    %v1238 = vadd.f32 %v1228, %v1234
    %v1239 = vadd.f32 %v1229, %v1234
    %v1240 = vadd.f32 %v1230, %v1234
    %v1241 = vpack.c.bf16 %v1236, %v1235
    %v1242 = vpack.c.bf16 %v1238, %v1237
    %v1243 = vpack.c.bf16 %v1240, %v1239
    %v1244 = vlaneseq
    %v1245 = vshrl.u32 %v1244, 7
    %v1246 = vsub.s32 6, %v1245
    %v1247 = vrot.slane %v173, %v1246
    %v1248 = vunpack.c.h.b16 %v169
    %v1249 = vunpack.c.h.b16 %v170
    %v1250 = vunpack.c.h.b16 %v171
    %v1251 = vunpack.c.h.b16 %v172
    %v1252 = vpack.c.b16 %v1249, %v1248
    %v1253 = vpack.c.b16 %v1251, %v1250
    %v1257 = vsel %vm174, %v1241, 0
    %v1260 = vsel %vm174, %v1242, 0
    %v1263 = vsel %vm174, %v1243, 0
    %1265 = vmatprep.subr.bf16.mxu0 0
    %1266 = vmatpush1.bf16.msra.mxu0 %v1252
    %1267 = vmatprep.subr.bf16.mxu0 0
    %1268 = vmatpush1.bf16.msra.mxu0 %v1253
    %1269 = vmatprep.subr.bf16.mxu0 0
    %1270 = vmatpush1.bf16.msra.mxu0 0
    %1271 = vmatprep.subr.bf16.mxu0 0
    %1272 = vmatpush1.bf16.msra.mxu0 0
    %1273 = vmatprep.subr.bf16.mxu0 0
    %1274 = vmatpush1.bf16.msra.mxu0 0
    %1275 = vmatprep.subr.bf16.mxu0 0
    %1276 = vmatpush1.bf16.msra.mxu0 0
    %1277 = vmatprep.subr.bf16.mxu0 0
    %1278 = vmatpush1.bf16.msra.mxu0 0
    %1279 = vmatprep.subr.bf16.mxu0 0
    %1280 = vmatpush1.bf16.msra.mxu0 0
    %1281 = vmatprep.subr.bf16.mxu0 0
    %1282 = vmatpush1.bf16.msra.mxu0 0
    %1283 = vmatprep.subr.bf16.mxu0 0
    %1284 = vmatpush1.bf16.msra.mxu0 0
    %1285 = vmatprep.subr.bf16.mxu0 0
    %1286 = vmatpush1.bf16.msra.mxu0 0
    %1287 = vmatprep.subr.bf16.mxu0 0
    %1288 = vmatpush1.bf16.msra.mxu0 0
    %1289 = vmatprep.subr.bf16.mxu0 0
    %1290 = vmatpush1.bf16.msra.mxu0 0
    %1291 = vmatprep.subr.bf16.mxu0 0
    %1292 = vmatpush1.bf16.msra.mxu0 0
    %1293 = vmatprep.subr.bf16.mxu0 0
    %1294 = vmatpush1.bf16.msra.mxu0 0
    %1295 = vmatprep.subr.bf16.mxu0 0
    %1296 = vmatpush1.bf16.msra.mxu0 0
    %1297 = vmatprep.mubr.bf16.mxu0 0
    %1298 = vmatmul.mubr.bf16.gmra.mrb[0].mxu0 %v1257
    %v1299 = vpop.f32.mrb[0].mxu0
    %v1300 = vadd.f32 %v1247, %v1299
    %v1301 = vpop.f32.mrb[0].mxu0
    %v1302 = vpop.f32.mrb[0].mxu0
    %v1303 = vadd.f32 %v1247, %v1302
    %v1304 = vpop.f32.mrb[0].mxu0
    %1305 = vmatprep.mubr.bf16.mxu0 0
    %1306 = vmatmul.mubr.bf16.gmra.mrb[0].mxu0 %v1260
    %v1307 = vpop.f32.mrb[0].mxu0
    %v1308 = vadd.f32 %v1247, %v1307
    %v1309 = vpop.f32.mrb[0].mxu0
    %v1310 = vpop.f32.mrb[0].mxu0
    %v1311 = vadd.f32 %v1247, %v1310
    %v1312 = vpop.f32.mrb[0].mxu0
    %1313 = vmatprep.mubr.bf16.mxu0 0
    %1314 = vmatmul.mubr.bf16.gmra.mrb[0].mxu0 %v1263
    %v1315 = vpop.f32.mrb[0].mxu0
    %v1316 = vadd.f32 %v1247, %v1315
    %v1317 = vpop.f32.mrb[0].mxu0
    %v1318 = vpop.f32.mrb[0].mxu0
    %v1319 = vadd.f32 %v1247, %v1318
    %v1320 = vpop.f32.mrb[0].mxu0
    %1321 = vdwg.mxu0
    %v1322 = vmul.f32 %v1300, 0.5
    %v1323 = vmul.f32 %v1303, 0.5
    %v1324 = vmul.f32 %v1308, 0.5
    %v1325 = vmul.f32 %v1311, 0.5
    %v1326 = vmul.f32 %v1316, 0.5
    %v1327 = vmul.f32 %v1319, 0.5
    %v1328 = vmul.f32 %v1300, 0.044715
    %v1329 = vmul.f32 %v1303, 0.044715
    %v1330 = vmul.f32 %v1308, 0.044715
    %v1331 = vmul.f32 %v1311, 0.044715
    %v1332 = vmul.f32 %v1316, 0.044715
    %v1333 = vmul.f32 %v1319, 0.044715
    %v1334 = vmul.f32 %v1328, %v1300
    %v1335 = vmul.f32 %v1329, %v1303
    %v1336 = vmul.f32 %v1330, %v1308
    %v1337 = vmul.f32 %v1331, %v1311
    %v1338 = vmul.f32 %v1332, %v1316
    %v1339 = vmul.f32 %v1333, %v1319
    %v1340 = vmul.f32 %v1334, %v1300
    %v1341 = vmul.f32 %v1335, %v1303
    %v1342 = vmul.f32 %v1336, %v1308
    %v1343 = vmul.f32 %v1337, %v1311
    %v1344 = vmul.f32 %v1338, %v1316
    %v1345 = vmul.f32 %v1339, %v1319
    %v1346 = vadd.f32 %v1300, %v1340
    %v1347 = vadd.f32 %v1303, %v1341
    %v1348 = vadd.f32 %v1308, %v1342
    %v1349 = vadd.f32 %v1311, %v1343
    %v1350 = vadd.f32 %v1316, %v1344
    %v1351 = vadd.f32 %v1319, %v1345
    %v1352 = vmul.f32 %v1346, 0.7978846
    %v1353 = vmul.f32 %v1347, 0.7978846
    %v1354 = vmul.f32 %v1348, 0.7978846
    %v1355 = vmul.f32 %v1349, 0.7978846
    %v1356 = vmul.f32 %v1350, 0.7978846
    %v1357 = vmul.f32 %v1351, 0.7978846
    %v1358 = vtanh.pop %v1352
    %v1359 = vtanh.pop %v1353
    %v1360 = vtanh.pop %v1354
    %v1361 = vtanh.pop %v1355
    %v1362 = vtanh.pop %v1356
    %v1363 = vtanh.pop %v1357
    %v1364 = vadd.f32 %v1358, 1.0
    %v1365 = vadd.f32 %v1359, 1.0
    %v1366 = vadd.f32 %v1360, 1.0
    %v1367 = vadd.f32 %v1361, 1.0
    %v1368 = vadd.f32 %v1362, 1.0
    %v1369 = vadd.f32 %v1363, 1.0
    %v1370 = vmul.f32 %v1322, %v1364
    %v1371 = vmul.f32 %v1323, %v1365
    %v1372 = vmul.f32 %v1324, %v1366
    %v1373 = vmul.f32 %v1325, %v1367
    %v1374 = vmul.f32 %v1326, %v1368
    %v1375 = vmul.f32 %v1327, %v1369
    %v1376 = vpack.c.bf16 %v1371, %v1370
    %v1377 = vpack.c.bf16 %v1373, %v1372
    %v1378 = vpack.c.bf16 %v1375, %v1374
    %v1379 = vld [vmem:[%s3] sm:$0xf]
    %v1380 = vld [vmem:[%s3 + $0x4] sm:$0xf]
    %v1381 = vld [vmem:[%s3 + $0x8] sm:$0xf]
    %v1382 = vld [vmem:[%s3 + $0xc] sm:$0xf]
    %v1383 = vld [vmem:[%s3 + $0x10] sm:$0xf]
    %v1384 = vld [vmem:[%s3 + $0x14] sm:$0xf]
    %v1385 = vld [vmem:[%s3 + $0x18] sm:$0xf]
    %v1386 = vld [vmem:[%s3 + $0x1c] sm:$0xf]
    %v1387 = vld [vmem:[%s3 + $0x20] sm:$0xf]
    %v1388 = vld [vmem:[%s3 + $0x24] sm:$0xf]
    %v1389 = vld [vmem:[%s3 + $0x28] sm:$0xf]
    %v1390 = vld [vmem:[%s3 + $0x2c] sm:$0xf]
    %v1391 = vld [vmem:[%s3 + $0x30] sm:$0xf]
    %v1392 = vld [vmem:[%s3 + $0x34] sm:$0xf]
    %v1393 = vld [vmem:[%s3 + $0x38] sm:$0xf]
    %v1394 = vld [vmem:[%s3 + $0x3c] sm:$0xf]
    %v1411 = vunpack.c.l.b16 %v1379
    %v1412 = vunpack.c.l.b16 %v1380
    %v1413 = vunpack.c.l.b16 %v1381
    %v1414 = vunpack.c.l.b16 %v1382
    %v1415 = vunpack.c.l.b16 %v1383
    %v1416 = vunpack.c.l.b16 %v1384
    %v1417 = vunpack.c.l.b16 %v1385
    %v1418 = vunpack.c.l.b16 %v1386
    %v1419 = vunpack.c.l.b16 %v1387
    %v1420 = vunpack.c.l.b16 %v1388
    %v1421 = vunpack.c.l.b16 %v1389
    %v1422 = vunpack.c.l.b16 %v1390
    %v1423 = vunpack.c.l.b16 %v1391
    %v1424 = vunpack.c.l.b16 %v1392
    %v1425 = vunpack.c.l.b16 %v1393
    %v1426 = vunpack.c.l.b16 %v1394
    %v1427 = vpack.c.b16 %v1412, %v1411
    %v1428 = vpack.c.b16 %v1414, %v1413
    %v1429 = vpack.c.b16 %v1416, %v1415
    %v1430 = vpack.c.b16 %v1418, %v1417
    %v1431 = vpack.c.b16 %v1420, %v1419
    %v1432 = vpack.c.b16 %v1422, %v1421
    %v1433 = vpack.c.b16 %v1424, %v1423
    %v1434 = vpack.c.b16 %v1426, %v1425
    %1443 = vmatprep.subr.bf16.mxu0 0
    %1444 = vmatpush1.bf16.msra.mxu0 %v1427
    %1445 = vmatprep.subr.bf16.mxu0 0
    %1446 = vmatpush1.bf16.msra.mxu0 %v1428
    %1447 = vmatprep.subr.bf16.mxu0 0
    %1448 = vmatpush1.bf16.msra.mxu0 %v1429
    %1449 = vmatprep.subr.bf16.mxu0 0
    %1450 = vmatpush1.bf16.msra.mxu0 %v1430
    %1451 = vmatprep.subr.bf16.mxu0 0
    %1452 = vmatpush1.bf16.msra.mxu0 %v1431
    %1453 = vmatprep.subr.bf16.mxu0 0
    %1454 = vmatpush1.bf16.msra.mxu0 %v1432
    %1455 = vmatprep.subr.bf16.mxu0 0
    %1456 = vmatpush1.bf16.msra.mxu0 %v1433
    %1457 = vmatprep.subr.bf16.mxu0 0
    %1458 = vmatpush1.bf16.msra.mxu0 %v1434
    %1459 = vmatprep.subr.bf16.mxu0 0
    %1460 = vmatpush1.bf16.msra.mxu0 0
    %1461 = vmatprep.subr.bf16.mxu0 0
    %1462 = vmatpush1.bf16.msra.mxu0 0
    %1463 = vmatprep.subr.bf16.mxu0 0
    %1464 = vmatpush1.bf16.msra.mxu0 0
    %1465 = vmatprep.subr.bf16.mxu0 0
    %1466 = vmatpush1.bf16.msra.mxu0 0
    %1467 = vmatprep.subr.bf16.mxu0 0
    %1468 = vmatpush1.bf16.msra.mxu0 0
    %1469 = vmatprep.subr.bf16.mxu0 0
    %1470 = vmatpush1.bf16.msra.mxu0 0
    %1471 = vmatprep.subr.bf16.mxu0 0
    %1472 = vmatpush1.bf16.msra.mxu0 0
    %1473 = vmatprep.subr.bf16.mxu0 0
    %1474 = vmatpush1.bf16.msra.mxu0 0
    %1475 = vmatprep.mubr.bf16.mxu0 0
    %1476 = vmatmul.mubr.bf16.gmra.mrb[0].mxu0 %v1376
    %v1477 = vpop.f32.mrb[0].mxu0
    %v1478 = vadd.f32 0.0, %v1477
    %v1479 = vpop.f32.mrb[0].mxu0
    %v1480 = vpop.f32.mrb[0].mxu0
    %v1481 = vadd.f32 0.0, %v1480
    %v1482 = vpop.f32.mrb[0].mxu0
    %1483 = vmatprep.mubr.bf16.mxu0 0
    %1484 = vmatmul.mubr.bf16.gmra.mrb[0].mxu0 %v1377
    %v1485 = vpop.f32.mrb[0].mxu0
    %v1486 = vadd.f32 0.0, %v1485
    %v1487 = vpop.f32.mrb[0].mxu0
    %v1488 = vpop.f32.mrb[0].mxu0
    %v1489 = vadd.f32 0.0, %v1488
    %v1490 = vpop.f32.mrb[0].mxu0
    %1491 = vmatprep.mubr.bf16.mxu0 0
    %1492 = vmatmul.mubr.bf16.gmra.mrb[0].mxu0 %v1378
    %v1493 = vpop.f32.mrb[0].mxu0
    %v1494 = vadd.f32 0.0, %v1493
    %v1495 = vpop.f32.mrb[0].mxu0
    %v1496 = vpop.f32.mrb[0].mxu0
    %v1497 = vadd.f32 0.0, %v1496
    %v1498 = vpop.f32.mrb[0].mxu0
    %1499 = vdwg.mxu0
    %v1500 = vadd.f32 %v1137, %v1478
    %v1501 = vadd.f32 %v1138, %v1481
    %v1502 = vadd.f32 %v1139, %v1486
    %v1503 = vadd.f32 %v1140, %v1489
    %v1504 = vadd.f32 %v1141, %v1494
    %v1505 = vadd.f32 %v1142, %v1497
    %v1506 = vlaneseq
    %v1507 = vshrl.u32 %v1506, 7
    %v1508 = vsub.s32 5, %v1507
    %v1509 = vrot.slane %v173, %v1508
    %v1510 = vadd.f32 %v1500, %v1509
    %v1511 = vadd.f32 %v1501, %v1509
    %v1512 = vadd.f32 %v1502, %v1509
    %v1513 = vadd.f32 %v1503, %v1509
    %v1514 = vadd.f32 %v1504, %v1509
    %v1515 = vadd.f32 %v1505, %v1509
    %s1516 = scalar_lea.vmem %s2, 32
    %v1517 = vld [vmem:[%s1516] sm:$0xff]
    %v1518 = vld [vmem:[%s1516 + $0x8] sm:$0xff]
    %v1519 = vld [vmem:[%s1516 + $0x10] sm:$0xff]
    %v1520 = vld [vmem:[%s1516 + $0x18] sm:$0xff]
    %v1521 = vld [vmem:[%s4 + $0x10] sm:$0xff]
    %v1522 = vsel %vm174, %v1510, 0.0
    %1523 = vadd.xlane.f32.xlu0 %v1522
    %v1524 = vpop.xlane.xlu0 %1523
    %v1525 = vsel %vm174, %v1511, 0.0
    %1526 = vadd.xlane.f32.xlu0 %v1525
    %v1527 = vpop.xlane.xlu0 %1526
    %v1528 = vsel %vm174, %v1512, 0.0
    %1529 = vadd.xlane.f32.xlu0 %v1528
    %v1530 = vpop.xlane.xlu0 %1529
    %v1531 = vsel %vm174, %v1513, 0.0
    %1532 = vadd.xlane.f32.xlu0 %v1531
    %v1533 = vpop.xlane.xlu0 %1532
    %v1534 = vsel %vm174, %v1514, 0.0
    %1535 = vadd.xlane.f32.xlu0 %v1534
    %v1536 = vpop.xlane.xlu0 %1535
    %v1537 = vsel %vm174, %v1515, 0.0
    %1538 = vadd.xlane.f32.xlu0 %v1537
    %v1539 = vpop.xlane.xlu0 %1538
    %v1540 = vmul.f32 %v1524, %v193
    %v1541 = vmul.f32 %v1527, %v193
    %v1542 = vmul.f32 %v1530, %v193
    %v1543 = vmul.f32 %v1533, %v193
    %v1544 = vmul.f32 %v1536, %v193
    %v1545 = vmul.f32 %v1539, %v193
    %v1546 = vsub.f32 %v1510, %v1540
    %v1547 = vsub.f32 %v1511, %v1541
    %v1548 = vsub.f32 %v1512, %v1542
    %v1549 = vsub.f32 %v1513, %v1543
    %v1550 = vsub.f32 %v1514, %v1544
    %v1551 = vsub.f32 %v1515, %v1545
    %v1552 = vmul.f32 %v1546, %v1546
    %v1553 = vmul.f32 %v1547, %v1547
    %v1554 = vmul.f32 %v1548, %v1548
    %v1555 = vmul.f32 %v1549, %v1549
    %v1556 = vmul.f32 %v1550, %v1550
    %v1557 = vmul.f32 %v1551, %v1551
    %v1558 = vsel %vm174, %v1552, 0.0
    %1559 = vadd.xlane.f32.xlu0 %v1558
    %v1560 = vpop.xlane.xlu0 %1559
    %v1561 = vsel %vm174, %v1553, 0.0
    %1562 = vadd.xlane.f32.xlu0 %v1561
    %v1563 = vpop.xlane.xlu0 %1562
    %v1564 = vsel %vm174, %v1554, 0.0
    %1565 = vadd.xlane.f32.xlu0 %v1564
    %v1566 = vpop.xlane.xlu0 %1565
    %v1567 = vsel %vm174, %v1555, 0.0
    %1568 = vadd.xlane.f32.xlu0 %v1567
    %v1569 = vpop.xlane.xlu0 %1568
    %v1570 = vsel %vm174, %v1556, 0.0
    %1571 = vadd.xlane.f32.xlu0 %v1570
    %v1572 = vpop.xlane.xlu0 %1571
    %v1573 = vsel %vm174, %v1557, 0.0
    %1574 = vadd.xlane.f32.xlu0 %v1573
    %v1575 = vpop.xlane.xlu0 %1574
    %v1576 = vmul.f32 %v1560, %v193
    %v1577 = vmul.f32 %v1563, %v193
    %v1578 = vmul.f32 %v1566, %v193
    %v1579 = vmul.f32 %v1569, %v193
    %v1580 = vmul.f32 %v1572, %v193
    %v1581 = vmul.f32 %v1575, %v193
    %v1582 = vadd.f32 %v1576, 1e-12
    %v1583 = vadd.f32 %v1577, 1e-12
    %v1584 = vadd.f32 %v1578, 1e-12
    %v1585 = vadd.f32 %v1579, 1e-12
    %v1586 = vadd.f32 %v1580, 1e-12
    %v1587 = vadd.f32 %v1581, 1e-12
    %v1588 = vrsqrt.pop %v1582
    %v1589 = vrsqrt.pop %v1583
    %v1590 = vrsqrt.pop %v1584
    %v1591 = vrsqrt.pop %v1585
    %v1592 = vrsqrt.pop %v1586
    %v1593 = vrsqrt.pop %v1587
    %v1594 = vmul.f32 %v1546, %v1588
    %v1595 = vmul.f32 %v1547, %v1589
    %v1596 = vmul.f32 %v1548, %v1590
    %v1597 = vmul.f32 %v1549, %v1591
    %v1598 = vmul.f32 %v1550, %v1592
    %v1599 = vmul.f32 %v1551, %v1593
    %v1600 = vlaneseq
    %v1601 = vshrl.u32 %v1600, 7
    %v1602 = vsub.s32 0, %v1601
    %v1603 = vrot.slane %v1521, %v1602
    %v1604 = vmul.f32 %v1594, %v1603
    %v1605 = vmul.f32 %v1595, %v1603
    %v1606 = vmul.f32 %v1596, %v1603
    %v1607 = vmul.f32 %v1597, %v1603
    %v1608 = vmul.f32 %v1598, %v1603
    %v1609 = vmul.f32 %v1599, %v1603
    %v1610 = vlaneseq
    %v1611 = vshrl.u32 %v1610, 7
    %v1612 = vsub.s32 1, %v1611
    %v1613 = vrot.slane %v1521, %v1612
    %v1614 = vadd.f32 %v1604, %v1613
    %v1615 = vadd.f32 %v1605, %v1613
    %v1616 = vadd.f32 %v1606, %v1613
    %v1617 = vadd.f32 %v1607, %v1613
    %v1618 = vadd.f32 %v1608, %v1613
    %v1619 = vadd.f32 %v1609, %v1613
    %v1620 = vpack.c.bf16 %v1615, %v1614
    %v1621 = vpack.c.bf16 %v1617, %v1616
    %v1622 = vpack.c.bf16 %v1619, %v1618
    %v1623 = vlaneseq
    %v1624 = vshrl.u32 %v1623, 7
    %v1625 = vsub.s32 7, %v1624
    %v1626 = vrot.slane %v1521, %v1625
    %v1631 = vunpack.c.l.b16 %v1517
    %v1632 = vunpack.c.l.b16 %v1518
    %v1633 = vunpack.c.l.b16 %v1519
    %v1634 = vunpack.c.l.b16 %v1520
    %v1635 = vpack.c.b16 %v1632, %v1631
    %v1636 = vpack.c.b16 %v1634, %v1633
    %v1640 = vsel %vm174, %v1620, 0
    %v1643 = vsel %vm174, %v1621, 0
    %v1646 = vsel %vm174, %v1622, 0
    %1648 = vmatprep.subr.bf16.mxu0 0
    %1649 = vmatpush1.bf16.msra.mxu0 %v1635
    %1650 = vmatprep.subr.bf16.mxu0 0
    %1651 = vmatpush1.bf16.msra.mxu0 %v1636
    %1652 = vmatprep.subr.bf16.mxu0 0
    %1653 = vmatpush1.bf16.msra.mxu0 0
    %1654 = vmatprep.subr.bf16.mxu0 0
    %1655 = vmatpush1.bf16.msra.mxu0 0
    %1656 = vmatprep.subr.bf16.mxu0 0
    %1657 = vmatpush1.bf16.msra.mxu0 0
    %1658 = vmatprep.subr.bf16.mxu0 0
    %1659 = vmatpush1.bf16.msra.mxu0 0
    %1660 = vmatprep.subr.bf16.mxu0 0
    %1661 = vmatpush1.bf16.msra.mxu0 0
    %1662 = vmatprep.subr.bf16.mxu0 0
    %1663 = vmatpush1.bf16.msra.mxu0 0
    %1664 = vmatprep.subr.bf16.mxu0 0
    %1665 = vmatpush1.bf16.msra.mxu0 0
    %1666 = vmatprep.subr.bf16.mxu0 0
    %1667 = vmatpush1.bf16.msra.mxu0 0
    %1668 = vmatprep.subr.bf16.mxu0 0
    %1669 = vmatpush1.bf16.msra.mxu0 0
    %1670 = vmatprep.subr.bf16.mxu0 0
    %1671 = vmatpush1.bf16.msra.mxu0 0
    %1672 = vmatprep.subr.bf16.mxu0 0
    %1673 = vmatpush1.bf16.msra.mxu0 0
    %1674 = vmatprep.subr.bf16.mxu0 0
    %1675 = vmatpush1.bf16.msra.mxu0 0
    %1676 = vmatprep.subr.bf16.mxu0 0
    %1677 = vmatpush1.bf16.msra.mxu0 0
    %1678 = vmatprep.subr.bf16.mxu0 0
    %1679 = vmatpush1.bf16.msra.mxu0 0
    %1680 = vmatprep.mubr.bf16.mxu0 0
    %1681 = vmatmul.mubr.bf16.gmra.mrb[0].mxu0 %v1640
    %v1682 = vpop.f32.mrb[0].mxu0
    %v1683 = vadd.f32 %v1626, %v1682
    %v1684 = vpop.f32.mrb[0].mxu0
    %v1685 = vpop.f32.mrb[0].mxu0
    %v1686 = vadd.f32 %v1626, %v1685
    %v1687 = vpop.f32.mrb[0].mxu0
    %1688 = vmatprep.mubr.bf16.mxu0 0
    %1689 = vmatmul.mubr.bf16.gmra.mrb[0].mxu0 %v1643
    %v1690 = vpop.f32.mrb[0].mxu0
    %v1691 = vadd.f32 %v1626, %v1690
    %v1692 = vpop.f32.mrb[0].mxu0
    %v1693 = vpop.f32.mrb[0].mxu0
    %v1694 = vadd.f32 %v1626, %v1693
    %v1695 = vpop.f32.mrb[0].mxu0
    %1696 = vmatprep.mubr.bf16.mxu0 0
    %1697 = vmatmul.mubr.bf16.gmra.mrb[0].mxu0 %v1646
    %v1698 = vpop.f32.mrb[0].mxu0
    %v1699 = vadd.f32 %v1626, %v1698
    %v1700 = vpop.f32.mrb[0].mxu0
    %v1701 = vpop.f32.mrb[0].mxu0
    %v1702 = vadd.f32 %v1626, %v1701
    %v1703 = vpop.f32.mrb[0].mxu0
    %1704 = vdwg.mxu0
    %v1705 = vpack.c.bf16 %v1686, %v1683
    %v1706 = vpack.c.bf16 %v1691, %v1691
    %1709 = vrot.lane.b32.xlu0 %v1705, 96
    %v1710 = vpop.permute.xlu0 %1709
    %1711 = vrot.lane.b32.xlu0 %v1706, 96
    %v1712 = vpop.permute.xlu0 %1711
    %v1714 = vsel %vm367, %v1705, 0
    %v1717 = vsel %vm367, %v1706, 0
    %v1720 = vsel %vm367, %v1710, 0
    %v1723 = vsel %vm367, %v1712, 0
    %1725 = vmatprep.subr.bf16.mxu0 0
    %1726 = vmatpush1.bf16.xpose.msra.mxu0 %v1720
    %1727 = vmatprep.subr.bf16.mxu0 0
    %1728 = vmatpush1.bf16.xpose.msra.mxu0 %v1723
    %1729 = vmatprep.subr.bf16.mxu0 0
    %1730 = vmatpush1.bf16.xpose.msra.mxu0 0
    %1731 = vmatprep.subr.bf16.mxu0 0
    %1732 = vmatpush1.bf16.xpose.msra.mxu0 0
    %1733 = vmatprep.subr.bf16.mxu0 0
    %1734 = vmatpush1.bf16.xpose.msra.mxu0 0
    %1735 = vmatprep.subr.bf16.mxu0 0
    %1736 = vmatpush1.bf16.xpose.msra.mxu0 0
    %1737 = vmatprep.subr.bf16.mxu0 0
    %1738 = vmatpush1.bf16.xpose.msra.mxu0 0
    %1739 = vmatprep.subr.bf16.mxu0 0
    %1740 = vmatpush1.bf16.xpose.msra.mxu0 0
    %1741 = vmatprep.subr.bf16.mxu0 0
    %1742 = vmatpush1.bf16.xpose.msra.mxu0 0
    %1743 = vmatprep.subr.bf16.mxu0 0
    %1744 = vmatpush1.bf16.xpose.msra.mxu0 0
    %1745 = vmatprep.subr.bf16.mxu0 0
    %1746 = vmatpush1.bf16.xpose.msra.mxu0 0
    %1747 = vmatprep.subr.bf16.mxu0 0
    %1748 = vmatpush1.bf16.xpose.msra.mxu0 0
    %1749 = vmatprep.subr.bf16.mxu0 0
    %1750 = vmatpush1.bf16.xpose.msra.mxu0 0
    %1751 = vmatprep.subr.bf16.mxu0 0
    %1752 = vmatpush1.bf16.xpose.msra.mxu0 0
    %1753 = vmatprep.subr.bf16.mxu0 0
    %1754 = vmatpush1.bf16.xpose.msra.mxu0 0
    %1755 = vmatprep.subr.bf16.mxu0 0
    %1756 = vmatpush1.bf16.xpose.msra.mxu0 0
    %1757 = vmatprep.mubr.bf16.mxu0 0
    %1758 = vmatmul.mubr.bf16.gmra.mrb[0].mxu0 %v1714
    %v1759 = vpop.f32.mrb[0].mxu0
    %v1760 = vadd.f32 %v168, %v1759
    %v1761 = vpop.f32.mrb[0].mxu0
    %v1762 = vpop.f32.mrb[0].mxu0
    %v1763 = vadd.f32 %v168, %v1762
    %v1764 = vpop.f32.mrb[0].mxu0
    %1765 = vmatprep.mubr.bf16.mxu0 0
    %1766 = vmatmul.mubr.bf16.gmra.mrb[0].mxu0 %v1717
    %v1767 = vpop.f32.mrb[0].mxu0
    %v1768 = vadd.f32 %v168, %v1767
    %v1769 = vpop.f32.mrb[0].mxu0
    %v1770 = vpop.f32.mrb[0].mxu0
    %v1771 = vpop.f32.mrb[0].mxu0
    %1772 = vdwg.mxu0
    %v1773 = vsel %vm428, %v1760, -inf
    %1774 = vmax.xlane.f32.xlu0 %v1773
    %v1775 = vpop.xlane.xlu0 %1774
    %v1776 = vsel %vm428, %v1763, -inf
    %1777 = vmax.xlane.f32.xlu0 %v1776
    %v1778 = vpop.xlane.xlu0 %1777
    %v1779 = vsel %vm428, %v1768, -inf
    %1780 = vmax.xlane.f32.xlu0 %v1779
    %v1781 = vpop.xlane.xlu0 %1780
    %v1782 = vsub.f32 %v1760, %v1775
    %v1783 = vsub.f32 %v1763, %v1778
    %v1784 = vsub.f32 %v1768, %v1781
    %v1785 = vmul.f32 %v1782, 1.442695
    %v1786 = vpow.pop %v1785
    %v1787 = vmul.f32 %v1783, 1.442695
    %v1788 = vpow.pop %v1787
    %v1789 = vmul.f32 %v1784, 1.442695
    %v1790 = vpow.pop %v1789
    %v1791 = vsel %vm428, %v1786, 0.0
    %1792 = vadd.xlane.f32.xlu0 %v1791
    %v1793 = vpop.xlane.xlu0 %1792
    %v1794 = vsel %vm428, %v1788, 0.0
    %1795 = vadd.xlane.f32.xlu0 %v1794
    %v1796 = vpop.xlane.xlu0 %1795
    %v1797 = vsel %vm428, %v1790, 0.0
    %1798 = vadd.xlane.f32.xlu0 %v1797
    %v1799 = vpop.xlane.xlu0 %1798
    %v1800 = vrcp.pop %v1793
    %v1801 = vrcp.pop %v1796
    %v1802 = vrcp.pop %v1799
    %v1803 = vmul.f32 %v1786, %v1800
    %v1804 = vmul.f32 %v1788, %v1801
    %v1805 = vmul.f32 %v1790, %v1802
    %v1806 = vpack.c.bf16 %v1804, %v1803
    %v1807 = vpack.c.bf16 %v1805, %v1805
    %1808 = vrot.lane.b32.xlu0 %v1705, 64
    %v1809 = vpop.permute.xlu0 %1808
    %1810 = vrot.lane.b32.xlu0 %v1706, 64
    %v1811 = vpop.permute.xlu0 %1810
    %v1814 = vsel %vm428, %v1806, 0
    %v1817 = vsel %vm428, %v1807, 0
    %v1820 = vsel %vm475, %v1811, 0
    %1822 = vmatprep.subr.bf16.mxu0 0
    %1823 = vmatpush1.bf16.msra.mxu0 %v1809
    %1824 = vmatprep.subr.bf16.mxu0 0
    %1825 = vmatpush1.bf16.msra.mxu0 %v1820
    %1826 = vmatprep.subr.bf16.mxu0 0
    %1827 = vmatpush1.bf16.msra.mxu0 0
    %1828 = vmatprep.subr.bf16.mxu0 0
    %1829 = vmatpush1.bf16.msra.mxu0 0
    %1830 = vmatprep.subr.bf16.mxu0 0
    %1831 = vmatpush1.bf16.msra.mxu0 0
    %1832 = vmatprep.subr.bf16.mxu0 0
    %1833 = vmatpush1.bf16.msra.mxu0 0
    %1834 = vmatprep.subr.bf16.mxu0 0
    %1835 = vmatpush1.bf16.msra.mxu0 0
    %1836 = vmatprep.subr.bf16.mxu0 0
    %1837 = vmatpush1.bf16.msra.mxu0 0
    %1838 = vmatprep.subr.bf16.mxu0 0
    %1839 = vmatpush1.bf16.msra.mxu0 0
    %1840 = vmatprep.subr.bf16.mxu0 0
    %1841 = vmatpush1.bf16.msra.mxu0 0
    %1842 = vmatprep.subr.bf16.mxu0 0
    %1843 = vmatpush1.bf16.msra.mxu0 0
    %1844 = vmatprep.subr.bf16.mxu0 0
    %1845 = vmatpush1.bf16.msra.mxu0 0
    %1846 = vmatprep.subr.bf16.mxu0 0
    %1847 = vmatpush1.bf16.msra.mxu0 0
    %1848 = vmatprep.subr.bf16.mxu0 0
    %1849 = vmatpush1.bf16.msra.mxu0 0
    %1850 = vmatprep.subr.bf16.mxu0 0
    %1851 = vmatpush1.bf16.msra.mxu0 0
    %1852 = vmatprep.subr.bf16.mxu0 0
    %1853 = vmatpush1.bf16.msra.mxu0 0
    %1854 = vmatprep.mubr.bf16.mxu0 0
    %1855 = vmatmul.mubr.bf16.gmra.mrb[0].mxu0 %v1814
    %v1856 = vpop.f32.mrb[0].mxu0
    %v1857 = vadd.f32 0.0, %v1856
    %v1858 = vpop.f32.mrb[0].mxu0
    %v1859 = vpop.f32.mrb[0].mxu0
    %v1860 = vadd.f32 0.0, %v1859
    %v1861 = vpop.f32.mrb[0].mxu0
    %1862 = vmatprep.mubr.bf16.mxu0 0
    %1863 = vmatmul.mubr.bf16.gmra.mrb[0].mxu0 %v1817
    %v1864 = vpop.f32.mrb[0].mxu0
    %v1865 = vadd.f32 0.0, %v1864
    %v1866 = vpop.f32.mrb[0].mxu0
    %v1867 = vpop.f32.mrb[0].mxu0
    %v1868 = vpop.f32.mrb[0].mxu0
    %1869 = vdwg.mxu0
    %1870 = vrot.lane.b32.xlu0 %v1705, 112
    %v1871 = vpop.permute.xlu0 %1870
    %1872 = vrot.lane.b32.xlu0 %v1706, 112
    %v1873 = vpop.permute.xlu0 %1872
    %1874 = vrot.lane.b32.xlu0 %v1705, 80
    %v1875 = vpop.permute.xlu0 %1874
    %1876 = vrot.lane.b32.xlu0 %v1706, 80
    %v1877 = vpop.permute.xlu0 %1876
    %v1879 = vsel %vm367, %v1871, 0
    %v1882 = vsel %vm367, %v1873, 0
    %v1885 = vsel %vm367, %v1875, 0
    %v1888 = vsel %vm367, %v1877, 0
    %1890 = vmatprep.subr.bf16.mxu0 0
    %1891 = vmatpush1.bf16.xpose.msra.mxu0 %v1885
    %1892 = vmatprep.subr.bf16.mxu0 0
    %1893 = vmatpush1.bf16.xpose.msra.mxu0 %v1888
    %1894 = vmatprep.subr.bf16.mxu0 0
    %1895 = vmatpush1.bf16.xpose.msra.mxu0 0
    %1896 = vmatprep.subr.bf16.mxu0 0
    %1897 = vmatpush1.bf16.xpose.msra.mxu0 0
    %1898 = vmatprep.subr.bf16.mxu0 0
    %1899 = vmatpush1.bf16.xpose.msra.mxu0 0
    %1900 = vmatprep.subr.bf16.mxu0 0
    %1901 = vmatpush1.bf16.xpose.msra.mxu0 0
    %1902 = vmatprep.subr.bf16.mxu0 0
    %1903 = vmatpush1.bf16.xpose.msra.mxu0 0
    %1904 = vmatprep.subr.bf16.mxu0 0
    %1905 = vmatpush1.bf16.xpose.msra.mxu0 0
    %1906 = vmatprep.subr.bf16.mxu0 0
    %1907 = vmatpush1.bf16.xpose.msra.mxu0 0
    %1908 = vmatprep.subr.bf16.mxu0 0
    %1909 = vmatpush1.bf16.xpose.msra.mxu0 0
    %1910 = vmatprep.subr.bf16.mxu0 0
    %1911 = vmatpush1.bf16.xpose.msra.mxu0 0
    %1912 = vmatprep.subr.bf16.mxu0 0
    %1913 = vmatpush1.bf16.xpose.msra.mxu0 0
    %1914 = vmatprep.subr.bf16.mxu0 0
    %1915 = vmatpush1.bf16.xpose.msra.mxu0 0
    %1916 = vmatprep.subr.bf16.mxu0 0
    %1917 = vmatpush1.bf16.xpose.msra.mxu0 0
    %1918 = vmatprep.subr.bf16.mxu0 0
    %1919 = vmatpush1.bf16.xpose.msra.mxu0 0
    %1920 = vmatprep.subr.bf16.mxu0 0
    %1921 = vmatpush1.bf16.xpose.msra.mxu0 0
    %1922 = vmatprep.mubr.bf16.mxu0 0
    %1923 = vmatmul.mubr.bf16.gmra.mrb[0].mxu0 %v1879
    %v1924 = vpop.f32.mrb[0].mxu0
    %v1925 = vadd.f32 %v168, %v1924
    %v1926 = vpop.f32.mrb[0].mxu0
    %v1927 = vpop.f32.mrb[0].mxu0
    %v1928 = vadd.f32 %v168, %v1927
    %v1929 = vpop.f32.mrb[0].mxu0
    %1930 = vmatprep.mubr.bf16.mxu0 0
    %1931 = vmatmul.mubr.bf16.gmra.mrb[0].mxu0 %v1882
    %v1932 = vpop.f32.mrb[0].mxu0
    %v1933 = vadd.f32 %v168, %v1932
    %v1934 = vpop.f32.mrb[0].mxu0
    %v1935 = vpop.f32.mrb[0].mxu0
    %v1936 = vpop.f32.mrb[0].mxu0
    %1937 = vdwg.mxu0
    %v1938 = vsel %vm428, %v1925, -inf
    %1939 = vmax.xlane.f32.xlu0 %v1938
    %v1940 = vpop.xlane.xlu0 %1939
    %v1941 = vsel %vm428, %v1928, -inf
    %1942 = vmax.xlane.f32.xlu0 %v1941
    %v1943 = vpop.xlane.xlu0 %1942
    %v1944 = vsel %vm428, %v1933, -inf
    %1945 = vmax.xlane.f32.xlu0 %v1944
    %v1946 = vpop.xlane.xlu0 %1945
    %v1947 = vsub.f32 %v1925, %v1940
    %v1948 = vsub.f32 %v1928, %v1943
    %v1949 = vsub.f32 %v1933, %v1946
    %v1950 = vmul.f32 %v1947, 1.442695
    %v1951 = vpow.pop %v1950
    %v1952 = vmul.f32 %v1948, 1.442695
    %v1953 = vpow.pop %v1952
    %v1954 = vmul.f32 %v1949, 1.442695
    %v1955 = vpow.pop %v1954
    %v1956 = vsel %vm428, %v1951, 0.0
    %1957 = vadd.xlane.f32.xlu0 %v1956
    %v1958 = vpop.xlane.xlu0 %1957
    %v1959 = vsel %vm428, %v1953, 0.0
    %1960 = vadd.xlane.f32.xlu0 %v1959
    %v1961 = vpop.xlane.xlu0 %1960
    %v1962 = vsel %vm428, %v1955, 0.0
    %1963 = vadd.xlane.f32.xlu0 %v1962
    %v1964 = vpop.xlane.xlu0 %1963
    %v1965 = vrcp.pop %v1958
    %v1966 = vrcp.pop %v1961
    %v1967 = vrcp.pop %v1964
    %v1968 = vmul.f32 %v1951, %v1965
    %v1969 = vmul.f32 %v1953, %v1966
    %v1970 = vmul.f32 %v1955, %v1967
    %v1971 = vpack.c.bf16 %v1969, %v1968
    %v1972 = vpack.c.bf16 %v1970, %v1970
    %1973 = vrot.lane.b32.xlu0 %v1705, 48
    %v1974 = vpop.permute.xlu0 %1973
    %1975 = vrot.lane.b32.xlu0 %v1706, 48
    %v1976 = vpop.permute.xlu0 %1975
    %v1979 = vsel %vm428, %v1971, 0
    %v1982 = vsel %vm428, %v1972, 0
    %v1985 = vsel %vm475, %v1976, 0
    %1987 = vmatprep.subr.bf16.mxu0 0
    %1988 = vmatpush1.bf16.msra.mxu0 %v1974
    %1989 = vmatprep.subr.bf16.mxu0 0
    %1990 = vmatpush1.bf16.msra.mxu0 %v1985
    %1991 = vmatprep.subr.bf16.mxu0 0
    %1992 = vmatpush1.bf16.msra.mxu0 0
    %1993 = vmatprep.subr.bf16.mxu0 0
    %1994 = vmatpush1.bf16.msra.mxu0 0
    %1995 = vmatprep.subr.bf16.mxu0 0
    %1996 = vmatpush1.bf16.msra.mxu0 0
    %1997 = vmatprep.subr.bf16.mxu0 0
    %1998 = vmatpush1.bf16.msra.mxu0 0
    %1999 = vmatprep.subr.bf16.mxu0 0
    %2000 = vmatpush1.bf16.msra.mxu0 0
    %2001 = vmatprep.subr.bf16.mxu0 0
    %2002 = vmatpush1.bf16.msra.mxu0 0
    %2003 = vmatprep.subr.bf16.mxu0 0
    %2004 = vmatpush1.bf16.msra.mxu0 0
    %2005 = vmatprep.subr.bf16.mxu0 0
    %2006 = vmatpush1.bf16.msra.mxu0 0
    %2007 = vmatprep.subr.bf16.mxu0 0
    %2008 = vmatpush1.bf16.msra.mxu0 0
    %2009 = vmatprep.subr.bf16.mxu0 0
    %2010 = vmatpush1.bf16.msra.mxu0 0
    %2011 = vmatprep.subr.bf16.mxu0 0
    %2012 = vmatpush1.bf16.msra.mxu0 0
    %2013 = vmatprep.subr.bf16.mxu0 0
    %2014 = vmatpush1.bf16.msra.mxu0 0
    %2015 = vmatprep.subr.bf16.mxu0 0
    %2016 = vmatpush1.bf16.msra.mxu0 0
    %2017 = vmatprep.subr.bf16.mxu0 0
    %2018 = vmatpush1.bf16.msra.mxu0 0
    %2019 = vmatprep.mubr.bf16.mxu0 0
    %2020 = vmatmul.mubr.bf16.gmra.mrb[0].mxu0 %v1979
    %v2021 = vpop.f32.mrb[0].mxu0
    %v2022 = vadd.f32 0.0, %v2021
    %v2023 = vpop.f32.mrb[0].mxu0
    %v2024 = vpop.f32.mrb[0].mxu0
    %v2025 = vadd.f32 0.0, %v2024
    %v2026 = vpop.f32.mrb[0].mxu0
    %2027 = vmatprep.mubr.bf16.mxu0 0
    %2028 = vmatmul.mubr.bf16.gmra.mrb[0].mxu0 %v1982
    %v2029 = vpop.f32.mrb[0].mxu0
    %v2030 = vadd.f32 0.0, %v2029
    %v2031 = vpop.f32.mrb[0].mxu0
    %v2032 = vpop.f32.mrb[0].mxu0
    %v2033 = vpop.f32.mrb[0].mxu0
    %2034 = vdwg.mxu0
    %2038 = vrot.lane.b32.xlu0 %v2022, 16
    %v2039 = vpop.permute.xlu0 %2038
    %2040 = vrot.lane.b32.xlu0 %v2025, 16
    %v2041 = vpop.permute.xlu0 %2040
    %2042 = vrot.lane.b32.xlu0 %v2030, 16
    %v2043 = vpop.permute.xlu0 %2042
    %v2047 = vsel %vm367, %v1857, %v2039
    %v2048 = vsel %vm367, %v1860, %v2041
    %v2049 = vsel %vm367, %v1865, %v2043
    %v2050 = vpack.c.bf16 %v1699, %v1694
    %v2051 = vpack.c.bf16 %v1702, %v1702
    %2054 = vrot.lane.b32.xlu0 %v2050, 96
    %v2055 = vpop.permute.xlu0 %2054
    %2056 = vrot.lane.b32.xlu0 %v2051, 96
    %v2057 = vpop.permute.xlu0 %2056
    %v2059 = vsel %vm367, %v2050, 0
    %v2062 = vsel %vm367, %v2051, 0
    %v2065 = vsel %vm367, %v2055, 0
    %v2068 = vsel %vm367, %v2057, 0
    %2070 = vmatprep.subr.bf16.mxu0 0
    %2071 = vmatpush1.bf16.xpose.msra.mxu0 %v2065
    %2072 = vmatprep.subr.bf16.mxu0 0
    %2073 = vmatpush1.bf16.xpose.msra.mxu0 %v2068
    %2074 = vmatprep.subr.bf16.mxu0 0
    %2075 = vmatpush1.bf16.xpose.msra.mxu0 0
    %2076 = vmatprep.subr.bf16.mxu0 0
    %2077 = vmatpush1.bf16.xpose.msra.mxu0 0
    %2078 = vmatprep.subr.bf16.mxu0 0
    %2079 = vmatpush1.bf16.xpose.msra.mxu0 0
    %2080 = vmatprep.subr.bf16.mxu0 0
    %2081 = vmatpush1.bf16.xpose.msra.mxu0 0
    %2082 = vmatprep.subr.bf16.mxu0 0
    %2083 = vmatpush1.bf16.xpose.msra.mxu0 0
    %2084 = vmatprep.subr.bf16.mxu0 0
    %2085 = vmatpush1.bf16.xpose.msra.mxu0 0
    %2086 = vmatprep.subr.bf16.mxu0 0
    %2087 = vmatpush1.bf16.xpose.msra.mxu0 0
    %2088 = vmatprep.subr.bf16.mxu0 0
    %2089 = vmatpush1.bf16.xpose.msra.mxu0 0
    %2090 = vmatprep.subr.bf16.mxu0 0
    %2091 = vmatpush1.bf16.xpose.msra.mxu0 0
    %2092 = vmatprep.subr.bf16.mxu0 0
    %2093 = vmatpush1.bf16.xpose.msra.mxu0 0
    %2094 = vmatprep.subr.bf16.mxu0 0
    %2095 = vmatpush1.bf16.xpose.msra.mxu0 0
    %2096 = vmatprep.subr.bf16.mxu0 0
    %2097 = vmatpush1.bf16.xpose.msra.mxu0 0
    %2098 = vmatprep.subr.bf16.mxu0 0
    %2099 = vmatpush1.bf16.xpose.msra.mxu0 0
    %2100 = vmatprep.subr.bf16.mxu0 0
    %2101 = vmatpush1.bf16.xpose.msra.mxu0 0
    %2102 = vmatprep.mubr.bf16.mxu0 0
    %2103 = vmatmul.mubr.bf16.gmra.mrb[0].mxu0 %v2059
    %v2104 = vpop.f32.mrb[0].mxu0
    %v2105 = vadd.f32 %v168, %v2104
    %v2106 = vpop.f32.mrb[0].mxu0
    %v2107 = vpop.f32.mrb[0].mxu0
    %v2108 = vadd.f32 %v168, %v2107
    %v2109 = vpop.f32.mrb[0].mxu0
    %2110 = vmatprep.mubr.bf16.mxu0 0
    %2111 = vmatmul.mubr.bf16.gmra.mrb[0].mxu0 %v2062
    %v2112 = vpop.f32.mrb[0].mxu0
    %v2113 = vadd.f32 %v168, %v2112
    %v2114 = vpop.f32.mrb[0].mxu0
    %v2115 = vpop.f32.mrb[0].mxu0
    %v2116 = vpop.f32.mrb[0].mxu0
    %2117 = vdwg.mxu0
    %v2118 = vsel %vm428, %v2105, -inf
    %2119 = vmax.xlane.f32.xlu0 %v2118
    %v2120 = vpop.xlane.xlu0 %2119
    %v2121 = vsel %vm428, %v2108, -inf
    %2122 = vmax.xlane.f32.xlu0 %v2121
    %v2123 = vpop.xlane.xlu0 %2122
    %v2124 = vsel %vm428, %v2113, -inf
    %2125 = vmax.xlane.f32.xlu0 %v2124
    %v2126 = vpop.xlane.xlu0 %2125
    %v2127 = vsub.f32 %v2105, %v2120
    %v2128 = vsub.f32 %v2108, %v2123
    %v2129 = vsub.f32 %v2113, %v2126
    %v2130 = vmul.f32 %v2127, 1.442695
    %v2131 = vpow.pop %v2130
    %v2132 = vmul.f32 %v2128, 1.442695
    %v2133 = vpow.pop %v2132
    %v2134 = vmul.f32 %v2129, 1.442695
    %v2135 = vpow.pop %v2134
    %v2136 = vsel %vm428, %v2131, 0.0
    %2137 = vadd.xlane.f32.xlu0 %v2136
    %v2138 = vpop.xlane.xlu0 %2137
    %v2139 = vsel %vm428, %v2133, 0.0
    %2140 = vadd.xlane.f32.xlu0 %v2139
    %v2141 = vpop.xlane.xlu0 %2140
    %v2142 = vsel %vm428, %v2135, 0.0
    %2143 = vadd.xlane.f32.xlu0 %v2142
    %v2144 = vpop.xlane.xlu0 %2143
    %v2145 = vrcp.pop %v2138
    %v2146 = vrcp.pop %v2141
    %v2147 = vrcp.pop %v2144
    %v2148 = vmul.f32 %v2131, %v2145
    %v2149 = vmul.f32 %v2133, %v2146
    %v2150 = vmul.f32 %v2135, %v2147
    %v2151 = vpack.c.bf16 %v2149, %v2148
    %v2152 = vpack.c.bf16 %v2150, %v2150
    %2153 = vrot.lane.b32.xlu0 %v2050, 64
    %v2154 = vpop.permute.xlu0 %2153
    %2155 = vrot.lane.b32.xlu0 %v2051, 64
    %v2156 = vpop.permute.xlu0 %2155
    %v2159 = vsel %vm428, %v2151, 0
    %v2162 = vsel %vm428, %v2152, 0
    %v2165 = vsel %vm475, %v2156, 0
    %2167 = vmatprep.subr.bf16.mxu0 0
    %2168 = vmatpush1.bf16.msra.mxu0 %v2154
    %2169 = vmatprep.subr.bf16.mxu0 0
    %2170 = vmatpush1.bf16.msra.mxu0 %v2165
    %2171 = vmatprep.subr.bf16.mxu0 0
    %2172 = vmatpush1.bf16.msra.mxu0 0
    %2173 = vmatprep.subr.bf16.mxu0 0
    %2174 = vmatpush1.bf16.msra.mxu0 0
    %2175 = vmatprep.subr.bf16.mxu0 0
    %2176 = vmatpush1.bf16.msra.mxu0 0
    %2177 = vmatprep.subr.bf16.mxu0 0
    %2178 = vmatpush1.bf16.msra.mxu0 0
    %2179 = vmatprep.subr.bf16.mxu0 0
    %2180 = vmatpush1.bf16.msra.mxu0 0
    %2181 = vmatprep.subr.bf16.mxu0 0
    %2182 = vmatpush1.bf16.msra.mxu0 0
    %2183 = vmatprep.subr.bf16.mxu0 0
    %2184 = vmatpush1.bf16.msra.mxu0 0
    %2185 = vmatprep.subr.bf16.mxu0 0
    %2186 = vmatpush1.bf16.msra.mxu0 0
    %2187 = vmatprep.subr.bf16.mxu0 0
    %2188 = vmatpush1.bf16.msra.mxu0 0
    %2189 = vmatprep.subr.bf16.mxu0 0
    %2190 = vmatpush1.bf16.msra.mxu0 0
    %2191 = vmatprep.subr.bf16.mxu0 0
    %2192 = vmatpush1.bf16.msra.mxu0 0
    %2193 = vmatprep.subr.bf16.mxu0 0
    %2194 = vmatpush1.bf16.msra.mxu0 0
    %2195 = vmatprep.subr.bf16.mxu0 0
    %2196 = vmatpush1.bf16.msra.mxu0 0
    %2197 = vmatprep.subr.bf16.mxu0 0
    %2198 = vmatpush1.bf16.msra.mxu0 0
    %2199 = vmatprep.mubr.bf16.mxu0 0
    %2200 = vmatmul.mubr.bf16.gmra.mrb[0].mxu0 %v2159
    %v2201 = vpop.f32.mrb[0].mxu0
    %v2202 = vadd.f32 0.0, %v2201
    %v2203 = vpop.f32.mrb[0].mxu0
    %v2204 = vpop.f32.mrb[0].mxu0
    %v2205 = vadd.f32 0.0, %v2204
    %v2206 = vpop.f32.mrb[0].mxu0
    %2207 = vmatprep.mubr.bf16.mxu0 0
    %2208 = vmatmul.mubr.bf16.gmra.mrb[0].mxu0 %v2162
    %v2209 = vpop.f32.mrb[0].mxu0
    %v2210 = vadd.f32 0.0, %v2209
    %v2211 = vpop.f32.mrb[0].mxu0
    %v2212 = vpop.f32.mrb[0].mxu0
    %v2213 = vpop.f32.mrb[0].mxu0
    %2214 = vdwg.mxu0
    %2215 = vrot.lane.b32.xlu0 %v2050, 112
    %v2216 = vpop.permute.xlu0 %2215
    %2217 = vrot.lane.b32.xlu0 %v2051, 112
    %v2218 = vpop.permute.xlu0 %2217
    %2219 = vrot.lane.b32.xlu0 %v2050, 80
    %v2220 = vpop.permute.xlu0 %2219
    %2221 = vrot.lane.b32.xlu0 %v2051, 80
    %v2222 = vpop.permute.xlu0 %2221
    %v2224 = vsel %vm367, %v2216, 0
    %v2227 = vsel %vm367, %v2218, 0
    %v2230 = vsel %vm367, %v2220, 0
    %v2233 = vsel %vm367, %v2222, 0
    %2235 = vmatprep.subr.bf16.mxu0 0
    %2236 = vmatpush1.bf16.xpose.msra.mxu0 %v2230
    %2237 = vmatprep.subr.bf16.mxu0 0
    %2238 = vmatpush1.bf16.xpose.msra.mxu0 %v2233
    %2239 = vmatprep.subr.bf16.mxu0 0
    %2240 = vmatpush1.bf16.xpose.msra.mxu0 0
    %2241 = vmatprep.subr.bf16.mxu0 0
    %2242 = vmatpush1.bf16.xpose.msra.mxu0 0
    %2243 = vmatprep.subr.bf16.mxu0 0
    %2244 = vmatpush1.bf16.xpose.msra.mxu0 0
    %2245 = vmatprep.subr.bf16.mxu0 0
    %2246 = vmatpush1.bf16.xpose.msra.mxu0 0
    %2247 = vmatprep.subr.bf16.mxu0 0
    %2248 = vmatpush1.bf16.xpose.msra.mxu0 0
    %2249 = vmatprep.subr.bf16.mxu0 0
    %2250 = vmatpush1.bf16.xpose.msra.mxu0 0
    %2251 = vmatprep.subr.bf16.mxu0 0
    %2252 = vmatpush1.bf16.xpose.msra.mxu0 0
    %2253 = vmatprep.subr.bf16.mxu0 0
    %2254 = vmatpush1.bf16.xpose.msra.mxu0 0
    %2255 = vmatprep.subr.bf16.mxu0 0
    %2256 = vmatpush1.bf16.xpose.msra.mxu0 0
    %2257 = vmatprep.subr.bf16.mxu0 0
    %2258 = vmatpush1.bf16.xpose.msra.mxu0 0
    %2259 = vmatprep.subr.bf16.mxu0 0
    %2260 = vmatpush1.bf16.xpose.msra.mxu0 0
    %2261 = vmatprep.subr.bf16.mxu0 0
    %2262 = vmatpush1.bf16.xpose.msra.mxu0 0
    %2263 = vmatprep.subr.bf16.mxu0 0
    %2264 = vmatpush1.bf16.xpose.msra.mxu0 0
    %2265 = vmatprep.subr.bf16.mxu0 0
    %2266 = vmatpush1.bf16.xpose.msra.mxu0 0
    %2267 = vmatprep.mubr.bf16.mxu0 0
    %2268 = vmatmul.mubr.bf16.gmra.mrb[0].mxu0 %v2224
    %v2269 = vpop.f32.mrb[0].mxu0
    %v2270 = vadd.f32 %v168, %v2269
    %v2271 = vpop.f32.mrb[0].mxu0
    %v2272 = vpop.f32.mrb[0].mxu0
    %v2273 = vadd.f32 %v168, %v2272
    %v2274 = vpop.f32.mrb[0].mxu0
    %2275 = vmatprep.mubr.bf16.mxu0 0
    %2276 = vmatmul.mubr.bf16.gmra.mrb[0].mxu0 %v2227
    %v2277 = vpop.f32.mrb[0].mxu0
    %v2278 = vadd.f32 %v168, %v2277
    %v2279 = vpop.f32.mrb[0].mxu0
    %v2280 = vpop.f32.mrb[0].mxu0
    %v2281 = vpop.f32.mrb[0].mxu0
    %2282 = vdwg.mxu0
    %v2283 = vsel %vm428, %v2270, -inf
    %2284 = vmax.xlane.f32.xlu0 %v2283
    %v2285 = vpop.xlane.xlu0 %2284
    %v2286 = vsel %vm428, %v2273, -inf
    %2287 = vmax.xlane.f32.xlu0 %v2286
    %v2288 = vpop.xlane.xlu0 %2287
    %v2289 = vsel %vm428, %v2278, -inf
    %2290 = vmax.xlane.f32.xlu0 %v2289
    %v2291 = vpop.xlane.xlu0 %2290
    %v2292 = vsub.f32 %v2270, %v2285
    %v2293 = vsub.f32 %v2273, %v2288
    %v2294 = vsub.f32 %v2278, %v2291
    %v2295 = vmul.f32 %v2292, 1.442695
    %v2296 = vpow.pop %v2295
    %v2297 = vmul.f32 %v2293, 1.442695
    %v2298 = vpow.pop %v2297
    %v2299 = vmul.f32 %v2294, 1.442695
    %v2300 = vpow.pop %v2299
    %v2301 = vsel %vm428, %v2296, 0.0
    %2302 = vadd.xlane.f32.xlu0 %v2301
    %v2303 = vpop.xlane.xlu0 %2302
    %v2304 = vsel %vm428, %v2298, 0.0
    %2305 = vadd.xlane.f32.xlu0 %v2304
    %v2306 = vpop.xlane.xlu0 %2305
    %v2307 = vsel %vm428, %v2300, 0.0
    %2308 = vadd.xlane.f32.xlu0 %v2307
    %v2309 = vpop.xlane.xlu0 %2308
    %v2310 = vrcp.pop %v2303
    %v2311 = vrcp.pop %v2306
    %v2312 = vrcp.pop %v2309
    %v2313 = vmul.f32 %v2296, %v2310
    %v2314 = vmul.f32 %v2298, %v2311
    %v2315 = vmul.f32 %v2300, %v2312
    %v2316 = vpack.c.bf16 %v2314, %v2313
    %v2317 = vpack.c.bf16 %v2315, %v2315
    %2318 = vrot.lane.b32.xlu0 %v2050, 48
    %v2319 = vpop.permute.xlu0 %2318
    %2320 = vrot.lane.b32.xlu0 %v2051, 48
    %v2321 = vpop.permute.xlu0 %2320
    %v2324 = vsel %vm428, %v2316, 0
    %v2327 = vsel %vm428, %v2317, 0
    %v2330 = vsel %vm475, %v2321, 0
    %2332 = vmatprep.subr.bf16.mxu0 0
    %2333 = vmatpush1.bf16.msra.mxu0 %v2319
    %2334 = vmatprep.subr.bf16.mxu0 0
    %2335 = vmatpush1.bf16.msra.mxu0 %v2330
    %2336 = vmatprep.subr.bf16.mxu0 0
    %2337 = vmatpush1.bf16.msra.mxu0 0
    %2338 = vmatprep.subr.bf16.mxu0 0
    %2339 = vmatpush1.bf16.msra.mxu0 0
    %2340 = vmatprep.subr.bf16.mxu0 0
    %2341 = vmatpush1.bf16.msra.mxu0 0
    %2342 = vmatprep.subr.bf16.mxu0 0
    %2343 = vmatpush1.bf16.msra.mxu0 0
    %2344 = vmatprep.subr.bf16.mxu0 0
    %2345 = vmatpush1.bf16.msra.mxu0 0
    %2346 = vmatprep.subr.bf16.mxu0 0
    %2347 = vmatpush1.bf16.msra.mxu0 0
    %2348 = vmatprep.subr.bf16.mxu0 0
    %2349 = vmatpush1.bf16.msra.mxu0 0
    %2350 = vmatprep.subr.bf16.mxu0 0
    %2351 = vmatpush1.bf16.msra.mxu0 0
    %2352 = vmatprep.subr.bf16.mxu0 0
    %2353 = vmatpush1.bf16.msra.mxu0 0
    %2354 = vmatprep.subr.bf16.mxu0 0
    %2355 = vmatpush1.bf16.msra.mxu0 0
    %2356 = vmatprep.subr.bf16.mxu0 0
    %2357 = vmatpush1.bf16.msra.mxu0 0
    %2358 = vmatprep.subr.bf16.mxu0 0
    %2359 = vmatpush1.bf16.msra.mxu0 0
    %2360 = vmatprep.subr.bf16.mxu0 0
    %2361 = vmatpush1.bf16.msra.mxu0 0
    %2362 = vmatprep.subr.bf16.mxu0 0
    %2363 = vmatpush1.bf16.msra.mxu0 0
    %2364 = vmatprep.mubr.bf16.mxu0 0
    %2365 = vmatmul.mubr.bf16.gmra.mrb[0].mxu0 %v2324
    %v2366 = vpop.f32.mrb[0].mxu0
    %v2367 = vadd.f32 0.0, %v2366
    %v2368 = vpop.f32.mrb[0].mxu0
    %v2369 = vpop.f32.mrb[0].mxu0
    %v2370 = vadd.f32 0.0, %v2369
    %v2371 = vpop.f32.mrb[0].mxu0
    %2372 = vmatprep.mubr.bf16.mxu0 0
    %2373 = vmatmul.mubr.bf16.gmra.mrb[0].mxu0 %v2327
    %v2374 = vpop.f32.mrb[0].mxu0
    %v2375 = vadd.f32 0.0, %v2374
    %v2376 = vpop.f32.mrb[0].mxu0
    %v2377 = vpop.f32.mrb[0].mxu0
    %v2378 = vpop.f32.mrb[0].mxu0
    %2379 = vdwg.mxu0
    %2383 = vrot.lane.b32.xlu0 %v2367, 16
    %v2384 = vpop.permute.xlu0 %2383
    %2385 = vrot.lane.b32.xlu0 %v2370, 16
    %v2386 = vpop.permute.xlu0 %2385
    %2387 = vrot.lane.b32.xlu0 %v2375, 16
    %v2388 = vpop.permute.xlu0 %2387
    %v2392 = vsel %vm367, %v2202, %v2384
    %v2393 = vsel %vm367, %v2205, %v2386
    %v2394 = vsel %vm367, %v2210, %v2388
    %v2395 = vpack.c.bf16 %v2048, %v2047
    %v2396 = vpack.c.bf16 %v2392, %v2049
    %v2397 = vpack.c.bf16 %v2394, %v2393
    %2398 = vrot.lane.b32.xlu0 %v1635, 32
    %v2399 = vpop.permute.xlu0 %2398
    %2400 = vrot.lane.b32.xlu0 %v1636, 32
    %v2401 = vpop.permute.xlu0 %2400
    %v2405 = vsel %vm174, %v2395, 0
    %v2408 = vsel %vm174, %v2396, 0
    %v2411 = vsel %vm174, %v2397, 0
    %2413 = vmatprep.subr.bf16.mxu0 0
    %2414 = vmatpush1.bf16.msra.mxu0 %v2399
    %2415 = vmatprep.subr.bf16.mxu0 0
    %2416 = vmatpush1.bf16.msra.mxu0 %v2401
    %2417 = vmatprep.subr.bf16.mxu0 0
    %2418 = vmatpush1.bf16.msra.mxu0 0
    %2419 = vmatprep.subr.bf16.mxu0 0
    %2420 = vmatpush1.bf16.msra.mxu0 0
    %2421 = vmatprep.subr.bf16.mxu0 0
    %2422 = vmatpush1.bf16.msra.mxu0 0
    %2423 = vmatprep.subr.bf16.mxu0 0
    %2424 = vmatpush1.bf16.msra.mxu0 0
    %2425 = vmatprep.subr.bf16.mxu0 0
    %2426 = vmatpush1.bf16.msra.mxu0 0
    %2427 = vmatprep.subr.bf16.mxu0 0
    %2428 = vmatpush1.bf16.msra.mxu0 0
    %2429 = vmatprep.subr.bf16.mxu0 0
    %2430 = vmatpush1.bf16.msra.mxu0 0
    %2431 = vmatprep.subr.bf16.mxu0 0
    %2432 = vmatpush1.bf16.msra.mxu0 0
    %2433 = vmatprep.subr.bf16.mxu0 0
    %2434 = vmatpush1.bf16.msra.mxu0 0
    %2435 = vmatprep.subr.bf16.mxu0 0
    %2436 = vmatpush1.bf16.msra.mxu0 0
    %2437 = vmatprep.subr.bf16.mxu0 0
    %2438 = vmatpush1.bf16.msra.mxu0 0
    %2439 = vmatprep.subr.bf16.mxu0 0
    %2440 = vmatpush1.bf16.msra.mxu0 0
    %2441 = vmatprep.subr.bf16.mxu0 0
    %2442 = vmatpush1.bf16.msra.mxu0 0
    %2443 = vmatprep.subr.bf16.mxu0 0
    %2444 = vmatpush1.bf16.msra.mxu0 0
    %2445 = vmatprep.mubr.bf16.mxu0 0
    %2446 = vmatmul.mubr.bf16.gmra.mrb[0].mxu0 %v2405
    %v2447 = vpop.f32.mrb[0].mxu0
    %v2448 = vadd.f32 0.0, %v2447
    %v2449 = vpop.f32.mrb[0].mxu0
    %v2450 = vpop.f32.mrb[0].mxu0
    %v2451 = vadd.f32 0.0, %v2450
    %v2452 = vpop.f32.mrb[0].mxu0
    %2453 = vmatprep.mubr.bf16.mxu0 0
    %2454 = vmatmul.mubr.bf16.gmra.mrb[0].mxu0 %v2408
    %v2455 = vpop.f32.mrb[0].mxu0
    %v2456 = vadd.f32 0.0, %v2455
    %v2457 = vpop.f32.mrb[0].mxu0
    %v2458 = vpop.f32.mrb[0].mxu0
    %v2459 = vadd.f32 0.0, %v2458
    %v2460 = vpop.f32.mrb[0].mxu0
    %2461 = vmatprep.mubr.bf16.mxu0 0
    %2462 = vmatmul.mubr.bf16.gmra.mrb[0].mxu0 %v2411
    %v2463 = vpop.f32.mrb[0].mxu0
    %v2464 = vadd.f32 0.0, %v2463
    %v2465 = vpop.f32.mrb[0].mxu0
    %v2466 = vpop.f32.mrb[0].mxu0
    %v2467 = vadd.f32 0.0, %v2466
    %v2468 = vpop.f32.mrb[0].mxu0
    %2469 = vdwg.mxu0
    %v2470 = vadd.f32 %v1510, %v2448
    %v2471 = vadd.f32 %v1511, %v2451
    %v2472 = vadd.f32 %v1512, %v2456
    %v2473 = vadd.f32 %v1513, %v2459
    %v2474 = vadd.f32 %v1514, %v2464
    %v2475 = vadd.f32 %v1515, %v2467
    %v2476 = vlaneseq
    %v2477 = vshrl.u32 %v2476, 7
    %v2478 = vsub.s32 4, %v2477
    %v2479 = vrot.slane %v1521, %v2478
    %v2480 = vadd.f32 %v2470, %v2479
    %v2481 = vadd.f32 %v2471, %v2479
    %v2482 = vadd.f32 %v2472, %v2479
    %v2483 = vadd.f32 %v2473, %v2479
    %v2484 = vadd.f32 %v2474, %v2479
    %v2485 = vadd.f32 %v2475, %v2479
    %v2486 = vsel %vm174, %v2480, 0.0
    %2487 = vadd.xlane.f32.xlu0 %v2486
    %v2488 = vpop.xlane.xlu0 %2487
    %v2489 = vsel %vm174, %v2481, 0.0
    %2490 = vadd.xlane.f32.xlu0 %v2489
    %v2491 = vpop.xlane.xlu0 %2490
    %v2492 = vsel %vm174, %v2482, 0.0
    %2493 = vadd.xlane.f32.xlu0 %v2492
    %v2494 = vpop.xlane.xlu0 %2493
    %v2495 = vsel %vm174, %v2483, 0.0
    %2496 = vadd.xlane.f32.xlu0 %v2495
    %v2497 = vpop.xlane.xlu0 %2496
    %v2498 = vsel %vm174, %v2484, 0.0
    %2499 = vadd.xlane.f32.xlu0 %v2498
    %v2500 = vpop.xlane.xlu0 %2499
    %v2501 = vsel %vm174, %v2485, 0.0
    %2502 = vadd.xlane.f32.xlu0 %v2501
    %v2503 = vpop.xlane.xlu0 %2502
    %v2504 = vmul.f32 %v2488, %v193
    %v2505 = vmul.f32 %v2491, %v193
    %v2506 = vmul.f32 %v2494, %v193
    %v2507 = vmul.f32 %v2497, %v193
    %v2508 = vmul.f32 %v2500, %v193
    %v2509 = vmul.f32 %v2503, %v193
    %v2510 = vsub.f32 %v2480, %v2504
    %v2511 = vsub.f32 %v2481, %v2505
    %v2512 = vsub.f32 %v2482, %v2506
    %v2513 = vsub.f32 %v2483, %v2507
    %v2514 = vsub.f32 %v2484, %v2508
    %v2515 = vsub.f32 %v2485, %v2509
    %v2516 = vmul.f32 %v2510, %v2510
    %v2517 = vmul.f32 %v2511, %v2511
    %v2518 = vmul.f32 %v2512, %v2512
    %v2519 = vmul.f32 %v2513, %v2513
    %v2520 = vmul.f32 %v2514, %v2514
    %v2521 = vmul.f32 %v2515, %v2515
    %v2522 = vsel %vm174, %v2516, 0.0
    %2523 = vadd.xlane.f32.xlu0 %v2522
    %v2524 = vpop.xlane.xlu0 %2523
    %v2525 = vsel %vm174, %v2517, 0.0
    %2526 = vadd.xlane.f32.xlu0 %v2525
    %v2527 = vpop.xlane.xlu0 %2526
    %v2528 = vsel %vm174, %v2518, 0.0
    %2529 = vadd.xlane.f32.xlu0 %v2528
    %v2530 = vpop.xlane.xlu0 %2529
    %v2531 = vsel %vm174, %v2519, 0.0
    %2532 = vadd.xlane.f32.xlu0 %v2531
    %v2533 = vpop.xlane.xlu0 %2532
    %v2534 = vsel %vm174, %v2520, 0.0
    %2535 = vadd.xlane.f32.xlu0 %v2534
    %v2536 = vpop.xlane.xlu0 %2535
    %v2537 = vsel %vm174, %v2521, 0.0
    %2538 = vadd.xlane.f32.xlu0 %v2537
    %v2539 = vpop.xlane.xlu0 %2538
    %v2540 = vmul.f32 %v2524, %v193
    %v2541 = vmul.f32 %v2527, %v193
    %v2542 = vmul.f32 %v2530, %v193
    %v2543 = vmul.f32 %v2533, %v193
    %v2544 = vmul.f32 %v2536, %v193
    %v2545 = vmul.f32 %v2539, %v193
    %v2546 = vadd.f32 %v2540, 1e-12
    %v2547 = vadd.f32 %v2541, 1e-12
    %v2548 = vadd.f32 %v2542, 1e-12
    %v2549 = vadd.f32 %v2543, 1e-12
    %v2550 = vadd.f32 %v2544, 1e-12
    %v2551 = vadd.f32 %v2545, 1e-12
    %v2552 = vrsqrt.pop %v2546
    %v2553 = vrsqrt.pop %v2547
    %v2554 = vrsqrt.pop %v2548
    %v2555 = vrsqrt.pop %v2549
    %v2556 = vrsqrt.pop %v2550
    %v2557 = vrsqrt.pop %v2551
    %v2558 = vmul.f32 %v2510, %v2552
    %v2559 = vmul.f32 %v2511, %v2553
    %v2560 = vmul.f32 %v2512, %v2554
    %v2561 = vmul.f32 %v2513, %v2555
    %v2562 = vmul.f32 %v2514, %v2556
    %v2563 = vmul.f32 %v2515, %v2557
    %v2564 = vlaneseq
    %v2565 = vshrl.u32 %v2564, 7
    %v2566 = vsub.s32 2, %v2565
    %v2567 = vrot.slane %v1521, %v2566
    %v2568 = vmul.f32 %v2558, %v2567
    %v2569 = vmul.f32 %v2559, %v2567
    %v2570 = vmul.f32 %v2560, %v2567
    %v2571 = vmul.f32 %v2561, %v2567
    %v2572 = vmul.f32 %v2562, %v2567
    %v2573 = vmul.f32 %v2563, %v2567
    %v2574 = vlaneseq
    %v2575 = vshrl.u32 %v2574, 7
    %v2576 = vsub.s32 3, %v2575
    %v2577 = vrot.slane %v1521, %v2576
    %v2578 = vadd.f32 %v2568, %v2577
    %v2579 = vadd.f32 %v2569, %v2577
    %v2580 = vadd.f32 %v2570, %v2577
    %v2581 = vadd.f32 %v2571, %v2577
    %v2582 = vadd.f32 %v2572, %v2577
    %v2583 = vadd.f32 %v2573, %v2577
    %v2584 = vpack.c.bf16 %v2579, %v2578
    %v2585 = vpack.c.bf16 %v2581, %v2580
    %v2586 = vpack.c.bf16 %v2583, %v2582
    %v2587 = vlaneseq
    %v2588 = vshrl.u32 %v2587, 7
    %v2589 = vsub.s32 6, %v2588
    %v2590 = vrot.slane %v1521, %v2589
    %v2591 = vunpack.c.h.b16 %v1517
    %v2592 = vunpack.c.h.b16 %v1518
    %v2593 = vunpack.c.h.b16 %v1519
    %v2594 = vunpack.c.h.b16 %v1520
    %v2595 = vpack.c.b16 %v2592, %v2591
    %v2596 = vpack.c.b16 %v2594, %v2593
    %v2600 = vsel %vm174, %v2584, 0
    %v2603 = vsel %vm174, %v2585, 0
    %v2606 = vsel %vm174, %v2586, 0
    %2608 = vmatprep.subr.bf16.mxu0 0
    %2609 = vmatpush1.bf16.msra.mxu0 %v2595
    %2610 = vmatprep.subr.bf16.mxu0 0
    %2611 = vmatpush1.bf16.msra.mxu0 %v2596
    %2612 = vmatprep.subr.bf16.mxu0 0
    %2613 = vmatpush1.bf16.msra.mxu0 0
    %2614 = vmatprep.subr.bf16.mxu0 0
    %2615 = vmatpush1.bf16.msra.mxu0 0
    %2616 = vmatprep.subr.bf16.mxu0 0
    %2617 = vmatpush1.bf16.msra.mxu0 0
    %2618 = vmatprep.subr.bf16.mxu0 0
    %2619 = vmatpush1.bf16.msra.mxu0 0
    %2620 = vmatprep.subr.bf16.mxu0 0
    %2621 = vmatpush1.bf16.msra.mxu0 0
    %2622 = vmatprep.subr.bf16.mxu0 0
    %2623 = vmatpush1.bf16.msra.mxu0 0
    %2624 = vmatprep.subr.bf16.mxu0 0
    %2625 = vmatpush1.bf16.msra.mxu0 0
    %2626 = vmatprep.subr.bf16.mxu0 0
    %2627 = vmatpush1.bf16.msra.mxu0 0
    %2628 = vmatprep.subr.bf16.mxu0 0
    %2629 = vmatpush1.bf16.msra.mxu0 0
    %2630 = vmatprep.subr.bf16.mxu0 0
    %2631 = vmatpush1.bf16.msra.mxu0 0
    %2632 = vmatprep.subr.bf16.mxu0 0
    %2633 = vmatpush1.bf16.msra.mxu0 0
    %2634 = vmatprep.subr.bf16.mxu0 0
    %2635 = vmatpush1.bf16.msra.mxu0 0
    %2636 = vmatprep.subr.bf16.mxu0 0
    %2637 = vmatpush1.bf16.msra.mxu0 0
    %2638 = vmatprep.subr.bf16.mxu0 0
    %2639 = vmatpush1.bf16.msra.mxu0 0
    %2640 = vmatprep.mubr.bf16.mxu0 0
    %2641 = vmatmul.mubr.bf16.gmra.mrb[0].mxu0 %v2600
    %v2642 = vpop.f32.mrb[0].mxu0
    %v2643 = vadd.f32 %v2590, %v2642
    %v2644 = vpop.f32.mrb[0].mxu0
    %v2645 = vpop.f32.mrb[0].mxu0
    %v2646 = vadd.f32 %v2590, %v2645
    %v2647 = vpop.f32.mrb[0].mxu0
    %2648 = vmatprep.mubr.bf16.mxu0 0
    %2649 = vmatmul.mubr.bf16.gmra.mrb[0].mxu0 %v2603
    %v2650 = vpop.f32.mrb[0].mxu0
    %v2651 = vadd.f32 %v2590, %v2650
    %v2652 = vpop.f32.mrb[0].mxu0
    %v2653 = vpop.f32.mrb[0].mxu0
    %v2654 = vadd.f32 %v2590, %v2653
    %v2655 = vpop.f32.mrb[0].mxu0
    %2656 = vmatprep.mubr.bf16.mxu0 0
    %2657 = vmatmul.mubr.bf16.gmra.mrb[0].mxu0 %v2606
    %v2658 = vpop.f32.mrb[0].mxu0
    %v2659 = vadd.f32 %v2590, %v2658
    %v2660 = vpop.f32.mrb[0].mxu0
    %v2661 = vpop.f32.mrb[0].mxu0
    %v2662 = vadd.f32 %v2590, %v2661
    %v2663 = vpop.f32.mrb[0].mxu0
    %2664 = vdwg.mxu0
    %v2665 = vmul.f32 %v2643, 0.5
    %v2666 = vmul.f32 %v2646, 0.5
    %v2667 = vmul.f32 %v2651, 0.5
    %v2668 = vmul.f32 %v2654, 0.5
    %v2669 = vmul.f32 %v2659, 0.5
    %v2670 = vmul.f32 %v2662, 0.5
    %v2671 = vmul.f32 %v2643, 0.044715
    %v2672 = vmul.f32 %v2646, 0.044715
    %v2673 = vmul.f32 %v2651, 0.044715
    %v2674 = vmul.f32 %v2654, 0.044715
    %v2675 = vmul.f32 %v2659, 0.044715
    %v2676 = vmul.f32 %v2662, 0.044715
    %v2677 = vmul.f32 %v2671, %v2643
    %v2678 = vmul.f32 %v2672, %v2646
    %v2679 = vmul.f32 %v2673, %v2651
    %v2680 = vmul.f32 %v2674, %v2654
    %v2681 = vmul.f32 %v2675, %v2659
    %v2682 = vmul.f32 %v2676, %v2662
    %v2683 = vmul.f32 %v2677, %v2643
    %v2684 = vmul.f32 %v2678, %v2646
    %v2685 = vmul.f32 %v2679, %v2651
    %v2686 = vmul.f32 %v2680, %v2654
    %v2687 = vmul.f32 %v2681, %v2659
    %v2688 = vmul.f32 %v2682, %v2662
    %v2689 = vadd.f32 %v2643, %v2683
    %v2690 = vadd.f32 %v2646, %v2684
    %v2691 = vadd.f32 %v2651, %v2685
    %v2692 = vadd.f32 %v2654, %v2686
    %v2693 = vadd.f32 %v2659, %v2687
    %v2694 = vadd.f32 %v2662, %v2688
    %v2695 = vmul.f32 %v2689, 0.7978846
    %v2696 = vmul.f32 %v2690, 0.7978846
    %v2697 = vmul.f32 %v2691, 0.7978846
    %v2698 = vmul.f32 %v2692, 0.7978846
    %v2699 = vmul.f32 %v2693, 0.7978846
    %v2700 = vmul.f32 %v2694, 0.7978846
    %v2701 = vtanh.pop %v2695
    %v2702 = vtanh.pop %v2696
    %v2703 = vtanh.pop %v2697
    %v2704 = vtanh.pop %v2698
    %v2705 = vtanh.pop %v2699
    %v2706 = vtanh.pop %v2700
    %v2707 = vadd.f32 %v2701, 1.0
    %v2708 = vadd.f32 %v2702, 1.0
    %v2709 = vadd.f32 %v2703, 1.0
    %v2710 = vadd.f32 %v2704, 1.0
    %v2711 = vadd.f32 %v2705, 1.0
    %v2712 = vadd.f32 %v2706, 1.0
    %v2713 = vmul.f32 %v2665, %v2707
    %v2714 = vmul.f32 %v2666, %v2708
    %v2715 = vmul.f32 %v2667, %v2709
    %v2716 = vmul.f32 %v2668, %v2710
    %v2717 = vmul.f32 %v2669, %v2711
    %v2718 = vmul.f32 %v2670, %v2712
    %v2719 = vpack.c.bf16 %v2714, %v2713
    %v2720 = vpack.c.bf16 %v2716, %v2715
    %v2721 = vpack.c.bf16 %v2718, %v2717
    %s2722 = scalar_lea.vmem %s3, 64
    %v2723 = vld [vmem:[%s2722] sm:$0xf]
    %v2724 = vld [vmem:[%s2722 + $0x4] sm:$0xf]
    %v2725 = vld [vmem:[%s2722 + $0x8] sm:$0xf]
    %v2726 = vld [vmem:[%s2722 + $0xc] sm:$0xf]
    %v2727 = vld [vmem:[%s2722 + $0x10] sm:$0xf]
    %v2728 = vld [vmem:[%s2722 + $0x14] sm:$0xf]
    %v2729 = vld [vmem:[%s2722 + $0x18] sm:$0xf]
    %v2730 = vld [vmem:[%s2722 + $0x1c] sm:$0xf]
    %v2731 = vld [vmem:[%s2722 + $0x20] sm:$0xf]
    %v2732 = vld [vmem:[%s2722 + $0x24] sm:$0xf]
    %v2733 = vld [vmem:[%s2722 + $0x28] sm:$0xf]
    %v2734 = vld [vmem:[%s2722 + $0x2c] sm:$0xf]
    %v2735 = vld [vmem:[%s2722 + $0x30] sm:$0xf]
    %v2736 = vld [vmem:[%s2722 + $0x34] sm:$0xf]
    %v2737 = vld [vmem:[%s2722 + $0x38] sm:$0xf]
    %v2738 = vld [vmem:[%s2722 + $0x3c] sm:$0xf]
    %v2755 = vunpack.c.l.b16 %v2723
    %v2756 = vunpack.c.l.b16 %v2724
    %v2757 = vunpack.c.l.b16 %v2725
    %v2758 = vunpack.c.l.b16 %v2726
    %v2759 = vunpack.c.l.b16 %v2727
    %v2760 = vunpack.c.l.b16 %v2728
    %v2761 = vunpack.c.l.b16 %v2729
    %v2762 = vunpack.c.l.b16 %v2730
    %v2763 = vunpack.c.l.b16 %v2731
    %v2764 = vunpack.c.l.b16 %v2732
    %v2765 = vunpack.c.l.b16 %v2733
    %v2766 = vunpack.c.l.b16 %v2734
    %v2767 = vunpack.c.l.b16 %v2735
    %v2768 = vunpack.c.l.b16 %v2736
    %v2769 = vunpack.c.l.b16 %v2737
    %v2770 = vunpack.c.l.b16 %v2738
    %v2771 = vpack.c.b16 %v2756, %v2755
    %v2772 = vpack.c.b16 %v2758, %v2757
    %v2773 = vpack.c.b16 %v2760, %v2759
    %v2774 = vpack.c.b16 %v2762, %v2761
    %v2775 = vpack.c.b16 %v2764, %v2763
    %v2776 = vpack.c.b16 %v2766, %v2765
    %v2777 = vpack.c.b16 %v2768, %v2767
    %v2778 = vpack.c.b16 %v2770, %v2769
    %2787 = vmatprep.subr.bf16.mxu0 0
    %2788 = vmatpush1.bf16.msra.mxu0 %v2771
    %2789 = vmatprep.subr.bf16.mxu0 0
    %2790 = vmatpush1.bf16.msra.mxu0 %v2772
    %2791 = vmatprep.subr.bf16.mxu0 0
    %2792 = vmatpush1.bf16.msra.mxu0 %v2773
    %2793 = vmatprep.subr.bf16.mxu0 0
    %2794 = vmatpush1.bf16.msra.mxu0 %v2774
    %2795 = vmatprep.subr.bf16.mxu0 0
    %2796 = vmatpush1.bf16.msra.mxu0 %v2775
    %2797 = vmatprep.subr.bf16.mxu0 0
    %2798 = vmatpush1.bf16.msra.mxu0 %v2776
    %2799 = vmatprep.subr.bf16.mxu0 0
    %2800 = vmatpush1.bf16.msra.mxu0 %v2777
    %2801 = vmatprep.subr.bf16.mxu0 0
    %2802 = vmatpush1.bf16.msra.mxu0 %v2778
    %2803 = vmatprep.subr.bf16.mxu0 0
    %2804 = vmatpush1.bf16.msra.mxu0 0
    %2805 = vmatprep.subr.bf16.mxu0 0
    %2806 = vmatpush1.bf16.msra.mxu0 0
    %2807 = vmatprep.subr.bf16.mxu0 0
    %2808 = vmatpush1.bf16.msra.mxu0 0
    %2809 = vmatprep.subr.bf16.mxu0 0
    %2810 = vmatpush1.bf16.msra.mxu0 0
    %2811 = vmatprep.subr.bf16.mxu0 0
    %2812 = vmatpush1.bf16.msra.mxu0 0
    %2813 = vmatprep.subr.bf16.mxu0 0
    %2814 = vmatpush1.bf16.msra.mxu0 0
    %2815 = vmatprep.subr.bf16.mxu0 0
    %2816 = vmatpush1.bf16.msra.mxu0 0
    %2817 = vmatprep.subr.bf16.mxu0 0
    %2818 = vmatpush1.bf16.msra.mxu0 0
    %2819 = vmatprep.mubr.bf16.mxu0 0
    %2820 = vmatmul.mubr.bf16.gmra.mrb[0].mxu0 %v2719
    %v2821 = vpop.f32.mrb[0].mxu0
    %v2822 = vadd.f32 0.0, %v2821
    %v2823 = vpop.f32.mrb[0].mxu0
    %v2824 = vpop.f32.mrb[0].mxu0
    %v2825 = vpop.f32.mrb[0].mxu0
    %2826 = vmatprep.mubr.bf16.mxu0 0
    %2827 = vmatmul.mubr.bf16.gmra.mrb[0].mxu0 %v2720
    %v2828 = vpop.f32.mrb[0].mxu0
    %v2829 = vpop.f32.mrb[0].mxu0
    %v2830 = vpop.f32.mrb[0].mxu0
    %v2831 = vadd.f32 0.0, %v2830
    %v2832 = vpop.f32.mrb[0].mxu0
    %2833 = vmatprep.mubr.bf16.mxu0 0
    %2834 = vmatmul.mubr.bf16.gmra.mrb[0].mxu0 %v2721
    %v2835 = vpop.f32.mrb[0].mxu0
    %v2836 = vpop.f32.mrb[0].mxu0
    %v2837 = vpop.f32.mrb[0].mxu0
    %v2838 = vpop.f32.mrb[0].mxu0
    %2839 = vdwg.mxu0
    %v2840 = vadd.f32 %v2480, %v2822
    %v2841 = vadd.f32 %v2483, %v2831
    %v2842 = vlaneseq
    %v2843 = vshrl.u32 %v2842, 7
    %v2844 = vsub.s32 5, %v2843
    %v2845 = vrot.slane %v1521, %v2844
    %v2846 = vadd.f32 %v2840, %v2845
    %v2847 = vadd.f32 %v2841, %v2845
    %v2849 = vrot.slane %v2847, 7
    %vm2851 = vcmask 1040384
    %v2852 = vsel %vm2851, %v2846, %v2849
    %v2853 = vld [vmem:[%s4 + $0x18] sm:$0x1]
    %v2854 = vld [vmem:[%s4 + $0x19] sm:$0x1]
    %vm2855 = vcmask 254976
    %v2856 = vsel %vm2855, %v2852, 0.0
    %2857 = vadd.xlane.f32.xlu0 %v2856
    %v2858 = vpop.xlane.xlu0 %2857
    %v2859 = vmul.f32 %v2858, %v193
    %v2860 = vsub.f32 %v2852, %v2859
    %v2861 = vmul.f32 %v2860, %v2860
    %v2862 = vsel %vm2855, %v2861, 0.0
    %2863 = vadd.xlane.f32.xlu0 %v2862
    %v2864 = vpop.xlane.xlu0 %2863
    %v2865 = vmul.f32 %v2864, %v193
    %v2866 = vadd.f32 %v2865, 1e-12
    %v2867 = vrsqrt.pop %v2866
    %v2868 = vmul.f32 %v2860, %v2867
    %v2869 = vlaneseq
    %v2870 = vshrl.u32 %v2869, 7
    %v2871 = vsub.s32 0, %v2870
    %v2872 = vrot.slane %v2853, %v2871
    %v2873 = vmul.f32 %v2868, %v2872
    %v2874 = vlaneseq
    %v2875 = vshrl.u32 %v2874, 7
    %v2876 = vsub.s32 0, %v2875
    %v2877 = vrot.slane %v2854, %v2876
    %v2878 = vadd.f32 %v2873, %v2877
    %v2879 = vld [vmem:[%s4] sm:$0xff]
    %v2880 = vld [vmem:[%s4 + $0x1a] sm:$0x1]
    %v2881 = vld [vmem:[%s4 + $0x1b] sm:$0x1]
    %v2882 = vld [vmem:[%s6] sm:$0x3]
    %v2883 = vlaneseq
    %v2884 = vshrl.u32 %v2883, 7
    %v2885 = vsub.s32 0, %v2884
    %v2886 = vrot.slane %v2880, %v2885
    %vm2887 = vcmask 64512
    %v2889 = vsel %vm2887, %v2882, 0
    %2891 = vmatprep.subr.mxu0 0.0
    %2892 = vmatpush1.msra.mxu0 %v2879
    %2893 = vmatprep.subr.mxu0 0.0
    %2894 = vmatpush1.msra.mxu0 0.0
    %2895 = vmatprep.subr.mxu0 0.0
    %2896 = vmatpush1.msra.mxu0 0.0
    %2897 = vmatprep.subr.mxu0 0.0
    %2898 = vmatpush1.msra.mxu0 0.0
    %2899 = vmatprep.subr.mxu0 0.0
    %2900 = vmatpush1.msra.mxu0 0.0
    %2901 = vmatprep.subr.mxu0 0.0
    %2902 = vmatpush1.msra.mxu0 0.0
    %2903 = vmatprep.subr.mxu0 0.0
    %2904 = vmatpush1.msra.mxu0 0.0
    %2905 = vmatprep.subr.mxu0 0.0
    %2906 = vmatpush1.msra.mxu0 0.0
    %2907 = vmatprep.subr.mxu0 0.0
    %2908 = vmatpush1.msra.mxu0 0.0
    %2909 = vmatprep.subr.mxu0 0.0
    %2910 = vmatpush1.msra.mxu0 0.0
    %2911 = vmatprep.subr.mxu0 0.0
    %2912 = vmatpush1.msra.mxu0 0.0
    %2913 = vmatprep.subr.mxu0 0.0
    %2914 = vmatpush1.msra.mxu0 0.0
    %2915 = vmatprep.subr.mxu0 0.0
    %2916 = vmatpush1.msra.mxu0 0.0
    %2917 = vmatprep.subr.mxu0 0.0
    %2918 = vmatpush1.msra.mxu0 0.0
    %2919 = vmatprep.subr.mxu0 0.0
    %2920 = vmatpush1.msra.mxu0 0.0
    %2921 = vmatprep.subr.mxu0 0.0
    %2922 = vmatpush1.msra.mxu0 0.0
    %2923 = vmatprep.subr.mxu0 0.0
    %2924 = vmatpush1.msra.mxu0 0.0
    %2925 = vmatprep.subr.mxu0 0.0
    %2926 = vmatpush1.msra.mxu0 0.0
    %2927 = vmatprep.subr.mxu0 0.0
    %2928 = vmatpush1.msra.mxu0 0.0
    %2929 = vmatprep.subr.mxu0 0.0
    %2930 = vmatpush1.msra.mxu0 0.0
    %2931 = vmatprep.subr.mxu0 0.0
    %2932 = vmatpush1.msra.mxu0 0.0
    %2933 = vmatprep.subr.mxu0 0.0
    %2934 = vmatpush1.msra.mxu0 0.0
    %2935 = vmatprep.subr.mxu0 0.0
    %2936 = vmatpush1.msra.mxu0 0.0
    %2937 = vmatprep.subr.mxu0 0.0
    %2938 = vmatpush1.msra.mxu0 0.0
    %2939 = vmatprep.subr.mxu0 0.0
    %2940 = vmatpush1.msra.mxu0 0.0
    %2941 = vmatprep.subr.mxu0 0.0
    %2942 = vmatpush1.msra.mxu0 0.0
    %2943 = vmatprep.subr.mxu0 0.0
    %2944 = vmatpush1.msra.mxu0 0.0
    %2945 = vmatprep.subr.mxu0 0.0
    %2946 = vmatpush1.msra.mxu0 0.0
    %2947 = vmatprep.subr.mxu0 0.0
    %2948 = vmatpush1.msra.mxu0 0.0
    %2949 = vmatprep.subr.mxu0 0.0
    %2950 = vmatpush1.msra.mxu0 0.0
    %2951 = vmatprep.subr.mxu0 0.0
    %2952 = vmatpush1.msra.mxu0 0.0
    %2953 = vmatprep.subr.mxu0 0.0
    %2954 = vmatpush1.msra.mxu0 0.0
    %2955 = vmatprep.mubr.f32.mxu0 0.0
    %2956 = vmatmul.mubr.f32.gmra.mrb[0].mxu0 %v2889
    %v2957 = vpop.f32.mrb[0].mxu0
    %v2958 = vadd.f32 %v2886, %v2957
    %v2959 = vpop.f32.mrb[0].mxu0
    %2960 = vdwg.mxu0
    %v2961 = vmax.f32 %v2958, 0.0
    %v2962 = vld [vmem:[%s5] sm:$0xff]
    %v2963 = vld [vmem:[%s5 + $0x8] sm:$0xff]
    %v2964 = vld [vmem:[%s5 + $0x10] sm:$0xff]
    %v2965 = vld [vmem:[%s5 + $0x18] sm:$0xff]
    %v2966 = vld [vmem:[%s5 + $0x20] sm:$0xff]
    %v2967 = vld [vmem:[%s5 + $0x28] sm:$0xff]
    %v2968 = vld [vmem:[%s5 + $0x30] sm:$0xff]
    %v2969 = vld [vmem:[%s5 + $0x38] sm:$0xff]
    %v2970 = vld [vmem:[%s5 + $0x40] sm:$0xff]
    %v2971 = vld [vmem:[%s5 + $0x48] sm:$0xff]
    %v2972 = vld [vmem:[%s5 + $0x50] sm:$0xff]
    %v2973 = vld [vmem:[%s5 + $0x58] sm:$0xff]
    %v2974 = vld [vmem:[%s5 + $0x60] sm:$0xff]
    %v2975 = vld [vmem:[%s5 + $0x68] sm:$0xff]
    %v2976 = vld [vmem:[%s5 + $0x70] sm:$0xff]
    %v2977 = vld [vmem:[%s5 + $0x78] sm:$0xff]
    %v2978 = vld [vmem:[%s5 + $0x80] sm:$0xff]
    %v2979 = vld [vmem:[%s5 + $0x88] sm:$0xff]
    %v2980 = vld [vmem:[%s5 + $0x90] sm:$0xff]
    %v2981 = vld [vmem:[%s5 + $0x98] sm:$0xff]
    %2982 = vmatprep.subr.mxu0 0.0
    %2983 = vmatpush1.msra.mxu0 %v2966
    %2984 = vmatprep.subr.mxu0 0.0
    %2985 = vmatpush1.msra.mxu0 %v2967
    %2986 = vmatprep.subr.mxu0 0.0
    %2987 = vmatpush1.msra.mxu0 %v2968
    %2988 = vmatprep.subr.mxu0 0.0
    %2989 = vmatpush1.msra.mxu0 %v2969
    %2990 = vmatprep.subr.mxu0 0.0
    %2991 = vmatpush1.msra.mxu0 %v2970
    %2992 = vmatprep.subr.mxu0 0.0
    %2993 = vmatpush1.msra.mxu0 %v2971
    %2994 = vmatprep.subr.mxu0 0.0
    %2995 = vmatpush1.msra.mxu0 %v2972
    %2996 = vmatprep.subr.mxu0 0.0
    %2997 = vmatpush1.msra.mxu0 %v2973
    %2998 = vmatprep.subr.mxu0 0.0
    %2999 = vmatpush1.msra.mxu0 %v2974
    %3000 = vmatprep.subr.mxu0 0.0
    %3001 = vmatpush1.msra.mxu0 %v2975
    %3002 = vmatprep.subr.mxu0 0.0
    %3003 = vmatpush1.msra.mxu0 %v2976
    %3004 = vmatprep.subr.mxu0 0.0
    %3005 = vmatpush1.msra.mxu0 %v2977
    %3006 = vmatprep.subr.mxu0 0.0
    %3007 = vmatpush1.msra.mxu0 %v2978
    %3008 = vmatprep.subr.mxu0 0.0
    %3009 = vmatpush1.msra.mxu0 %v2979
    %3010 = vmatprep.subr.mxu0 0.0
    %3011 = vmatpush1.msra.mxu0 %v2980
    %3012 = vmatprep.subr.mxu0 0.0
    %3013 = vmatpush1.msra.mxu0 %v2981
    %3014 = vmatprep.subr.mxu0 0.0
    %3015 = vmatpush1.msra.mxu0 0.0
    %3016 = vmatprep.subr.mxu0 0.0
    %3017 = vmatpush1.msra.mxu0 0.0
    %3018 = vmatprep.subr.mxu0 0.0
    %3019 = vmatpush1.msra.mxu0 0.0
    %3020 = vmatprep.subr.mxu0 0.0
    %3021 = vmatpush1.msra.mxu0 0.0
    %3022 = vmatprep.subr.mxu0 0.0
    %3023 = vmatpush1.msra.mxu0 0.0
    %3024 = vmatprep.subr.mxu0 0.0
    %3025 = vmatpush1.msra.mxu0 0.0
    %3026 = vmatprep.subr.mxu0 0.0
    %3027 = vmatpush1.msra.mxu0 0.0
    %3028 = vmatprep.subr.mxu0 0.0
    %3029 = vmatpush1.msra.mxu0 0.0
    %3030 = vmatprep.subr.mxu0 0.0
    %3031 = vmatpush1.msra.mxu0 0.0
    %3032 = vmatprep.subr.mxu0 0.0
    %3033 = vmatpush1.msra.mxu0 0.0
    %3034 = vmatprep.subr.mxu0 0.0
    %3035 = vmatpush1.msra.mxu0 0.0
    %3036 = vmatprep.subr.mxu0 0.0
    %3037 = vmatpush1.msra.mxu0 0.0
    %3038 = vmatprep.subr.mxu0 0.0
    %3039 = vmatpush1.msra.mxu0 0.0
    %3040 = vmatprep.subr.mxu0 0.0
    %3041 = vmatpush1.msra.mxu0 0.0
    %3042 = vmatprep.subr.mxu0 0.0
    %3043 = vmatpush1.msra.mxu0 0.0
    %3044 = vmatprep.subr.mxu0 0.0
    %3045 = vmatpush1.msra.mxu0 0.0
    %3046 = vmatprep.mubr.f32.mxu0 0.0
    %3047 = vmatmul.mubr.f32.gmra.mrb[0].mxu0 %v2961
    %v3048 = vpop.f32.mrb[0].mxu0
    %v3049 = vadd.f32 0.0, %v3048
    %v3050 = vpop.f32.mrb[0].mxu0
    %3051 = vdwg.mxu0
    %v3053 = vsel %vm174, %v2878, 0
    %3055 = vmatprep.subr.mxu0 0.0
    %3056 = vmatpush1.msra.mxu0 %v2962
    %3057 = vmatprep.subr.mxu0 0.0
    %3058 = vmatpush1.msra.mxu0 %v2963
    %3059 = vmatprep.subr.mxu0 0.0
    %3060 = vmatpush1.msra.mxu0 %v2964
    %3061 = vmatprep.subr.mxu0 0.0
    %3062 = vmatpush1.msra.mxu0 %v2965
    %3063 = vmatprep.subr.mxu0 0.0
    %3064 = vmatpush1.msra.mxu0 0.0
    %3065 = vmatprep.subr.mxu0 0.0
    %3066 = vmatpush1.msra.mxu0 0.0
    %3067 = vmatprep.subr.mxu0 0.0
    %3068 = vmatpush1.msra.mxu0 0.0
    %3069 = vmatprep.subr.mxu0 0.0
    %3070 = vmatpush1.msra.mxu0 0.0
    %3071 = vmatprep.subr.mxu0 0.0
    %3072 = vmatpush1.msra.mxu0 0.0
    %3073 = vmatprep.subr.mxu0 0.0
    %3074 = vmatpush1.msra.mxu0 0.0
    %3075 = vmatprep.subr.mxu0 0.0
    %3076 = vmatpush1.msra.mxu0 0.0
    %3077 = vmatprep.subr.mxu0 0.0
    %3078 = vmatpush1.msra.mxu0 0.0
    %3079 = vmatprep.subr.mxu0 0.0
    %3080 = vmatpush1.msra.mxu0 0.0
    %3081 = vmatprep.subr.mxu0 0.0
    %3082 = vmatpush1.msra.mxu0 0.0
    %3083 = vmatprep.subr.mxu0 0.0
    %3084 = vmatpush1.msra.mxu0 0.0
    %3085 = vmatprep.subr.mxu0 0.0
    %3086 = vmatpush1.msra.mxu0 0.0
    %3087 = vmatprep.subr.mxu0 0.0
    %3088 = vmatpush1.msra.mxu0 0.0
    %3089 = vmatprep.subr.mxu0 0.0
    %3090 = vmatpush1.msra.mxu0 0.0
    %3091 = vmatprep.subr.mxu0 0.0
    %3092 = vmatpush1.msra.mxu0 0.0
    %3093 = vmatprep.subr.mxu0 0.0
    %3094 = vmatpush1.msra.mxu0 0.0
    %3095 = vmatprep.subr.mxu0 0.0
    %3096 = vmatpush1.msra.mxu0 0.0
    %3097 = vmatprep.subr.mxu0 0.0
    %3098 = vmatpush1.msra.mxu0 0.0
    %3099 = vmatprep.subr.mxu0 0.0
    %3100 = vmatpush1.msra.mxu0 0.0
    %3101 = vmatprep.subr.mxu0 0.0
    %3102 = vmatpush1.msra.mxu0 0.0
    %3103 = vmatprep.subr.mxu0 0.0
    %3104 = vmatpush1.msra.mxu0 0.0
    %3105 = vmatprep.subr.mxu0 0.0
    %3106 = vmatpush1.msra.mxu0 0.0
    %3107 = vmatprep.subr.mxu0 0.0
    %3108 = vmatpush1.msra.mxu0 0.0
    %3109 = vmatprep.subr.mxu0 0.0
    %3110 = vmatpush1.msra.mxu0 0.0
    %3111 = vmatprep.subr.mxu0 0.0
    %3112 = vmatpush1.msra.mxu0 0.0
    %3113 = vmatprep.subr.mxu0 0.0
    %3114 = vmatpush1.msra.mxu0 0.0
    %3115 = vmatprep.subr.mxu0 0.0
    %3116 = vmatpush1.msra.mxu0 0.0
    %3117 = vmatprep.subr.mxu0 0.0
    %3118 = vmatpush1.msra.mxu0 0.0
    %3119 = vmatprep.mubr.f32.mxu0 0.0
    %3120 = vmatmul.mubr.f32.gmra.mrb[0].mxu0 %v3053
    %v3121 = vpop.f32.mrb[0].mxu0
    %v3122 = vadd.f32 %v3049, %v3121
    %v3123 = vpop.f32.mrb[0].mxu0
    %3124 = vdwg.mxu0
    %v3125 = vlaneseq
    %v3126 = vshrl.u32 %v3125, 7
    %v3127 = vsub.s32 0, %v3126
    %v3128 = vrot.slane %v2881, %v3127
    %v3129 = vadd.f32 %v3122, %v3128
    %vm3130 = vcmask 33792
    %3131 = vst.msk [vmem:[#allocation2] sm:$0x3] %vm3130, %v3129
    %v3132 = vsel %vm3130, %v3129, -inf
    %3133 = vmax.xlane.f32.xlu0 %v3132
    %v3134 = vpop.xlane.xlu0 %3133
    %v3135 = vsub.f32 %v3129, %v3134
    %v3136 = vmul.f32 %v3135, 1.442695
    %v3137 = vpow.pop %v3136
    %v3138 = vsel %vm3130, %v3137, 0.0
    %3139 = vadd.xlane.f32.xlu0 %v3138
    %v3140 = vpop.xlane.xlu0 %3139
    %v3141 = vlog2.pop %v3140
    %v3142 = vmul.f32 %v3141, 0.6931472
    %v3143 = vadd.f32 %v3142, %v3134
    %v3144 = vsub.f32 %v3129, %v3143
    %v3145 = vld [vmem:[%s7] sm:$0x3]
    %3146 = vset.pattern.permute.xlu0 0
    %3147 = vperm.xlu0 %3146, %v3145
    %v3148 = vpop.permute.xlu0 %3147
    %vm3149 = vcmp.eq.s32.totalorder %v166, %v3148
    %v3150 = vsel %vm3149, 1, 0
    %v3151 = vcvt.s32.f32 %v3150
    %v3152 = vmul.f32 %v3151, %v3144
    %v3153 = vsel %vm3130, %v3152, 0.0
    %3154 = vadd.xlane.f32.xlu0 %v3153
    %v3155 = vpop.xlane.xlu0 %3154
    %v3156 = vrot.slane %v3155, 4
    %v3157 = vadd.f32 %v3155, %v3156
    %v3158 = vrot.slane %v3157, 2
    %v3159 = vadd.f32 %v3157, %v3158
    %v3160 = vrot.slane %v3159, 1
    %v3161 = vadd.f32 %v3159, %v3160
    %s3162 = vtos %v3161
    %s3163 = ssub.f32 0.0, %s3162
    %v3164 = vrcp.pop 2.0
    %s3165 = vtos %v3164
    %s3166 = smul.f32 %s3163, %s3165
    %v3167 = vstv %s3166
    %vm3168 = vcmask 0
    %3169 = vst.msk [vmem:[#allocation4] sm:$0x1] %vm3168, %v3167
    // Predicated region
    $region34: #{_fused_forward.1} parent=1 // pred_check
      _
    $region35: #{_fused_forward.1} parent=1 // pred_check_branch
      %3171 = sbr.rel (0) target = $region37
    $region36: #{_fused_forward.1} parent=1 // pred_region
      %s3173 = ssub.s32 32, 32
      %3174 = vsyncadd [#allocation3], %s3173
      %s3176 = sshll.u32 [#allocation2], 4
      %s3177 = int_to_ptr.vmem [resolvable:$true] %s3176
      %3179 = dma.vmem_to_hbm [thread:$0]  %s3177, 32, %s8, [#allocation3]
    $region37: #{_fused_forward.1} parent=1 // pred_fallthru
      _
    // Predicated region
    $region38: #{_fused_forward.1} parent=1 // pred_check
      _
    $region39: #{_fused_forward.1} parent=1 // pred_check_branch
      %3181 = sbr.rel (0) target = $region41
    $region40: #{_fused_forward.1} parent=1 // pred_region
      %s3183 = ssub.s32 16, 16
      %3184 = vsyncadd [#allocation5], %s3183
      %s3186 = sshll.u32 [#allocation4], 4
      %s3187 = int_to_ptr.vmem [resolvable:$true] %s3186
      %3189 = dma.vmem_to_hbm [thread:$0]  %s3187, 16, %s9, [#allocation5]
    $region41: #{_fused_forward.1} parent=1 // pred_fallthru
      _
    // Predicated region
    $region42: #{_fused_forward.1} parent=1 // pred_check
      _
    $region43: #{_fused_forward.1} parent=1 // pred_check_branch
      %3191 = sbr.rel (0) target = $region45
    $region44: #{_fused_forward.1} parent=1 // pred_region
      %3192 = dma.done [#allocation3], 32
    $region45: #{_fused_forward.1} parent=1 // pred_fallthru
      _
    // Predicated region
    $region46: #{_fused_forward.1} parent=1 // pred_check
      _
    $region47: #{_fused_forward.1} parent=1 // pred_check_branch
      %3194 = sbr.rel (0) target = $region49
    $region48: #{_fused_forward.1} parent=1 // pred_region
      %3195 = dma.done [#allocation5], 16
    $region49: #{_fused_forward.1} parent=1 // pred_fallthru
      _
    %3196 = vsyncpa [#allocation3], 1
    %3197 = vsyncpa [#allocation5], 1

</llo_original>
